<compile_context>
chip_gen: v7x
topology: tpu7x:2x2x1
jax: 0.10.0
libtpu: 0.0.40
codegen_flags: <defaults>
</compile_context>

<pallas_src>
import jax
import jax.numpy as jnp
from jax.experimental import pallas as pl
from jax.experimental.pallas import tpu as pltpu

IN1 = 1024          # feature1 width
IN2 = 1024          # feature2 width
D_IN = IN1 + IN2    # 2048 (fc1 fan-in)
H1 = 512
H2 = 128
D_OUT = 1
TB = 512            # default max batch tile (sweep 512/1024 on v6e; 512 is v7x-safe)

# Constant-index blocks (weights/biases) don't need a second pipeline buffer.
_RESIDENT = pl.Buffered(1)


def _matcher_kernel(f1_ref, f2_ref, w1a_ref, w1b_ref, b1_ref,
                    w2_ref, b2_ref, w3_ref, b3_ref, o_ref):
    """One batch tile of the MLP. All weights stay resident in VMEM."""
    # fc1 on the split inputs (identical to concat([f1, f2]) @ [W1a; W1b]).
    h1 = jnp.dot(f1_ref[...], w1a_ref[...], preferred_element_type=jnp.float32)
    h1 = h1 + jnp.dot(f2_ref[...], w1b_ref[...], preferred_element_type=jnp.float32)
    h1 = jnp.maximum(h1 + b1_ref[...], 0.0)                           # (tb, 512) f32

    # fc2
    h2 = jnp.dot(h1.astype(w2_ref.dtype), w2_ref[...],
                 preferred_element_type=jnp.float32)
    h2 = jnp.maximum(h2 + b2_ref[...], 0.0)                           # (tb, 128) f32

    # fc3: N=1 matmul as VPU multiply + lane reduction (keeps the MXU free).
    logit = jnp.sum(h2 * w3_ref[...], axis=-1, keepdims=True) + b3_ref[...]  # (tb, 1)
    o_ref[...] = jax.nn.sigmoid(logit).astype(o_ref.dtype)


def _choose_tb(B, tb_max=TB):
    """Pick the batch tile.

    Big enough to amortize the ~0.35us/step pipeline overhead, but capped so
    that (a) tiny batches don't allocate a huge tile and (b) the grid keeps
    >=2 parallel steps when B allows (v7x has 2 TensorCores per chip).
    """
    if B >= 2 * tb_max:
        return tb_max
    half = (B + 1) // 2
    return min(tb_max, max(8, ((half + 7) // 8) * 8))


def neural_matcher(feature1, feature2, params, *, tb=None,
                   compute_dtype=jnp.bfloat16):
    """feature1: (B, 1024), feature2: (B, 1024) -> similarity (B, 1) in (0, 1).

    compute_dtype=bfloat16 (default, recommended on v5e/v6e/v7x: the MXU is
    natively bf16) casts the activations and the two large weight matrices for
    the MXU; f32 accumulation is kept and biases / ReLU / sigmoid stay in f32.
    Pass compute_dtype=jnp.float32 for a full-precision path.
    """
    w1a, w1b, b1, w2, b2, w3, b3 = params
    B = feature1.shape[0]
    tb = _choose_tb(B) if tb is None else max(8, (tb // 8) * 8)

    # Cast only if needed (callers holding bf16 features pay nothing here).
    # No batch padding: grid = cdiv(B, tb); the ragged last tile's extra rows
    # are row-independent garbage that is never written back.
    f1 = feature1 if feature1.dtype == compute_dtype else feature1.astype(compute_dtype)
    f2 = feature2 if feature2.dtype == compute_dtype else feature2.astype(compute_dtype)
    w1a_c = w1a if w1a.dtype == compute_dtype else w1a.astype(compute_dtype)
    w1b_c = w1b if w1b.dtype == compute_dtype else w1b.astype(compute_dtype)
    w2_c = w2 if w2.dtype == compute_dtype else w2.astype(compute_dtype)
    # b1, b2, w3, b3 stay f32: they feed VPU/EUP math only.

    feat_sz = jnp.dtype(compute_dtype).itemsize
    flops = 2 * B * (D_IN * H1 + H1 * H2 + H2)
    bytes_accessed = int(
        B * D_IN * feat_sz                          # feature streams
        + (D_IN * H1 + H1 * H2) * feat_sz           # large weights (VMEM-resident)
        + (H1 + H2 + H2 + 1) * 4                    # biases + w3 + b3 (f32)
        + B * D_OUT * 4                             # output
    )

    grid = (pl.cdiv(B, tb),)
    out = pl.pallas_call(
        _matcher_kernel,
        out_shape=jax.ShapeDtypeStruct((B, D_OUT), jnp.float32),
        grid_spec=pltpu.PrefetchScalarGridSpec(
            num_scalar_prefetch=0,
            grid=grid,
            in_specs=[
                pl.BlockSpec((tb, IN1), lambda i: (i, 0)),     # feature1 tile
                pl.BlockSpec((tb, IN2), lambda i: (i, 0)),     # feature2 tile
                pl.BlockSpec((IN1, H1), lambda i: (0, 0),
                             pipeline_mode=_RESIDENT),         # W1a (resident)
                pl.BlockSpec((IN2, H1), lambda i: (0, 0),
                             pipeline_mode=_RESIDENT),         # W1b (resident)
                pl.BlockSpec((1, H1), lambda i: (0, 0),
                             pipeline_mode=_RESIDENT),         # b1
                pl.BlockSpec((H1, H2), lambda i: (0, 0),
                             pipeline_mode=_RESIDENT),         # W2 (resident)
                pl.BlockSpec((1, H2), lambda i: (0, 0),
                             pipeline_mode=_RESIDENT),         # b2
                pl.BlockSpec((1, H2), lambda i: (0, 0),
                             pipeline_mode=_RESIDENT),         # W3 as a (1,128) row
                pl.BlockSpec((1, D_OUT), lambda i: (0, 0),
                             pipeline_mode=_RESIDENT),         # b3
            ],
            out_specs=pl.BlockSpec((tb, D_OUT), lambda i: (i, 0)),
        ),
        compiler_params=pltpu.CompilerParams(
            dimension_semantics=("parallel",),
            # Budgeted for v7x's 64 MiB VMEM; actual use is ~8 MB (bf16, TB=512)
            # to ~15 MB (f32, TB=512) with single-buffered weights.
            vmem_limit_bytes=40 * 1024 * 1024,
        ),
        cost_estimate=pl.CostEstimate(
            flops=flops, transcendentals=B, bytes_accessed=bytes_accessed),
    )(f1, f2, w1a_c, w1b_c, b1, w2_c, b2, w3, b3)

    return out


def init_params(key):
    """Deterministic synthetic parameters matching nn.Linear shapes.

    fc1.weight ([512, 2048] in PyTorch) is stored transposed AND split along its
    fan-in into W1a (1024,512) / W1b (1024,512) so the kernel never needs the concat.
    fc3.weight is stored as the (1, 128) row it already is in PyTorch.
    """
    k1, k2, k3, k4, k5, k6, k7 = jax.random.split(key, 7)
    s1 = 1.0 / jnp.sqrt(D_IN)
    s2 = 1.0 / jnp.sqrt(H1)
    s3 = 1.0 / jnp.sqrt(H2)
    w1a = jax.random.uniform(k1, (IN1, H1), jnp.float32, -1.0, 1.0) * s1
    w1b = jax.random.uniform(k2, (IN2, H1), jnp.float32, -1.0, 1.0) * s1
    b1 = jax.random.uniform(k3, (1, H1), jnp.float32, -1.0, 1.0) * s1
    w2 = jax.random.uniform(k4, (H1, H2), jnp.float32, -1.0, 1.0) * s2
    b2 = jax.random.uniform(k5, (1, H2), jnp.float32, -1.0, 1.0) * s2
    w3 = jax.random.uniform(k6, (1, H2), jnp.float32, -1.0, 1.0) * s3
    b3 = jax.random.uniform(k7, (1, D_OUT), jnp.float32, -1.0, 1.0) * s3
    return (w1a, w1b, b1, w2, b2, w3, b3)


def _reference(feature1, feature2, params):
    """Pure-JAX reference of the PyTorch forward (explicit concat form)."""
    w1a, w1b, b1, w2, b2, w3, b3 = params
    x = jnp.concatenate([feature1, feature2], axis=1)          # (B, 2048)
    w1 = jnp.concatenate([w1a, w1b], axis=0)                   # (2048, 512)
    h = jax.nn.relu(x @ w1 + b1)
    h = jax.nn.relu(h @ w2 + b2)
    return jax.nn.sigmoid(h @ w3.T + b3)                       # (B, 1)


if __name__ == "__main__":
    key = jax.random.PRNGKey(0)
    kp, kf1, kf2, kg1, kg2 = jax.random.split(key, 5)

    params = init_params(kp)

    # --- small primary test -------------------------------------------------
    B = 8
    feature1 = jax.random.normal(kf1, (B, IN1), jnp.float32)
    feature2 = jax.random.normal(kf2, (B, IN2), jnp.float32)
    ref = jax.block_until_ready(_reference(feature1, feature2, params))

    # Default bf16 fast path (recommended on v5e/v6e/v7x).
    out = jax.block_until_ready(neural_matcher(feature1, feature2, params))
    assert out.shape == (B, D_OUT)
    assert jnp.allclose(out, ref, atol=3e-2, rtol=3e-2), (out, ref)

    # Full f32 path (tight tolerance).
    out_f32 = jax.block_until_ready(
        neural_matcher(feature1, feature2, params, compute_dtype=jnp.float32))
    assert out_f32.shape == (B, D_OUT)
    assert jnp.allclose(out_f32, ref, atol=1e-5, rtol=1e-5), (out_f32, ref)

    # --- ragged multi-step grid test (no wrapper-side padding) ---------------
    B2 = 300                                   # 3 grid steps at tb=128, last is ragged
    g1 = jax.random.normal(kg1, (B2, IN1), jnp.float32)
    g2 = jax.random.normal(kg2, (B2, IN2), jnp.float32)
    ref2 = jax.block_until_ready(_reference(g1, g2, params))
    out2 = jax.block_until_ready(neural_matcher(g1, g2, params, tb=128))
    assert out2.shape == (B2, D_OUT)
    assert jnp.allclose(out2, ref2, atol=3e-2, rtol=3e-2), (out2, ref2)

    print("KERNEL_OK")
</pallas_src>

<mosaic_0001>
module attributes {stable_mosaic.version = 11 : i64} {
  func.func @_matcher_kernel(%arg0: i32, %arg1: memref<8x1024xbf16, #tpu.memory_space<vmem>>, %arg2: memref<8x1024xbf16, #tpu.memory_space<vmem>>, %arg3: memref<1024x512xbf16, #tpu.memory_space<vmem>>, %arg4: memref<1024x512xbf16, #tpu.memory_space<vmem>>, %arg5: memref<1x512xf32, #tpu.memory_space<vmem>>, %arg6: memref<512x128xbf16, #tpu.memory_space<vmem>>, %arg7: memref<1x128xf32, #tpu.memory_space<vmem>>, %arg8: memref<1x128xf32, #tpu.memory_space<vmem>>, %arg9: memref<1x1xf32, #tpu.memory_space<vmem>>, %arg10: memref<8x1xf32, #tpu.memory_space<vmem>>) attributes {dimension_semantics = [#tpu.dimension_semantics<parallel>], iteration_bounds = array<i64: 1>, scalar_prefetch = 0 : i64, scratch_operands = 0 : i64, tpu.core_type = #tpu.core_type<tc>, window_params = [{transform_indices = @transform_0, window_bounds = array<i64: 8, 1024>}, {transform_indices = @transform_1, window_bounds = array<i64: 8, 1024>}, {pipeline_mode = #tpu.pipeline_mode<synchronous>, transform_indices = @transform_2, window_bounds = array<i64: 1024, 512>}, {pipeline_mode = #tpu.pipeline_mode<synchronous>, transform_indices = @transform_3, window_bounds = array<i64: 1024, 512>}, {pipeline_mode = #tpu.pipeline_mode<synchronous>, transform_indices = @transform_4, window_bounds = array<i64: 1, 512>}, {pipeline_mode = #tpu.pipeline_mode<synchronous>, transform_indices = @transform_5, window_bounds = array<i64: 512, 128>}, {pipeline_mode = #tpu.pipeline_mode<synchronous>, transform_indices = @transform_6, window_bounds = array<i64: 1, 128>}, {pipeline_mode = #tpu.pipeline_mode<synchronous>, transform_indices = @transform_7, window_bounds = array<i64: 1, 128>}, {pipeline_mode = #tpu.pipeline_mode<synchronous>, transform_indices = @transform_8, window_bounds = array<i64: 1, 1>}, {transform_indices = @transform_9, window_bounds = array<i64: 8, 1>}]} {
    %c0 = arith.constant 0 : index
    %c0_0 = arith.constant 0 : index
    %0 = vector.load %arg1[%c0, %c0_0] : memref<8x1024xbf16, #tpu.memory_space<vmem>>, vector<8x1024xbf16>
    %c0_1 = arith.constant 0 : index
    %c0_2 = arith.constant 0 : index
    %1 = vector.load %arg3[%c0_1, %c0_2] : memref<1024x512xbf16, #tpu.memory_space<vmem>>, vector<1024x512xbf16>
    %cst = arith.constant dense<0.000000e+00> : vector<8x512xf32>
    %2 = tpu.matmul %0, %1, %cst {dimension_numbers = #tpu.dot_dimension_numbers<[1], [0], [0], [1], [0, 0, 1, 1], [], []>} : vector<8x1024xbf16>, vector<1024x512xbf16>, vector<8x512xf32> -> vector<8x512xf32>
    %c0_3 = arith.constant 0 : index
    %c0_4 = arith.constant 0 : index
    %3 = vector.load %arg2[%c0_3, %c0_4] : memref<8x1024xbf16, #tpu.memory_space<vmem>>, vector<8x1024xbf16>
    %c0_5 = arith.constant 0 : index
    %c0_6 = arith.constant 0 : index
    %4 = vector.load %arg4[%c0_5, %c0_6] : memref<1024x512xbf16, #tpu.memory_space<vmem>>, vector<1024x512xbf16>
    %cst_7 = arith.constant dense<0.000000e+00> : vector<8x512xf32>
    %5 = tpu.matmul %3, %4, %cst_7 {dimension_numbers = #tpu.dot_dimension_numbers<[1], [0], [0], [1], [0, 0, 1, 1], [], []>} : vector<8x1024xbf16>, vector<1024x512xbf16>, vector<8x512xf32> -> vector<8x512xf32>
    %6 = arith.addf %2, %5 : vector<8x512xf32>
    %c0_8 = arith.constant 0 : index
    %c0_9 = arith.constant 0 : index
    %7 = vector.load %arg5[%c0_8, %c0_9] : memref<1x512xf32, #tpu.memory_space<vmem>>, vector<1x512xf32>
    %8 = vector.broadcast %7 : vector<1x512xf32> to vector<8x512xf32>
    %9 = arith.addf %6, %8 : vector<8x512xf32>
    %cst_10 = arith.constant 0.000000e+00 : f32
    %10 = vector.broadcast %cst_10 : f32 to vector<8x512xf32>
    %11 = arith.maximumf %9, %10 : vector<8x512xf32>
    %12 = arith.truncf %11 : vector<8x512xf32> to vector<8x512xbf16>
    %c0_11 = arith.constant 0 : index
    %c0_12 = arith.constant 0 : index
    %13 = vector.load %arg6[%c0_11, %c0_12] : memref<512x128xbf16, #tpu.memory_space<vmem>>, vector<512x128xbf16>
    %cst_13 = arith.constant dense<0.000000e+00> : vector<8x128xf32>
    %14 = tpu.matmul %12, %13, %cst_13 {dimension_numbers = #tpu.dot_dimension_numbers<[1], [0], [0], [1], [0, 0, 1, 1], [], []>} : vector<8x512xbf16>, vector<512x128xbf16>, vector<8x128xf32> -> vector<8x128xf32>
    %c0_14 = arith.constant 0 : index
    %c0_15 = arith.constant 0 : index
    %15 = vector.load %arg7[%c0_14, %c0_15] : memref<1x128xf32, #tpu.memory_space<vmem>>, vector<1x128xf32>
    %16 = vector.broadcast %15 : vector<1x128xf32> to vector<8x128xf32>
    %17 = arith.addf %14, %16 : vector<8x128xf32>
    %cst_16 = arith.constant 0.000000e+00 : f32
    %18 = vector.broadcast %cst_16 : f32 to vector<8x128xf32>
    %19 = arith.maximumf %17, %18 : vector<8x128xf32>
    %c0_17 = arith.constant 0 : index
    %c0_18 = arith.constant 0 : index
    %20 = vector.load %arg8[%c0_17, %c0_18] : memref<1x128xf32, #tpu.memory_space<vmem>>, vector<1x128xf32>
    %21 = vector.broadcast %20 : vector<1x128xf32> to vector<8x128xf32>
    %22 = arith.mulf %19, %21 : vector<8x128xf32>
    %cst_19 = arith.constant dense<0.000000e+00> : vector<8xf32>
    %23 = vector.multi_reduction <add>, %22, %cst_19 [1] : vector<8x128xf32> to vector<8xf32>
    %24 = vector.shape_cast %23 : vector<8xf32> to vector<8x1xf32>
    %c0_20 = arith.constant 0 : index
    %c0_21 = arith.constant 0 : index
    %25 = vector.load %arg9[%c0_20, %c0_21] : memref<1x1xf32, #tpu.memory_space<vmem>>, vector<1x1xf32>
    %26 = vector.broadcast %25 : vector<1x1xf32> to vector<8x1xf32>
    %27 = arith.addf %24, %26 : vector<8x1xf32>
    %28 = arith.negf %27 : vector<8x1xf32>
    %29 = math.exp %28 : vector<8x1xf32>
    %cst_22 = arith.constant 1.000000e+00 : f32
    %30 = vector.broadcast %cst_22 : f32 to vector<8x1xf32>
    %31 = arith.addf %30, %29 : vector<8x1xf32>
    %32 = arith.divf %30, %31 : vector<8x1xf32>
    %c0_23 = arith.constant 0 : index
    %c0_24 = arith.constant 0 : index
    %33 = vector.load %arg10[%c0_23, %c0_24] : memref<8x1xf32, #tpu.memory_space<vmem>>, vector<8x1xf32>
    tpu.vector_store %arg10[%c0_23, %c0_24], %32 {strides = array<i32>} : memref<8x1xf32, #tpu.memory_space<vmem>>, vector<8x1xf32>,
    return
  }
  func.func @transform_0(%arg0: i32) -> (i32, i32) {
    %c0_i32 = arith.constant 0 : i32
    %c0_i32_0 = arith.constant 0 : i32
    return %arg0, %c0_i32 : i32, i32
  }
  func.func @transform_1(%arg0: i32) -> (i32, i32) {
    %c0_i32 = arith.constant 0 : i32
    %c0_i32_0 = arith.constant 0 : i32
    return %arg0, %c0_i32 : i32, i32
  }
  func.func @transform_2(%arg0: i32) -> (i32, i32) {
    %c0_i32 = arith.constant 0 : i32
    %c0_i32_0 = arith.constant 0 : i32
    %c0_i32_1 = arith.constant 0 : i32
    return %c0_i32, %c0_i32_0 : i32, i32
  }
  func.func @transform_3(%arg0: i32) -> (i32, i32) {
    %c0_i32 = arith.constant 0 : i32
    %c0_i32_0 = arith.constant 0 : i32
    %c0_i32_1 = arith.constant 0 : i32
    return %c0_i32, %c0_i32_0 : i32, i32
  }
  func.func @transform_4(%arg0: i32) -> (i32, i32) {
    %c0_i32 = arith.constant 0 : i32
    %c0_i32_0 = arith.constant 0 : i32
    %c0_i32_1 = arith.constant 0 : i32
    return %c0_i32, %c0_i32_0 : i32, i32
  }
  func.func @transform_5(%arg0: i32) -> (i32, i32) {
    %c0_i32 = arith.constant 0 : i32
    %c0_i32_0 = arith.constant 0 : i32
    %c0_i32_1 = arith.constant 0 : i32
    return %c0_i32, %c0_i32_0 : i32, i32
  }
  func.func @transform_6(%arg0: i32) -> (i32, i32) {
    %c0_i32 = arith.constant 0 : i32
    %c0_i32_0 = arith.constant 0 : i32
    %c0_i32_1 = arith.constant 0 : i32
    return %c0_i32, %c0_i32_0 : i32, i32
  }
  func.func @transform_7(%arg0: i32) -> (i32, i32) {
    %c0_i32 = arith.constant 0 : i32
    %c0_i32_0 = arith.constant 0 : i32
    %c0_i32_1 = arith.constant 0 : i32
    return %c0_i32, %c0_i32_0 : i32, i32
  }
  func.func @transform_8(%arg0: i32) -> (i32, i32) {
    %c0_i32 = arith.constant 0 : i32
    %c0_i32_0 = arith.constant 0 : i32
    %c0_i32_1 = arith.constant 0 : i32
    return %c0_i32, %c0_i32_0 : i32, i32
  }
  func.func @transform_9(%arg0: i32) -> (i32, i32) {
    %c0_i32 = arith.constant 0 : i32
    %c0_i32_0 = arith.constant 0 : i32
    return %arg0, %c0_i32 : i32, i32
  }
}

</mosaic_0001>

<llo_original>
// kernel: tpu_custom_call.1
$region0: #{tpu_custom_call.1}
  #allocation0 [shape = 'u32[]', space=smem, size = 0x4, offset = 0x4, fixed_abs, tag = 'smem constant byte address 0x4 - core index']
  #allocation1 [shape = 'u32[144,128]{1,0:T(1,128)}', space=vmem, size = 0x12000, scoped, tag = 'internal scratch']
  #allocation2 [shape = 'f32[1,1]{1,0:T(1,128)S(1)}', space=vmem, size = 0x200, scoped, tag = 'scoped memory for tpu_custom_call.1']
  %s0 = inlined_call_operand.hbm [shape: bf16[8,1024], index: 0, kind: input, shape index: {}]
  %s1 = inlined_call_operand.hbm [shape: bf16[8,1024], index: 1, kind: input, shape index: {}]
  %s2 = inlined_call_operand.hbm [shape: bf16[1024,512], index: 2, kind: input, shape index: {}]
  %s3 = inlined_call_operand.hbm [shape: bf16[1024,512], index: 3, kind: input, shape index: {}]
  %s4 = inlined_call_operand.vmem [shape: f32[1,512], index: 4, kind: input, shape index: {}]
  %s5 = inlined_call_operand.hbm [shape: bf16[512,128], index: 5, kind: input, shape index: {}]
  %s6 = inlined_call_operand.vmem [shape: f32[1,128], index: 6, kind: input, shape index: {}]
  %s7 = inlined_call_operand.vmem [shape: f32[1,128], index: 7, kind: input, shape index: {}]
  %s8 = inlined_call_operand.<no memory space> [shape: f32[1,1], index: 8, kind: input, shape index: {}]
  %s9 = inlined_call_operand.vmem [shape: f32[8,1], index: 9, kind: output, shape index: {}]
  %s10 = sld [smem:[#allocation0]]
  $region66: #{tpu_custom_call.1} parent=0
    _
  %s12 = ssub.s32 1, %s10
  %s13 = scalar_select 0, %s12, %s10
  %v14 = vstv %s8
  %15 = vst [vmem:[#allocation2] sm:$0x1] %v14
  $region1: #{tpu_custom_call.1} parent=0
    #allocation3 [shape = 'u8[16384]{0}', space=vmem, size = 0x4000, scoped, tag = 'input window, operand 0, single buffered']
    #allocation4 [shape = 's32[1]{0}', space=sflag, size = 0x4, scoped, tag = 'scoped memory for tpu_custom_call.1']
    #allocation5 [shape = 'u8[16384]{0}', space=vmem, size = 0x4000, scoped, tag = 'input window, operand 1, single buffered']
    #allocation6 [shape = 's32[1]{0}', space=sflag, size = 0x4, scoped, tag = 'scoped memory for tpu_custom_call.1']
    #allocation7 [shape = 'u8[1048576]{0}', space=vmem, size = 0x100000, scoped, tag = 'input window, operand 2, single buffered']
    #allocation8 [shape = 'u8[1048576]{0}', space=vmem, size = 0x100000, scoped, tag = 'input window, operand 3, single buffered']
    #allocation9 [shape = 's32[1]{0}', space=sflag, size = 0x4, scoped, tag = 'scoped memory for tpu_custom_call.1']
    #allocation10 [shape = 'u8[131072]{0}', space=vmem, size = 0x20000, scoped, tag = 'input window, operand 5, single buffered']
    %16 = vsyncpa [#allocation4], 0
    %17 = vsyncpa [#allocation6], 0
    %18 = vsyncpa [#allocation9], 0
    // Predicated region
    $region2: #{tpu_custom_call.1} parent=1 // pred_check
      _
    $region3: #{tpu_custom_call.1} parent=1 // pred_check_branch
      %20 = sbr.rel (0) target = $region5
    $region4: #{tpu_custom_call.1} parent=1 // pred_region
      %s22 = ssub.s32 512, 512
      %23 = vsyncadd [#allocation4], %s22
      %s25 = sshll.u32 [#allocation3], 4
      %s26 = int_to_ptr.vmem [resolvable:$true] %s25
      %28 = dma.hbm_to_vmem [thread:$0]  %s0, 512, %s26, [#allocation4]
    $region5: #{tpu_custom_call.1} parent=1 // pred_fallthru
      _
    // Predicated region
    $region6: #{tpu_custom_call.1} parent=1 // pred_check
      _
    $region7: #{tpu_custom_call.1} parent=1 // pred_check_branch
      %30 = sbr.rel (0) target = $region9
    $region8: #{tpu_custom_call.1} parent=1 // pred_region
      %s32 = ssub.s32 512, 512
      %33 = vsyncadd [#allocation6], %s32
      %s35 = sshll.u32 [#allocation5], 4
      %s36 = int_to_ptr.vmem [resolvable:$true] %s35
      %38 = dma.hbm_to_vmem [thread:$0]  %s1, 512, %s36, [#allocation6]
    $region9: #{tpu_custom_call.1} parent=1 // pred_fallthru
      _
    // Predicated region
    $region10: #{tpu_custom_call.1} parent=1 // pred_check
      _
    $region11: #{tpu_custom_call.1} parent=1 // pred_check_branch
      %40 = sbr.rel (0) target = $region13
    $region12: #{tpu_custom_call.1} parent=1 // pred_region
      %s42 = ssub.s32 32768, 32768
      %43 = vsyncadd [#allocation6], %s42
      %s44 = sshll.u32 [#allocation7], 4
      %s45 = int_to_ptr.vmem [resolvable:$true] %s44
      %50 = dma.hbm_to_vmem [thread:$0]  %s2, 32768, %s45, [#allocation6], 256, 256, 16
    $region13: #{tpu_custom_call.1} parent=1 // pred_fallthru
      _
    // Predicated region
    $region14: #{tpu_custom_call.1} parent=1 // pred_check
      _
    $region15: #{tpu_custom_call.1} parent=1 // pred_check_branch
      %52 = sbr.rel (0) target = $region17
    $region16: #{tpu_custom_call.1} parent=1 // pred_region
      %s54 = ssub.s32 32768, 32768
      %55 = vsyncadd [#allocation9], %s54
      %s56 = sshll.u32 [#allocation8], 4
      %s57 = int_to_ptr.vmem [resolvable:$true] %s56
      %62 = dma.hbm_to_vmem [thread:$0]  %s3, 32768, %s57, [#allocation9], 256, 256, 16
    $region17: #{tpu_custom_call.1} parent=1 // pred_fallthru
      _
    // Predicated region
    $region18: #{tpu_custom_call.1} parent=1 // pred_check
      _
    $region19: #{tpu_custom_call.1} parent=1 // pred_check_branch
      %64 = sbr.rel (0) target = $region21
    $region20: #{tpu_custom_call.1} parent=1 // pred_region
      _
    $region21: #{tpu_custom_call.1} parent=1 // pred_fallthru
      _
    // Predicated region
    $region22: #{tpu_custom_call.1} parent=1 // pred_check
      _
    $region23: #{tpu_custom_call.1} parent=1 // pred_check_branch
      %66 = sbr.rel (0) target = $region25
    $region24: #{tpu_custom_call.1} parent=1 // pred_region
      %s68 = ssub.s32 4096, 4096
      %69 = vsyncadd [#allocation9], %s68
      %s70 = sshll.u32 [#allocation10], 4
      %s71 = int_to_ptr.vmem [resolvable:$true] %s70
      %76 = dma.hbm_to_vmem [thread:$0]  %s5, 4096, %s71, [#allocation9], 64, 64, 4
    $region25: #{tpu_custom_call.1} parent=1 // pred_fallthru
      _
    // Predicated region
    $region26: #{tpu_custom_call.1} parent=1 // pred_check
      _
    $region27: #{tpu_custom_call.1} parent=1 // pred_check_branch
      %78 = sbr.rel (0) target = $region29
    $region28: #{tpu_custom_call.1} parent=1 // pred_region
      _
    $region29: #{tpu_custom_call.1} parent=1 // pred_fallthru
      _
    // Predicated region
    $region30: #{tpu_custom_call.1} parent=1 // pred_check
      _
    $region31: #{tpu_custom_call.1} parent=1 // pred_check_branch
      %80 = sbr.rel (0) target = $region33
    $region32: #{tpu_custom_call.1} parent=1 // pred_region
      _
    $region33: #{tpu_custom_call.1} parent=1 // pred_fallthru
      _
    // Predicated region
    $region34: #{tpu_custom_call.1} parent=1 // pred_check
      _
    $region35: #{tpu_custom_call.1} parent=1 // pred_check_branch
      %82 = sbr.rel (0) target = $region37
    $region36: #{tpu_custom_call.1} parent=1 // pred_region
      _
    $region37: #{tpu_custom_call.1} parent=1 // pred_fallthru
      _
    // Predicated region
    $region38: #{tpu_custom_call.1} parent=1 // pred_check
      _
    $region39: #{tpu_custom_call.1} parent=1 // pred_check_branch
      %84 = sbr.rel (0) target = $region41
    $region40: #{tpu_custom_call.1} parent=1 // pred_region
      %85 = dma.done [#allocation4], 512
    $region41: #{tpu_custom_call.1} parent=1 // pred_fallthru
      _
    // Predicated region
    $region42: #{tpu_custom_call.1} parent=1 // pred_check
      _
    $region43: #{tpu_custom_call.1} parent=1 // pred_check_branch
      %87 = sbr.rel (0) target = $region45
    $region44: #{tpu_custom_call.1} parent=1 // pred_region
      %88 = dma.done [#allocation6], 512
    $region45: #{tpu_custom_call.1} parent=1 // pred_fallthru
      _
    // Predicated region
    $region46: #{tpu_custom_call.1} parent=1 // pred_check
      _
    $region47: #{tpu_custom_call.1} parent=1 // pred_check_branch
      %90 = sbr.rel (0) target = $region49
    $region48: #{tpu_custom_call.1} parent=1 // pred_region
      %91 = dma.done [#allocation6], 32768
    $region49: #{tpu_custom_call.1} parent=1 // pred_fallthru
      _
    // Predicated region
    $region50: #{tpu_custom_call.1} parent=1 // pred_check
      _
    $region51: #{tpu_custom_call.1} parent=1 // pred_check_branch
      %93 = sbr.rel (0) target = $region53
    $region52: #{tpu_custom_call.1} parent=1 // pred_region
      %94 = dma.done [#allocation9], 32768
    $region53: #{tpu_custom_call.1} parent=1 // pred_fallthru
      _
    // Predicated region
    $region54: #{tpu_custom_call.1} parent=1 // pred_check
      _
    $region55: #{tpu_custom_call.1} parent=1 // pred_check_branch
      %96 = sbr.rel (0) target = $region57
    $region56: #{tpu_custom_call.1} parent=1 // pred_region
      %97 = dma.done [#allocation9], 4096
    $region57: #{tpu_custom_call.1} parent=1 // pred_fallthru
      _
    %v99 = vld [vmem:[#allocation3] sm:$0xff]
    %v100 = vld [vmem:[#allocation3 + $0x8] sm:$0xff]
    %v101 = vld [vmem:[#allocation3 + $0x10] sm:$0xff]
    %v102 = vld [vmem:[#allocation3 + $0x18] sm:$0xff]
    %v103 = vld [vmem:[#allocation7] sm:$0xff]
    %v104 = vld [vmem:[#allocation7 + $0x8] sm:$0xff]
    %v105 = vld [vmem:[#allocation7 + $0x10] sm:$0xff]
    %v106 = vld [vmem:[#allocation7 + $0x18] sm:$0xff]
    %v107 = vld [vmem:[#allocation7 + $0x20] sm:$0xff]
    %v108 = vld [vmem:[#allocation7 + $0x28] sm:$0xff]
    %v109 = vld [vmem:[#allocation7 + $0x30] sm:$0xff]
    %v110 = vld [vmem:[#allocation7 + $0x38] sm:$0xff]
    %v111 = vld [vmem:[#allocation7 + $0x40] sm:$0xff]
    %v112 = vld [vmem:[#allocation7 + $0x48] sm:$0xff]
    %v113 = vld [vmem:[#allocation7 + $0x50] sm:$0xff]
    %v114 = vld [vmem:[#allocation7 + $0x58] sm:$0xff]
    %v115 = vld [vmem:[#allocation7 + $0x60] sm:$0xff]
    %v116 = vld [vmem:[#allocation7 + $0x68] sm:$0xff]
    %v117 = vld [vmem:[#allocation7 + $0x70] sm:$0xff]
    %v118 = vld [vmem:[#allocation7 + $0x78] sm:$0xff]
    %v119 = vld [vmem:[#allocation7 + $0x80] sm:$0xff]
    %v120 = vld [vmem:[#allocation7 + $0x88] sm:$0xff]
    %v121 = vld [vmem:[#allocation7 + $0x90] sm:$0xff]
    %v122 = vld [vmem:[#allocation7 + $0x98] sm:$0xff]
    %v123 = vld [vmem:[#allocation7 + $0xa0] sm:$0xff]
    %v124 = vld [vmem:[#allocation7 + $0xa8] sm:$0xff]
    %v125 = vld [vmem:[#allocation7 + $0xb0] sm:$0xff]
    %v126 = vld [vmem:[#allocation7 + $0xb8] sm:$0xff]
    %v127 = vld [vmem:[#allocation7 + $0xc0] sm:$0xff]
    %v128 = vld [vmem:[#allocation7 + $0xc8] sm:$0xff]
    %v129 = vld [vmem:[#allocation7 + $0xd0] sm:$0xff]
    %v130 = vld [vmem:[#allocation7 + $0xd8] sm:$0xff]
    %v131 = vld [vmem:[#allocation7 + $0xe0] sm:$0xff]
    %v132 = vld [vmem:[#allocation7 + $0xe8] sm:$0xff]
    %v133 = vld [vmem:[#allocation7 + $0xf0] sm:$0xff]
    %v134 = vld [vmem:[#allocation7 + $0xf8] sm:$0xff]
    %v135 = vld [vmem:[#allocation7 + $0x100] sm:$0xff]
    %v136 = vld [vmem:[#allocation7 + $0x108] sm:$0xff]
    %v137 = vld [vmem:[#allocation7 + $0x110] sm:$0xff]
    %v138 = vld [vmem:[#allocation7 + $0x118] sm:$0xff]
    %v139 = vld [vmem:[#allocation7 + $0x120] sm:$0xff]
    %v140 = vld [vmem:[#allocation7 + $0x128] sm:$0xff]
    %v141 = vld [vmem:[#allocation7 + $0x130] sm:$0xff]
    %v142 = vld [vmem:[#allocation7 + $0x138] sm:$0xff]
    %v143 = vld [vmem:[#allocation7 + $0x140] sm:$0xff]
    %v144 = vld [vmem:[#allocation7 + $0x148] sm:$0xff]
    %v145 = vld [vmem:[#allocation7 + $0x150] sm:$0xff]
    %v146 = vld [vmem:[#allocation7 + $0x158] sm:$0xff]
    %v147 = vld [vmem:[#allocation7 + $0x160] sm:$0xff]
    %v148 = vld [vmem:[#allocation7 + $0x168] sm:$0xff]
    %v149 = vld [vmem:[#allocation7 + $0x170] sm:$0xff]
    %v150 = vld [vmem:[#allocation7 + $0x178] sm:$0xff]
    %v151 = vld [vmem:[#allocation7 + $0x180] sm:$0xff]
    %v152 = vld [vmem:[#allocation7 + $0x188] sm:$0xff]
    %v153 = vld [vmem:[#allocation7 + $0x190] sm:$0xff]
    %v154 = vld [vmem:[#allocation7 + $0x198] sm:$0xff]
    %v155 = vld [vmem:[#allocation7 + $0x1a0] sm:$0xff]
    %v156 = vld [vmem:[#allocation7 + $0x1a8] sm:$0xff]
    %v157 = vld [vmem:[#allocation7 + $0x1b0] sm:$0xff]
    %v158 = vld [vmem:[#allocation7 + $0x1b8] sm:$0xff]
    %v159 = vld [vmem:[#allocation7 + $0x1c0] sm:$0xff]
    %v160 = vld [vmem:[#allocation7 + $0x1c8] sm:$0xff]
    %v161 = vld [vmem:[#allocation7 + $0x1d0] sm:$0xff]
    %v162 = vld [vmem:[#allocation7 + $0x1d8] sm:$0xff]
    %v163 = vld [vmem:[#allocation7 + $0x1e0] sm:$0xff]
    %v164 = vld [vmem:[#allocation7 + $0x1e8] sm:$0xff]
    %v165 = vld [vmem:[#allocation7 + $0x1f0] sm:$0xff]
    %v166 = vld [vmem:[#allocation7 + $0x1f8] sm:$0xff]
    %v167 = vld [vmem:[#allocation7 + $0x200] sm:$0xff]
    %v168 = vld [vmem:[#allocation7 + $0x208] sm:$0xff]
    %v169 = vld [vmem:[#allocation7 + $0x210] sm:$0xff]
    %v170 = vld [vmem:[#allocation7 + $0x218] sm:$0xff]
    %v171 = vld [vmem:[#allocation7 + $0x220] sm:$0xff]
    %v172 = vld [vmem:[#allocation7 + $0x228] sm:$0xff]
    %v173 = vld [vmem:[#allocation7 + $0x230] sm:$0xff]
    %v174 = vld [vmem:[#allocation7 + $0x238] sm:$0xff]
    %v175 = vld [vmem:[#allocation7 + $0x240] sm:$0xff]
    %v176 = vld [vmem:[#allocation7 + $0x248] sm:$0xff]
    %v177 = vld [vmem:[#allocation7 + $0x250] sm:$0xff]
    %v178 = vld [vmem:[#allocation7 + $0x258] sm:$0xff]
    %v179 = vld [vmem:[#allocation7 + $0x260] sm:$0xff]
    %v180 = vld [vmem:[#allocation7 + $0x268] sm:$0xff]
    %v181 = vld [vmem:[#allocation7 + $0x270] sm:$0xff]
    %v182 = vld [vmem:[#allocation7 + $0x278] sm:$0xff]
    %v183 = vld [vmem:[#allocation7 + $0x280] sm:$0xff]
    %v184 = vld [vmem:[#allocation7 + $0x288] sm:$0xff]
    %v185 = vld [vmem:[#allocation7 + $0x290] sm:$0xff]
    %v186 = vld [vmem:[#allocation7 + $0x298] sm:$0xff]
    %v187 = vld [vmem:[#allocation7 + $0x2a0] sm:$0xff]
    %v188 = vld [vmem:[#allocation7 + $0x2a8] sm:$0xff]
    %v189 = vld [vmem:[#allocation7 + $0x2b0] sm:$0xff]
    %v190 = vld [vmem:[#allocation7 + $0x2b8] sm:$0xff]
    %v191 = vld [vmem:[#allocation7 + $0x2c0] sm:$0xff]
    %v192 = vld [vmem:[#allocation7 + $0x2c8] sm:$0xff]
    %v193 = vld [vmem:[#allocation7 + $0x2d0] sm:$0xff]
    %v194 = vld [vmem:[#allocation7 + $0x2d8] sm:$0xff]
    %v195 = vld [vmem:[#allocation7 + $0x2e0] sm:$0xff]
    %v196 = vld [vmem:[#allocation7 + $0x2e8] sm:$0xff]
    %v197 = vld [vmem:[#allocation7 + $0x2f0] sm:$0xff]
    %v198 = vld [vmem:[#allocation7 + $0x2f8] sm:$0xff]
    %v199 = vld [vmem:[#allocation7 + $0x300] sm:$0xff]
    %v200 = vld [vmem:[#allocation7 + $0x308] sm:$0xff]
    %v201 = vld [vmem:[#allocation7 + $0x310] sm:$0xff]
    %v202 = vld [vmem:[#allocation7 + $0x318] sm:$0xff]
    %v203 = vld [vmem:[#allocation7 + $0x320] sm:$0xff]
    %v204 = vld [vmem:[#allocation7 + $0x328] sm:$0xff]
    %v205 = vld [vmem:[#allocation7 + $0x330] sm:$0xff]
    %v206 = vld [vmem:[#allocation7 + $0x338] sm:$0xff]
    %v207 = vld [vmem:[#allocation7 + $0x340] sm:$0xff]
    %v208 = vld [vmem:[#allocation7 + $0x348] sm:$0xff]
    %v209 = vld [vmem:[#allocation7 + $0x350] sm:$0xff]
    %v210 = vld [vmem:[#allocation7 + $0x358] sm:$0xff]
    %v211 = vld [vmem:[#allocation7 + $0x360] sm:$0xff]
    %v212 = vld [vmem:[#allocation7 + $0x368] sm:$0xff]
    %v213 = vld [vmem:[#allocation7 + $0x370] sm:$0xff]
    %v214 = vld [vmem:[#allocation7 + $0x378] sm:$0xff]
    %v215 = vld [vmem:[#allocation7 + $0x380] sm:$0xff]
    %v216 = vld [vmem:[#allocation7 + $0x388] sm:$0xff]
    %v217 = vld [vmem:[#allocation7 + $0x390] sm:$0xff]
    %v218 = vld [vmem:[#allocation7 + $0x398] sm:$0xff]
    %v219 = vld [vmem:[#allocation7 + $0x3a0] sm:$0xff]
    %v220 = vld [vmem:[#allocation7 + $0x3a8] sm:$0xff]
    %v221 = vld [vmem:[#allocation7 + $0x3b0] sm:$0xff]
    %v222 = vld [vmem:[#allocation7 + $0x3b8] sm:$0xff]
    %v223 = vld [vmem:[#allocation7 + $0x3c0] sm:$0xff]
    %v224 = vld [vmem:[#allocation7 + $0x3c8] sm:$0xff]
    %v225 = vld [vmem:[#allocation7 + $0x3d0] sm:$0xff]
    %v226 = vld [vmem:[#allocation7 + $0x3d8] sm:$0xff]
    %v227 = vld [vmem:[#allocation7 + $0x3e0] sm:$0xff]
    %v228 = vld [vmem:[#allocation7 + $0x3e8] sm:$0xff]
    %v229 = vld [vmem:[#allocation7 + $0x3f0] sm:$0xff]
    %v230 = vld [vmem:[#allocation7 + $0x3f8] sm:$0xff]
    %v231 = vld [vmem:[#allocation7 + $0x400] sm:$0xff]
    %v232 = vld [vmem:[#allocation7 + $0x408] sm:$0xff]
    %v233 = vld [vmem:[#allocation7 + $0x410] sm:$0xff]
    %v234 = vld [vmem:[#allocation7 + $0x418] sm:$0xff]
    %v235 = vld [vmem:[#allocation7 + $0x420] sm:$0xff]
    %v236 = vld [vmem:[#allocation7 + $0x428] sm:$0xff]
    %v237 = vld [vmem:[#allocation7 + $0x430] sm:$0xff]
    %v238 = vld [vmem:[#allocation7 + $0x438] sm:$0xff]
    %v239 = vld [vmem:[#allocation7 + $0x440] sm:$0xff]
    %v240 = vld [vmem:[#allocation7 + $0x448] sm:$0xff]
    %v241 = vld [vmem:[#allocation7 + $0x450] sm:$0xff]
    %v242 = vld [vmem:[#allocation7 + $0x458] sm:$0xff]
    %v243 = vld [vmem:[#allocation7 + $0x460] sm:$0xff]
    %v244 = vld [vmem:[#allocation7 + $0x468] sm:$0xff]
    %v245 = vld [vmem:[#allocation7 + $0x470] sm:$0xff]
    %v246 = vld [vmem:[#allocation7 + $0x478] sm:$0xff]
    %v247 = vld [vmem:[#allocation7 + $0x480] sm:$0xff]
    %v248 = vld [vmem:[#allocation7 + $0x488] sm:$0xff]
    %v249 = vld [vmem:[#allocation7 + $0x490] sm:$0xff]
    %v250 = vld [vmem:[#allocation7 + $0x498] sm:$0xff]
    %v251 = vld [vmem:[#allocation7 + $0x4a0] sm:$0xff]
    %v252 = vld [vmem:[#allocation7 + $0x4a8] sm:$0xff]
    %v253 = vld [vmem:[#allocation7 + $0x4b0] sm:$0xff]
    %v254 = vld [vmem:[#allocation7 + $0x4b8] sm:$0xff]
    %v255 = vld [vmem:[#allocation7 + $0x4c0] sm:$0xff]
    %v256 = vld [vmem:[#allocation7 + $0x4c8] sm:$0xff]
    %v257 = vld [vmem:[#allocation7 + $0x4d0] sm:$0xff]
    %v258 = vld [vmem:[#allocation7 + $0x4d8] sm:$0xff]
    %v259 = vld [vmem:[#allocation7 + $0x4e0] sm:$0xff]
    %v260 = vld [vmem:[#allocation7 + $0x4e8] sm:$0xff]
    %v261 = vld [vmem:[#allocation7 + $0x4f0] sm:$0xff]
    %v262 = vld [vmem:[#allocation7 + $0x4f8] sm:$0xff]
    %v263 = vld [vmem:[#allocation7 + $0x500] sm:$0xff]
    %v264 = vld [vmem:[#allocation7 + $0x508] sm:$0xff]
    %v265 = vld [vmem:[#allocation7 + $0x510] sm:$0xff]
    %v266 = vld [vmem:[#allocation7 + $0x518] sm:$0xff]
    %v267 = vld [vmem:[#allocation7 + $0x520] sm:$0xff]
    %v268 = vld [vmem:[#allocation7 + $0x528] sm:$0xff]
    %v269 = vld [vmem:[#allocation7 + $0x530] sm:$0xff]
    %v270 = vld [vmem:[#allocation7 + $0x538] sm:$0xff]
    %v271 = vld [vmem:[#allocation7 + $0x540] sm:$0xff]
    %v272 = vld [vmem:[#allocation7 + $0x548] sm:$0xff]
    %v273 = vld [vmem:[#allocation7 + $0x550] sm:$0xff]
    %v274 = vld [vmem:[#allocation7 + $0x558] sm:$0xff]
    %v275 = vld [vmem:[#allocation7 + $0x560] sm:$0xff]
    %v276 = vld [vmem:[#allocation7 + $0x568] sm:$0xff]
    %v277 = vld [vmem:[#allocation7 + $0x570] sm:$0xff]
    %v278 = vld [vmem:[#allocation7 + $0x578] sm:$0xff]
    %v279 = vld [vmem:[#allocation7 + $0x580] sm:$0xff]
    %v280 = vld [vmem:[#allocation7 + $0x588] sm:$0xff]
    %v281 = vld [vmem:[#allocation7 + $0x590] sm:$0xff]
    %v282 = vld [vmem:[#allocation7 + $0x598] sm:$0xff]
    %v283 = vld [vmem:[#allocation7 + $0x5a0] sm:$0xff]
    %v284 = vld [vmem:[#allocation7 + $0x5a8] sm:$0xff]
    %v285 = vld [vmem:[#allocation7 + $0x5b0] sm:$0xff]
    %v286 = vld [vmem:[#allocation7 + $0x5b8] sm:$0xff]
    %v287 = vld [vmem:[#allocation7 + $0x5c0] sm:$0xff]
    %v288 = vld [vmem:[#allocation7 + $0x5c8] sm:$0xff]
    %v289 = vld [vmem:[#allocation7 + $0x5d0] sm:$0xff]
    %v290 = vld [vmem:[#allocation7 + $0x5d8] sm:$0xff]
    %v291 = vld [vmem:[#allocation7 + $0x5e0] sm:$0xff]
    %v292 = vld [vmem:[#allocation7 + $0x5e8] sm:$0xff]
    %v293 = vld [vmem:[#allocation7 + $0x5f0] sm:$0xff]
    %v294 = vld [vmem:[#allocation7 + $0x5f8] sm:$0xff]
    %v295 = vld [vmem:[#allocation7 + $0x600] sm:$0xff]
    %v296 = vld [vmem:[#allocation7 + $0x608] sm:$0xff]
    %v297 = vld [vmem:[#allocation7 + $0x610] sm:$0xff]
    %v298 = vld [vmem:[#allocation7 + $0x618] sm:$0xff]
    %v299 = vld [vmem:[#allocation7 + $0x620] sm:$0xff]
    %v300 = vld [vmem:[#allocation7 + $0x628] sm:$0xff]
    %v301 = vld [vmem:[#allocation7 + $0x630] sm:$0xff]
    %v302 = vld [vmem:[#allocation7 + $0x638] sm:$0xff]
    %v303 = vld [vmem:[#allocation7 + $0x640] sm:$0xff]
    %v304 = vld [vmem:[#allocation7 + $0x648] sm:$0xff]
    %v305 = vld [vmem:[#allocation7 + $0x650] sm:$0xff]
    %v306 = vld [vmem:[#allocation7 + $0x658] sm:$0xff]
    %v307 = vld [vmem:[#allocation7 + $0x660] sm:$0xff]
    %v308 = vld [vmem:[#allocation7 + $0x668] sm:$0xff]
    %v309 = vld [vmem:[#allocation7 + $0x670] sm:$0xff]
    %v310 = vld [vmem:[#allocation7 + $0x678] sm:$0xff]
    %v311 = vld [vmem:[#allocation7 + $0x680] sm:$0xff]
    %v312 = vld [vmem:[#allocation7 + $0x688] sm:$0xff]
    %v313 = vld [vmem:[#allocation7 + $0x690] sm:$0xff]
    %v314 = vld [vmem:[#allocation7 + $0x698] sm:$0xff]
    %v315 = vld [vmem:[#allocation7 + $0x6a0] sm:$0xff]
    %v316 = vld [vmem:[#allocation7 + $0x6a8] sm:$0xff]
    %v317 = vld [vmem:[#allocation7 + $0x6b0] sm:$0xff]
    %v318 = vld [vmem:[#allocation7 + $0x6b8] sm:$0xff]
    %v319 = vld [vmem:[#allocation7 + $0x6c0] sm:$0xff]
    %v320 = vld [vmem:[#allocation7 + $0x6c8] sm:$0xff]
    %v321 = vld [vmem:[#allocation7 + $0x6d0] sm:$0xff]
    %v322 = vld [vmem:[#allocation7 + $0x6d8] sm:$0xff]
    %v323 = vld [vmem:[#allocation7 + $0x6e0] sm:$0xff]
    %v324 = vld [vmem:[#allocation7 + $0x6e8] sm:$0xff]
    %v325 = vld [vmem:[#allocation7 + $0x6f0] sm:$0xff]
    %v326 = vld [vmem:[#allocation7 + $0x6f8] sm:$0xff]
    %v327 = vld [vmem:[#allocation7 + $0x700] sm:$0xff]
    %v328 = vld [vmem:[#allocation7 + $0x708] sm:$0xff]
    %v329 = vld [vmem:[#allocation7 + $0x710] sm:$0xff]
    %v330 = vld [vmem:[#allocation7 + $0x718] sm:$0xff]
    %v331 = vld [vmem:[#allocation7 + $0x720] sm:$0xff]
    %v332 = vld [vmem:[#allocation7 + $0x728] sm:$0xff]
    %v333 = vld [vmem:[#allocation7 + $0x730] sm:$0xff]
    %v334 = vld [vmem:[#allocation7 + $0x738] sm:$0xff]
    %v335 = vld [vmem:[#allocation7 + $0x740] sm:$0xff]
    %v336 = vld [vmem:[#allocation7 + $0x748] sm:$0xff]
    %v337 = vld [vmem:[#allocation7 + $0x750] sm:$0xff]
    %v338 = vld [vmem:[#allocation7 + $0x758] sm:$0xff]
    %v339 = vld [vmem:[#allocation7 + $0x760] sm:$0xff]
    %v340 = vld [vmem:[#allocation7 + $0x768] sm:$0xff]
    %v341 = vld [vmem:[#allocation7 + $0x770] sm:$0xff]
    %v342 = vld [vmem:[#allocation7 + $0x778] sm:$0xff]
    %v343 = vld [vmem:[#allocation7 + $0x780] sm:$0xff]
    %v344 = vld [vmem:[#allocation7 + $0x788] sm:$0xff]
    %v345 = vld [vmem:[#allocation7 + $0x790] sm:$0xff]
    %v346 = vld [vmem:[#allocation7 + $0x798] sm:$0xff]
    %v347 = vld [vmem:[#allocation7 + $0x7a0] sm:$0xff]
    %v348 = vld [vmem:[#allocation7 + $0x7a8] sm:$0xff]
    %v349 = vld [vmem:[#allocation7 + $0x7b0] sm:$0xff]
    %v350 = vld [vmem:[#allocation7 + $0x7b8] sm:$0xff]
    %v351 = vld [vmem:[#allocation7 + $0x7c0] sm:$0xff]
    %v352 = vld [vmem:[#allocation7 + $0x7c8] sm:$0xff]
    %v353 = vld [vmem:[#allocation7 + $0x7d0] sm:$0xff]
    %v354 = vld [vmem:[#allocation7 + $0x7d8] sm:$0xff]
    %v355 = vld [vmem:[#allocation7 + $0x7e0] sm:$0xff]
    %v356 = vld [vmem:[#allocation7 + $0x7e8] sm:$0xff]
    %v357 = vld [vmem:[#allocation7 + $0x7f0] sm:$0xff]
    %v358 = vld [vmem:[#allocation7 + $0x7f8] sm:$0xff]
    %v359 = vld [vmem:[#allocation5] sm:$0xff]
    %v360 = vld [vmem:[#allocation5 + $0x8] sm:$0xff]
    %v361 = vld [vmem:[#allocation5 + $0x10] sm:$0xff]
    %v362 = vld [vmem:[#allocation5 + $0x18] sm:$0xff]
    %v363 = vld [vmem:[#allocation8] sm:$0xff]
    %v364 = vld [vmem:[#allocation8 + $0x8] sm:$0xff]
    %v365 = vld [vmem:[#allocation8 + $0x10] sm:$0xff]
    %v366 = vld [vmem:[#allocation8 + $0x18] sm:$0xff]
    %v367 = vld [vmem:[#allocation8 + $0x20] sm:$0xff]
    %v368 = vld [vmem:[#allocation8 + $0x28] sm:$0xff]
    %v369 = vld [vmem:[#allocation8 + $0x30] sm:$0xff]
    %v370 = vld [vmem:[#allocation8 + $0x38] sm:$0xff]
    %v371 = vld [vmem:[#allocation8 + $0x40] sm:$0xff]
    %v372 = vld [vmem:[#allocation8 + $0x48] sm:$0xff]
    %v373 = vld [vmem:[#allocation8 + $0x50] sm:$0xff]
    %v374 = vld [vmem:[#allocation8 + $0x58] sm:$0xff]
    %v375 = vld [vmem:[#allocation8 + $0x60] sm:$0xff]
    %v376 = vld [vmem:[#allocation8 + $0x68] sm:$0xff]
    %v377 = vld [vmem:[#allocation8 + $0x70] sm:$0xff]
    %v378 = vld [vmem:[#allocation8 + $0x78] sm:$0xff]
    %v379 = vld [vmem:[#allocation8 + $0x80] sm:$0xff]
    %v380 = vld [vmem:[#allocation8 + $0x88] sm:$0xff]
    %v381 = vld [vmem:[#allocation8 + $0x90] sm:$0xff]
    %v382 = vld [vmem:[#allocation8 + $0x98] sm:$0xff]
    %v383 = vld [vmem:[#allocation8 + $0xa0] sm:$0xff]
    %v384 = vld [vmem:[#allocation8 + $0xa8] sm:$0xff]
    %v385 = vld [vmem:[#allocation8 + $0xb0] sm:$0xff]
    %v386 = vld [vmem:[#allocation8 + $0xb8] sm:$0xff]
    %v387 = vld [vmem:[#allocation8 + $0xc0] sm:$0xff]
    %v388 = vld [vmem:[#allocation8 + $0xc8] sm:$0xff]
    %v389 = vld [vmem:[#allocation8 + $0xd0] sm:$0xff]
    %v390 = vld [vmem:[#allocation8 + $0xd8] sm:$0xff]
    %v391 = vld [vmem:[#allocation8 + $0xe0] sm:$0xff]
    %v392 = vld [vmem:[#allocation8 + $0xe8] sm:$0xff]
    %v393 = vld [vmem:[#allocation8 + $0xf0] sm:$0xff]
    %v394 = vld [vmem:[#allocation8 + $0xf8] sm:$0xff]
    %v395 = vld [vmem:[#allocation8 + $0x100] sm:$0xff]
    %v396 = vld [vmem:[#allocation8 + $0x108] sm:$0xff]
    %v397 = vld [vmem:[#allocation8 + $0x110] sm:$0xff]
    %v398 = vld [vmem:[#allocation8 + $0x118] sm:$0xff]
    %v399 = vld [vmem:[#allocation8 + $0x120] sm:$0xff]
    %v400 = vld [vmem:[#allocation8 + $0x128] sm:$0xff]
    %v401 = vld [vmem:[#allocation8 + $0x130] sm:$0xff]
    %v402 = vld [vmem:[#allocation8 + $0x138] sm:$0xff]
    %v403 = vld [vmem:[#allocation8 + $0x140] sm:$0xff]
    %v404 = vld [vmem:[#allocation8 + $0x148] sm:$0xff]
    %v405 = vld [vmem:[#allocation8 + $0x150] sm:$0xff]
    %v406 = vld [vmem:[#allocation8 + $0x158] sm:$0xff]
    %v407 = vld [vmem:[#allocation8 + $0x160] sm:$0xff]
    %v408 = vld [vmem:[#allocation8 + $0x168] sm:$0xff]
    %v409 = vld [vmem:[#allocation8 + $0x170] sm:$0xff]
    %v410 = vld [vmem:[#allocation8 + $0x178] sm:$0xff]
    %v411 = vld [vmem:[#allocation8 + $0x180] sm:$0xff]
    %v412 = vld [vmem:[#allocation8 + $0x188] sm:$0xff]
    %v413 = vld [vmem:[#allocation8 + $0x190] sm:$0xff]
    %v414 = vld [vmem:[#allocation8 + $0x198] sm:$0xff]
    %v415 = vld [vmem:[#allocation8 + $0x1a0] sm:$0xff]
    %v416 = vld [vmem:[#allocation8 + $0x1a8] sm:$0xff]
    %v417 = vld [vmem:[#allocation8 + $0x1b0] sm:$0xff]
    %v418 = vld [vmem:[#allocation8 + $0x1b8] sm:$0xff]
    %v419 = vld [vmem:[#allocation8 + $0x1c0] sm:$0xff]
    %v420 = vld [vmem:[#allocation8 + $0x1c8] sm:$0xff]
    %v421 = vld [vmem:[#allocation8 + $0x1d0] sm:$0xff]
    %v422 = vld [vmem:[#allocation8 + $0x1d8] sm:$0xff]
    %v423 = vld [vmem:[#allocation8 + $0x1e0] sm:$0xff]
    %v424 = vld [vmem:[#allocation8 + $0x1e8] sm:$0xff]
    %v425 = vld [vmem:[#allocation8 + $0x1f0] sm:$0xff]
    %v426 = vld [vmem:[#allocation8 + $0x1f8] sm:$0xff]
    %v427 = vld [vmem:[#allocation8 + $0x200] sm:$0xff]
    %v428 = vld [vmem:[#allocation8 + $0x208] sm:$0xff]
    %v429 = vld [vmem:[#allocation8 + $0x210] sm:$0xff]
    %v430 = vld [vmem:[#allocation8 + $0x218] sm:$0xff]
    %v431 = vld [vmem:[#allocation8 + $0x220] sm:$0xff]
    %v432 = vld [vmem:[#allocation8 + $0x228] sm:$0xff]
    %v433 = vld [vmem:[#allocation8 + $0x230] sm:$0xff]
    %v434 = vld [vmem:[#allocation8 + $0x238] sm:$0xff]
    %v435 = vld [vmem:[#allocation8 + $0x240] sm:$0xff]
    %v436 = vld [vmem:[#allocation8 + $0x248] sm:$0xff]
    %v437 = vld [vmem:[#allocation8 + $0x250] sm:$0xff]
    %v438 = vld [vmem:[#allocation8 + $0x258] sm:$0xff]
    %v439 = vld [vmem:[#allocation8 + $0x260] sm:$0xff]
    %v440 = vld [vmem:[#allocation8 + $0x268] sm:$0xff]
    %v441 = vld [vmem:[#allocation8 + $0x270] sm:$0xff]
    %v442 = vld [vmem:[#allocation8 + $0x278] sm:$0xff]
    %v443 = vld [vmem:[#allocation8 + $0x280] sm:$0xff]
    %v444 = vld [vmem:[#allocation8 + $0x288] sm:$0xff]
    %v445 = vld [vmem:[#allocation8 + $0x290] sm:$0xff]
    %v446 = vld [vmem:[#allocation8 + $0x298] sm:$0xff]
    %v447 = vld [vmem:[#allocation8 + $0x2a0] sm:$0xff]
    %v448 = vld [vmem:[#allocation8 + $0x2a8] sm:$0xff]
    %v449 = vld [vmem:[#allocation8 + $0x2b0] sm:$0xff]
    %v450 = vld [vmem:[#allocation8 + $0x2b8] sm:$0xff]
    %v451 = vld [vmem:[#allocation8 + $0x2c0] sm:$0xff]
    %v452 = vld [vmem:[#allocation8 + $0x2c8] sm:$0xff]
    %v453 = vld [vmem:[#allocation8 + $0x2d0] sm:$0xff]
    %v454 = vld [vmem:[#allocation8 + $0x2d8] sm:$0xff]
    %v455 = vld [vmem:[#allocation8 + $0x2e0] sm:$0xff]
    %v456 = vld [vmem:[#allocation8 + $0x2e8] sm:$0xff]
    %v457 = vld [vmem:[#allocation8 + $0x2f0] sm:$0xff]
    %v458 = vld [vmem:[#allocation8 + $0x2f8] sm:$0xff]
    %v459 = vld [vmem:[#allocation8 + $0x300] sm:$0xff]
    %v460 = vld [vmem:[#allocation8 + $0x308] sm:$0xff]
    %v461 = vld [vmem:[#allocation8 + $0x310] sm:$0xff]
    %v462 = vld [vmem:[#allocation8 + $0x318] sm:$0xff]
    %v463 = vld [vmem:[#allocation8 + $0x320] sm:$0xff]
    %v464 = vld [vmem:[#allocation8 + $0x328] sm:$0xff]
    %v465 = vld [vmem:[#allocation8 + $0x330] sm:$0xff]
    %v466 = vld [vmem:[#allocation8 + $0x338] sm:$0xff]
    %v467 = vld [vmem:[#allocation8 + $0x340] sm:$0xff]
    %v468 = vld [vmem:[#allocation8 + $0x348] sm:$0xff]
    %v469 = vld [vmem:[#allocation8 + $0x350] sm:$0xff]
    %v470 = vld [vmem:[#allocation8 + $0x358] sm:$0xff]
    %v471 = vld [vmem:[#allocation8 + $0x360] sm:$0xff]
    %v472 = vld [vmem:[#allocation8 + $0x368] sm:$0xff]
    %v473 = vld [vmem:[#allocation8 + $0x370] sm:$0xff]
    %v474 = vld [vmem:[#allocation8 + $0x378] sm:$0xff]
    %v475 = vld [vmem:[#allocation8 + $0x380] sm:$0xff]
    %v476 = vld [vmem:[#allocation8 + $0x388] sm:$0xff]
    %v477 = vld [vmem:[#allocation8 + $0x390] sm:$0xff]
    %v478 = vld [vmem:[#allocation8 + $0x398] sm:$0xff]
    %v479 = vld [vmem:[#allocation8 + $0x3a0] sm:$0xff]
    %v480 = vld [vmem:[#allocation8 + $0x3a8] sm:$0xff]
    %v481 = vld [vmem:[#allocation8 + $0x3b0] sm:$0xff]
    %v482 = vld [vmem:[#allocation8 + $0x3b8] sm:$0xff]
    %v483 = vld [vmem:[#allocation8 + $0x3c0] sm:$0xff]
    %v484 = vld [vmem:[#allocation8 + $0x3c8] sm:$0xff]
    %v485 = vld [vmem:[#allocation8 + $0x3d0] sm:$0xff]
    %v486 = vld [vmem:[#allocation8 + $0x3d8] sm:$0xff]
    %v487 = vld [vmem:[#allocation8 + $0x3e0] sm:$0xff]
    %v488 = vld [vmem:[#allocation8 + $0x3e8] sm:$0xff]
    %v489 = vld [vmem:[#allocation8 + $0x3f0] sm:$0xff]
    %v490 = vld [vmem:[#allocation8 + $0x3f8] sm:$0xff]
    %v491 = vld [vmem:[#allocation8 + $0x400] sm:$0xff]
    %v492 = vld [vmem:[#allocation8 + $0x408] sm:$0xff]
    %v493 = vld [vmem:[#allocation8 + $0x410] sm:$0xff]
    %v494 = vld [vmem:[#allocation8 + $0x418] sm:$0xff]
    %v495 = vld [vmem:[#allocation8 + $0x420] sm:$0xff]
    %v496 = vld [vmem:[#allocation8 + $0x428] sm:$0xff]
    %v497 = vld [vmem:[#allocation8 + $0x430] sm:$0xff]
    %v498 = vld [vmem:[#allocation8 + $0x438] sm:$0xff]
    %v499 = vld [vmem:[#allocation8 + $0x440] sm:$0xff]
    %v500 = vld [vmem:[#allocation8 + $0x448] sm:$0xff]
    %v501 = vld [vmem:[#allocation8 + $0x450] sm:$0xff]
    %v502 = vld [vmem:[#allocation8 + $0x458] sm:$0xff]
    %v503 = vld [vmem:[#allocation8 + $0x460] sm:$0xff]
    %v504 = vld [vmem:[#allocation8 + $0x468] sm:$0xff]
    %v505 = vld [vmem:[#allocation8 + $0x470] sm:$0xff]
    %v506 = vld [vmem:[#allocation8 + $0x478] sm:$0xff]
    %v507 = vld [vmem:[#allocation8 + $0x480] sm:$0xff]
    %v508 = vld [vmem:[#allocation8 + $0x488] sm:$0xff]
    %v509 = vld [vmem:[#allocation8 + $0x490] sm:$0xff]
    %v510 = vld [vmem:[#allocation8 + $0x498] sm:$0xff]
    %v511 = vld [vmem:[#allocation8 + $0x4a0] sm:$0xff]
    %v512 = vld [vmem:[#allocation8 + $0x4a8] sm:$0xff]
    %v513 = vld [vmem:[#allocation8 + $0x4b0] sm:$0xff]
    %v514 = vld [vmem:[#allocation8 + $0x4b8] sm:$0xff]
    %v515 = vld [vmem:[#allocation8 + $0x4c0] sm:$0xff]
    %v516 = vld [vmem:[#allocation8 + $0x4c8] sm:$0xff]
    %v517 = vld [vmem:[#allocation8 + $0x4d0] sm:$0xff]
    %v518 = vld [vmem:[#allocation8 + $0x4d8] sm:$0xff]
    %v519 = vld [vmem:[#allocation8 + $0x4e0] sm:$0xff]
    %v520 = vld [vmem:[#allocation8 + $0x4e8] sm:$0xff]
    %v521 = vld [vmem:[#allocation8 + $0x4f0] sm:$0xff]
    %v522 = vld [vmem:[#allocation8 + $0x4f8] sm:$0xff]
    %v523 = vld [vmem:[#allocation8 + $0x500] sm:$0xff]
    %v524 = vld [vmem:[#allocation8 + $0x508] sm:$0xff]
    %v525 = vld [vmem:[#allocation8 + $0x510] sm:$0xff]
    %v526 = vld [vmem:[#allocation8 + $0x518] sm:$0xff]
    %v527 = vld [vmem:[#allocation8 + $0x520] sm:$0xff]
    %v528 = vld [vmem:[#allocation8 + $0x528] sm:$0xff]
    %v529 = vld [vmem:[#allocation8 + $0x530] sm:$0xff]
    %v530 = vld [vmem:[#allocation8 + $0x538] sm:$0xff]
    %v531 = vld [vmem:[#allocation8 + $0x540] sm:$0xff]
    %v532 = vld [vmem:[#allocation8 + $0x548] sm:$0xff]
    %v533 = vld [vmem:[#allocation8 + $0x550] sm:$0xff]
    %v534 = vld [vmem:[#allocation8 + $0x558] sm:$0xff]
    %v535 = vld [vmem:[#allocation8 + $0x560] sm:$0xff]
    %v536 = vld [vmem:[#allocation8 + $0x568] sm:$0xff]
    %v537 = vld [vmem:[#allocation8 + $0x570] sm:$0xff]
    %v538 = vld [vmem:[#allocation8 + $0x578] sm:$0xff]
    %v539 = vld [vmem:[#allocation8 + $0x580] sm:$0xff]
    %v540 = vld [vmem:[#allocation8 + $0x588] sm:$0xff]
    %v541 = vld [vmem:[#allocation8 + $0x590] sm:$0xff]
    %v542 = vld [vmem:[#allocation8 + $0x598] sm:$0xff]
    %v543 = vld [vmem:[#allocation8 + $0x5a0] sm:$0xff]
    %v544 = vld [vmem:[#allocation8 + $0x5a8] sm:$0xff]
    %v545 = vld [vmem:[#allocation8 + $0x5b0] sm:$0xff]
    %v546 = vld [vmem:[#allocation8 + $0x5b8] sm:$0xff]
    %v547 = vld [vmem:[#allocation8 + $0x5c0] sm:$0xff]
    %v548 = vld [vmem:[#allocation8 + $0x5c8] sm:$0xff]
    %v549 = vld [vmem:[#allocation8 + $0x5d0] sm:$0xff]
    %v550 = vld [vmem:[#allocation8 + $0x5d8] sm:$0xff]
    %v551 = vld [vmem:[#allocation8 + $0x5e0] sm:$0xff]
    %v552 = vld [vmem:[#allocation8 + $0x5e8] sm:$0xff]
    %v553 = vld [vmem:[#allocation8 + $0x5f0] sm:$0xff]
    %v554 = vld [vmem:[#allocation8 + $0x5f8] sm:$0xff]
    %v555 = vld [vmem:[#allocation8 + $0x600] sm:$0xff]
    %v556 = vld [vmem:[#allocation8 + $0x608] sm:$0xff]
    %v557 = vld [vmem:[#allocation8 + $0x610] sm:$0xff]
    %v558 = vld [vmem:[#allocation8 + $0x618] sm:$0xff]
    %v559 = vld [vmem:[#allocation8 + $0x620] sm:$0xff]
    %v560 = vld [vmem:[#allocation8 + $0x628] sm:$0xff]
    %v561 = vld [vmem:[#allocation8 + $0x630] sm:$0xff]
    %v562 = vld [vmem:[#allocation8 + $0x638] sm:$0xff]
    %v563 = vld [vmem:[#allocation8 + $0x640] sm:$0xff]
    %v564 = vld [vmem:[#allocation8 + $0x648] sm:$0xff]
    %v565 = vld [vmem:[#allocation8 + $0x650] sm:$0xff]
    %v566 = vld [vmem:[#allocation8 + $0x658] sm:$0xff]
    %v567 = vld [vmem:[#allocation8 + $0x660] sm:$0xff]
    %v568 = vld [vmem:[#allocation8 + $0x668] sm:$0xff]
    %v569 = vld [vmem:[#allocation8 + $0x670] sm:$0xff]
    %v570 = vld [vmem:[#allocation8 + $0x678] sm:$0xff]
    %v571 = vld [vmem:[#allocation8 + $0x680] sm:$0xff]
    %v572 = vld [vmem:[#allocation8 + $0x688] sm:$0xff]
    %v573 = vld [vmem:[#allocation8 + $0x690] sm:$0xff]
    %v574 = vld [vmem:[#allocation8 + $0x698] sm:$0xff]
    %v575 = vld [vmem:[#allocation8 + $0x6a0] sm:$0xff]
    %v576 = vld [vmem:[#allocation8 + $0x6a8] sm:$0xff]
    %v577 = vld [vmem:[#allocation8 + $0x6b0] sm:$0xff]
    %v578 = vld [vmem:[#allocation8 + $0x6b8] sm:$0xff]
    %v579 = vld [vmem:[#allocation8 + $0x6c0] sm:$0xff]
    %v580 = vld [vmem:[#allocation8 + $0x6c8] sm:$0xff]
    %v581 = vld [vmem:[#allocation8 + $0x6d0] sm:$0xff]
    %v582 = vld [vmem:[#allocation8 + $0x6d8] sm:$0xff]
    %v583 = vld [vmem:[#allocation8 + $0x6e0] sm:$0xff]
    %v584 = vld [vmem:[#allocation8 + $0x6e8] sm:$0xff]
    %v585 = vld [vmem:[#allocation8 + $0x6f0] sm:$0xff]
    %v586 = vld [vmem:[#allocation8 + $0x6f8] sm:$0xff]
    %v587 = vld [vmem:[#allocation8 + $0x700] sm:$0xff]
    %v588 = vld [vmem:[#allocation8 + $0x708] sm:$0xff]
    %v589 = vld [vmem:[#allocation8 + $0x710] sm:$0xff]
    %v590 = vld [vmem:[#allocation8 + $0x718] sm:$0xff]
    %v591 = vld [vmem:[#allocation8 + $0x720] sm:$0xff]
    %v592 = vld [vmem:[#allocation8 + $0x728] sm:$0xff]
    %v593 = vld [vmem:[#allocation8 + $0x730] sm:$0xff]
    %v594 = vld [vmem:[#allocation8 + $0x738] sm:$0xff]
    %v595 = vld [vmem:[#allocation8 + $0x740] sm:$0xff]
    %v596 = vld [vmem:[#allocation8 + $0x748] sm:$0xff]
    %v597 = vld [vmem:[#allocation8 + $0x750] sm:$0xff]
    %v598 = vld [vmem:[#allocation8 + $0x758] sm:$0xff]
    %v599 = vld [vmem:[#allocation8 + $0x760] sm:$0xff]
    %v600 = vld [vmem:[#allocation8 + $0x768] sm:$0xff]
    %v601 = vld [vmem:[#allocation8 + $0x770] sm:$0xff]
    %v602 = vld [vmem:[#allocation8 + $0x778] sm:$0xff]
    %v603 = vld [vmem:[#allocation8 + $0x780] sm:$0xff]
    %v604 = vld [vmem:[#allocation8 + $0x788] sm:$0xff]
    %v605 = vld [vmem:[#allocation8 + $0x790] sm:$0xff]
    %v606 = vld [vmem:[#allocation8 + $0x798] sm:$0xff]
    %v607 = vld [vmem:[#allocation8 + $0x7a0] sm:$0xff]
    %v608 = vld [vmem:[#allocation8 + $0x7a8] sm:$0xff]
    %v609 = vld [vmem:[#allocation8 + $0x7b0] sm:$0xff]
    %v610 = vld [vmem:[#allocation8 + $0x7b8] sm:$0xff]
    %v611 = vld [vmem:[#allocation8 + $0x7c0] sm:$0xff]
    %v612 = vld [vmem:[#allocation8 + $0x7c8] sm:$0xff]
    %v613 = vld [vmem:[#allocation8 + $0x7d0] sm:$0xff]
    %v614 = vld [vmem:[#allocation8 + $0x7d8] sm:$0xff]
    %v615 = vld [vmem:[#allocation8 + $0x7e0] sm:$0xff]
    %v616 = vld [vmem:[#allocation8 + $0x7e8] sm:$0xff]
    %v617 = vld [vmem:[#allocation8 + $0x7f0] sm:$0xff]
    %v618 = vld [vmem:[#allocation8 + $0x7f8] sm:$0xff]
    %v623 = vunpack.c.l.b16 %v359
    %v624 = vunpack.c.h.b16 %v359
    %v625 = vunpack.c.l.b16 %v360
    %v626 = vunpack.c.h.b16 %v360
    %v627 = vunpack.c.l.b16 %v361
    %v628 = vunpack.c.h.b16 %v361
    %v629 = vunpack.c.l.b16 %v362
    %v630 = vunpack.c.h.b16 %v362
    %v631 = vpack.c.b16 %v623, %v623
    %v632 = vpack.c.b16 %v624, %v624
    %v633 = vpack.c.b16 %v625, %v625
    %v634 = vpack.c.b16 %v626, %v626
    %v635 = vpack.c.b16 %v627, %v627
    %v636 = vpack.c.b16 %v628, %v628
    %v637 = vpack.c.b16 %v629, %v629
    %v638 = vpack.c.b16 %v630, %v630
    %v903 = vunpack.c.l.b16 %v363
    %v904 = vunpack.c.h.b16 %v363
    %v905 = vunpack.c.l.b16 %v364
    %v906 = vunpack.c.h.b16 %v364
    %v907 = vunpack.c.l.b16 %v365
    %v908 = vunpack.c.h.b16 %v365
    %v909 = vunpack.c.l.b16 %v366
    %v910 = vunpack.c.h.b16 %v366
    %v911 = vunpack.c.l.b16 %v367
    %v912 = vunpack.c.h.b16 %v367
    %v913 = vunpack.c.l.b16 %v368
    %v914 = vunpack.c.h.b16 %v368
    %v915 = vunpack.c.l.b16 %v369
    %v916 = vunpack.c.h.b16 %v369
    %v917 = vunpack.c.l.b16 %v370
    %v918 = vunpack.c.h.b16 %v370
    %v919 = vunpack.c.l.b16 %v371
    %v920 = vunpack.c.h.b16 %v371
    %v921 = vunpack.c.l.b16 %v372
    %v922 = vunpack.c.h.b16 %v372
    %v923 = vunpack.c.l.b16 %v373
    %v924 = vunpack.c.h.b16 %v373
    %v925 = vunpack.c.l.b16 %v374
    %v926 = vunpack.c.h.b16 %v374
    %v927 = vunpack.c.l.b16 %v375
    %v928 = vunpack.c.h.b16 %v375
    %v929 = vunpack.c.l.b16 %v376
    %v930 = vunpack.c.h.b16 %v376
    %v931 = vunpack.c.l.b16 %v377
    %v932 = vunpack.c.h.b16 %v377
    %v933 = vunpack.c.l.b16 %v378
    %v934 = vunpack.c.h.b16 %v378
    %v935 = vunpack.c.l.b16 %v379
    %v936 = vunpack.c.h.b16 %v379
    %v937 = vunpack.c.l.b16 %v380
    %v938 = vunpack.c.h.b16 %v380
    %v939 = vunpack.c.l.b16 %v381
    %v940 = vunpack.c.h.b16 %v381
    %v941 = vunpack.c.l.b16 %v382
    %v942 = vunpack.c.h.b16 %v382
    %v943 = vunpack.c.l.b16 %v383
    %v944 = vunpack.c.h.b16 %v383
    %v945 = vunpack.c.l.b16 %v384
    %v946 = vunpack.c.h.b16 %v384
    %v947 = vunpack.c.l.b16 %v385
    %v948 = vunpack.c.h.b16 %v385
    %v949 = vunpack.c.l.b16 %v386
    %v950 = vunpack.c.h.b16 %v386
    %v951 = vunpack.c.l.b16 %v387
    %v952 = vunpack.c.h.b16 %v387
    %v953 = vunpack.c.l.b16 %v388
    %v954 = vunpack.c.h.b16 %v388
    %v955 = vunpack.c.l.b16 %v389
    %v956 = vunpack.c.h.b16 %v389
    %v957 = vunpack.c.l.b16 %v390
    %v958 = vunpack.c.h.b16 %v390
    %v959 = vunpack.c.l.b16 %v391
    %v960 = vunpack.c.h.b16 %v391
    %v961 = vunpack.c.l.b16 %v392
    %v962 = vunpack.c.h.b16 %v392
    %v963 = vunpack.c.l.b16 %v393
    %v964 = vunpack.c.h.b16 %v393
    %v965 = vunpack.c.l.b16 %v394
    %v966 = vunpack.c.h.b16 %v394
    %v967 = vunpack.c.l.b16 %v395
    %v968 = vunpack.c.h.b16 %v395
    %v969 = vunpack.c.l.b16 %v396
    %v970 = vunpack.c.h.b16 %v396
    %v971 = vunpack.c.l.b16 %v397
    %v972 = vunpack.c.h.b16 %v397
    %v973 = vunpack.c.l.b16 %v398
    %v974 = vunpack.c.h.b16 %v398
    %v975 = vunpack.c.l.b16 %v399
    %v976 = vunpack.c.h.b16 %v399
    %v977 = vunpack.c.l.b16 %v400
    %v978 = vunpack.c.h.b16 %v400
    %v979 = vunpack.c.l.b16 %v401
    %v980 = vunpack.c.h.b16 %v401
    %v981 = vunpack.c.l.b16 %v402
    %v982 = vunpack.c.h.b16 %v402
    %v983 = vunpack.c.l.b16 %v403
    %v984 = vunpack.c.h.b16 %v403
    %v985 = vunpack.c.l.b16 %v404
    %v986 = vunpack.c.h.b16 %v404
    %v987 = vunpack.c.l.b16 %v405
    %v988 = vunpack.c.h.b16 %v405
    %v989 = vunpack.c.l.b16 %v406
    %v990 = vunpack.c.h.b16 %v406
    %v991 = vunpack.c.l.b16 %v407
    %v992 = vunpack.c.h.b16 %v407
    %v993 = vunpack.c.l.b16 %v408
    %v994 = vunpack.c.h.b16 %v408
    %v995 = vunpack.c.l.b16 %v409
    %v996 = vunpack.c.h.b16 %v409
    %v997 = vunpack.c.l.b16 %v410
    %v998 = vunpack.c.h.b16 %v410
    %v999 = vunpack.c.l.b16 %v411
    %v1000 = vunpack.c.h.b16 %v411
    %v1001 = vunpack.c.l.b16 %v412
    %v1002 = vunpack.c.h.b16 %v412
    %v1003 = vunpack.c.l.b16 %v413
    %v1004 = vunpack.c.h.b16 %v413
    %v1005 = vunpack.c.l.b16 %v414
    %v1006 = vunpack.c.h.b16 %v414
    %v1007 = vunpack.c.l.b16 %v415
    %v1008 = vunpack.c.h.b16 %v415
    %v1009 = vunpack.c.l.b16 %v416
    %v1010 = vunpack.c.h.b16 %v416
    %v1011 = vunpack.c.l.b16 %v417
    %v1012 = vunpack.c.h.b16 %v417
    %v1013 = vunpack.c.l.b16 %v418
    %v1014 = vunpack.c.h.b16 %v418
    %v1015 = vunpack.c.l.b16 %v419
    %v1016 = vunpack.c.h.b16 %v419
    %v1017 = vunpack.c.l.b16 %v420
    %v1018 = vunpack.c.h.b16 %v420
    %v1019 = vunpack.c.l.b16 %v421
    %v1020 = vunpack.c.h.b16 %v421
    %v1021 = vunpack.c.l.b16 %v422
    %v1022 = vunpack.c.h.b16 %v422
    %v1023 = vunpack.c.l.b16 %v423
    %v1024 = vunpack.c.h.b16 %v423
    %v1025 = vunpack.c.l.b16 %v424
    %v1026 = vunpack.c.h.b16 %v424
    %v1027 = vunpack.c.l.b16 %v425
    %v1028 = vunpack.c.h.b16 %v425
    %v1029 = vunpack.c.l.b16 %v426
    %v1030 = vunpack.c.h.b16 %v426
    %v1031 = vunpack.c.l.b16 %v427
    %v1032 = vunpack.c.h.b16 %v427
    %v1033 = vunpack.c.l.b16 %v428
    %v1034 = vunpack.c.h.b16 %v428
    %v1035 = vunpack.c.l.b16 %v429
    %v1036 = vunpack.c.h.b16 %v429
    %v1037 = vunpack.c.l.b16 %v430
    %v1038 = vunpack.c.h.b16 %v430
    %v1039 = vunpack.c.l.b16 %v431
    %v1040 = vunpack.c.h.b16 %v431
    %v1041 = vunpack.c.l.b16 %v432
    %v1042 = vunpack.c.h.b16 %v432
    %v1043 = vunpack.c.l.b16 %v433
    %v1044 = vunpack.c.h.b16 %v433
    %v1045 = vunpack.c.l.b16 %v434
    %v1046 = vunpack.c.h.b16 %v434
    %v1047 = vunpack.c.l.b16 %v435
    %v1048 = vunpack.c.h.b16 %v435
    %v1049 = vunpack.c.l.b16 %v436
    %v1050 = vunpack.c.h.b16 %v436
    %v1051 = vunpack.c.l.b16 %v437
    %v1052 = vunpack.c.h.b16 %v437
    %v1053 = vunpack.c.l.b16 %v438
    %v1054 = vunpack.c.h.b16 %v438
    %v1055 = vunpack.c.l.b16 %v439
    %v1056 = vunpack.c.h.b16 %v439
    %v1057 = vunpack.c.l.b16 %v440
    %v1058 = vunpack.c.h.b16 %v440
    %v1059 = vunpack.c.l.b16 %v441
    %v1060 = vunpack.c.h.b16 %v441
    %v1061 = vunpack.c.l.b16 %v442
    %v1062 = vunpack.c.h.b16 %v442
    %v1063 = vunpack.c.l.b16 %v443
    %v1064 = vunpack.c.h.b16 %v443
    %v1065 = vunpack.c.l.b16 %v444
    %v1066 = vunpack.c.h.b16 %v444
    %v1067 = vunpack.c.l.b16 %v445
    %v1068 = vunpack.c.h.b16 %v445
    %v1069 = vunpack.c.l.b16 %v446
    %v1070 = vunpack.c.h.b16 %v446
    %v1071 = vunpack.c.l.b16 %v447
    %v1072 = vunpack.c.h.b16 %v447
    %v1073 = vunpack.c.l.b16 %v448
    %v1074 = vunpack.c.h.b16 %v448
    %v1075 = vunpack.c.l.b16 %v449
    %v1076 = vunpack.c.h.b16 %v449
    %v1077 = vunpack.c.l.b16 %v450
    %v1078 = vunpack.c.h.b16 %v450
    %v1079 = vunpack.c.l.b16 %v451
    %v1080 = vunpack.c.h.b16 %v451
    %v1081 = vunpack.c.l.b16 %v452
    %v1082 = vunpack.c.h.b16 %v452
    %v1083 = vunpack.c.l.b16 %v453
    %v1084 = vunpack.c.h.b16 %v453
    %v1085 = vunpack.c.l.b16 %v454
    %v1086 = vunpack.c.h.b16 %v454
    %v1087 = vunpack.c.l.b16 %v455
    %v1088 = vunpack.c.h.b16 %v455
    %v1089 = vunpack.c.l.b16 %v456
    %v1090 = vunpack.c.h.b16 %v456
    %v1091 = vunpack.c.l.b16 %v457
    %v1092 = vunpack.c.h.b16 %v457
    %v1093 = vunpack.c.l.b16 %v458
    %v1094 = vunpack.c.h.b16 %v458
    %v1095 = vunpack.c.l.b16 %v459
    %v1096 = vunpack.c.h.b16 %v459
    %v1097 = vunpack.c.l.b16 %v460
    %v1098 = vunpack.c.h.b16 %v460
    %v1099 = vunpack.c.l.b16 %v461
    %v1100 = vunpack.c.h.b16 %v461
    %v1101 = vunpack.c.l.b16 %v462
    %v1102 = vunpack.c.h.b16 %v462
    %v1103 = vunpack.c.l.b16 %v463
    %v1104 = vunpack.c.h.b16 %v463
    %v1105 = vunpack.c.l.b16 %v464
    %v1106 = vunpack.c.h.b16 %v464
    %v1107 = vunpack.c.l.b16 %v465
    %v1108 = vunpack.c.h.b16 %v465
    %v1109 = vunpack.c.l.b16 %v466
    %v1110 = vunpack.c.h.b16 %v466
    %v1111 = vunpack.c.l.b16 %v467
    %v1112 = vunpack.c.h.b16 %v467
    %v1113 = vunpack.c.l.b16 %v468
    %v1114 = vunpack.c.h.b16 %v468
    %v1115 = vunpack.c.l.b16 %v469
    %v1116 = vunpack.c.h.b16 %v469
    %v1117 = vunpack.c.l.b16 %v470
    %v1118 = vunpack.c.h.b16 %v470
    %v1119 = vunpack.c.l.b16 %v471
    %v1120 = vunpack.c.h.b16 %v471
    %v1121 = vunpack.c.l.b16 %v472
    %v1122 = vunpack.c.h.b16 %v472
    %v1123 = vunpack.c.l.b16 %v473
    %v1124 = vunpack.c.h.b16 %v473
    %v1125 = vunpack.c.l.b16 %v474
    %v1126 = vunpack.c.h.b16 %v474
    %v1127 = vunpack.c.l.b16 %v475
    %v1128 = vunpack.c.h.b16 %v475
    %v1129 = vunpack.c.l.b16 %v476
    %v1130 = vunpack.c.h.b16 %v476
    %v1131 = vunpack.c.l.b16 %v477
    %v1132 = vunpack.c.h.b16 %v477
    %v1133 = vunpack.c.l.b16 %v478
    %v1134 = vunpack.c.h.b16 %v478
    %v1135 = vunpack.c.l.b16 %v479
    %v1136 = vunpack.c.h.b16 %v479
    %v1137 = vunpack.c.l.b16 %v480
    %v1138 = vunpack.c.h.b16 %v480
    %v1139 = vunpack.c.l.b16 %v481
    %v1140 = vunpack.c.h.b16 %v481
    %v1141 = vunpack.c.l.b16 %v482
    %v1142 = vunpack.c.h.b16 %v482
    %v1143 = vunpack.c.l.b16 %v483
    %v1144 = vunpack.c.h.b16 %v483
    %v1145 = vunpack.c.l.b16 %v484
    %v1146 = vunpack.c.h.b16 %v484
    %v1147 = vunpack.c.l.b16 %v485
    %v1148 = vunpack.c.h.b16 %v485
    %v1149 = vunpack.c.l.b16 %v486
    %v1150 = vunpack.c.h.b16 %v486
    %v1151 = vunpack.c.l.b16 %v487
    %v1152 = vunpack.c.h.b16 %v487
    %v1153 = vunpack.c.l.b16 %v488
    %v1154 = vunpack.c.h.b16 %v488
    %v1155 = vunpack.c.l.b16 %v489
    %v1156 = vunpack.c.h.b16 %v489
    %v1157 = vunpack.c.l.b16 %v490
    %v1158 = vunpack.c.h.b16 %v490
    %v1159 = vunpack.c.l.b16 %v491
    %v1160 = vunpack.c.h.b16 %v491
    %v1161 = vunpack.c.l.b16 %v492
    %v1162 = vunpack.c.h.b16 %v492
    %v1163 = vunpack.c.l.b16 %v493
    %v1164 = vunpack.c.h.b16 %v493
    %v1165 = vunpack.c.l.b16 %v494
    %v1166 = vunpack.c.h.b16 %v494
    %v1167 = vunpack.c.l.b16 %v495
    %v1168 = vunpack.c.h.b16 %v495
    %v1169 = vunpack.c.l.b16 %v496
    %v1170 = vunpack.c.h.b16 %v496
    %v1171 = vunpack.c.l.b16 %v497
    %v1172 = vunpack.c.h.b16 %v497
    %v1173 = vunpack.c.l.b16 %v498
    %v1174 = vunpack.c.h.b16 %v498
    %v1175 = vunpack.c.l.b16 %v499
    %v1176 = vunpack.c.h.b16 %v499
    %v1177 = vunpack.c.l.b16 %v500
    %v1178 = vunpack.c.h.b16 %v500
    %v1179 = vunpack.c.l.b16 %v501
    %v1180 = vunpack.c.h.b16 %v501
    %v1181 = vunpack.c.l.b16 %v502
    %v1182 = vunpack.c.h.b16 %v502
    %v1183 = vunpack.c.l.b16 %v503
    %v1184 = vunpack.c.h.b16 %v503
    %v1185 = vunpack.c.l.b16 %v504
    %v1186 = vunpack.c.h.b16 %v504
    %v1187 = vunpack.c.l.b16 %v505
    %v1188 = vunpack.c.h.b16 %v505
    %v1189 = vunpack.c.l.b16 %v506
    %v1190 = vunpack.c.h.b16 %v506
    %v1191 = vunpack.c.l.b16 %v507
    %v1192 = vunpack.c.h.b16 %v507
    %v1193 = vunpack.c.l.b16 %v508
    %v1194 = vunpack.c.h.b16 %v508
    %v1195 = vunpack.c.l.b16 %v509
    %v1196 = vunpack.c.h.b16 %v509
    %v1197 = vunpack.c.l.b16 %v510
    %v1198 = vunpack.c.h.b16 %v510
    %v1199 = vunpack.c.l.b16 %v511
    %v1200 = vunpack.c.h.b16 %v511
    %v1201 = vunpack.c.l.b16 %v512
    %v1202 = vunpack.c.h.b16 %v512
    %v1203 = vunpack.c.l.b16 %v513
    %v1204 = vunpack.c.h.b16 %v513
    %v1205 = vunpack.c.l.b16 %v514
    %v1206 = vunpack.c.h.b16 %v514
    %v1207 = vunpack.c.l.b16 %v515
    %v1208 = vunpack.c.h.b16 %v515
    %v1209 = vunpack.c.l.b16 %v516
    %v1210 = vunpack.c.h.b16 %v516
    %v1211 = vunpack.c.l.b16 %v517
    %v1212 = vunpack.c.h.b16 %v517
    %v1213 = vunpack.c.l.b16 %v518
    %v1214 = vunpack.c.h.b16 %v518
    %v1215 = vunpack.c.l.b16 %v519
    %v1216 = vunpack.c.h.b16 %v519
    %v1217 = vunpack.c.l.b16 %v520
    %v1218 = vunpack.c.h.b16 %v520
    %v1219 = vunpack.c.l.b16 %v521
    %v1220 = vunpack.c.h.b16 %v521
    %v1221 = vunpack.c.l.b16 %v522
    %v1222 = vunpack.c.h.b16 %v522
    %v1223 = vunpack.c.l.b16 %v523
    %v1224 = vunpack.c.h.b16 %v523
    %v1225 = vunpack.c.l.b16 %v524
    %v1226 = vunpack.c.h.b16 %v524
    %v1227 = vunpack.c.l.b16 %v525
    %v1228 = vunpack.c.h.b16 %v525
    %v1229 = vunpack.c.l.b16 %v526
    %v1230 = vunpack.c.h.b16 %v526
    %v1231 = vunpack.c.l.b16 %v527
    %v1232 = vunpack.c.h.b16 %v527
    %v1233 = vunpack.c.l.b16 %v528
    %v1234 = vunpack.c.h.b16 %v528
    %v1235 = vunpack.c.l.b16 %v529
    %v1236 = vunpack.c.h.b16 %v529
    %v1237 = vunpack.c.l.b16 %v530
    %v1238 = vunpack.c.h.b16 %v530
    %v1239 = vunpack.c.l.b16 %v531
    %v1240 = vunpack.c.h.b16 %v531
    %v1241 = vunpack.c.l.b16 %v532
    %v1242 = vunpack.c.h.b16 %v532
    %v1243 = vunpack.c.l.b16 %v533
    %v1244 = vunpack.c.h.b16 %v533
    %v1245 = vunpack.c.l.b16 %v534
    %v1246 = vunpack.c.h.b16 %v534
    %v1247 = vunpack.c.l.b16 %v535
    %v1248 = vunpack.c.h.b16 %v535
    %v1249 = vunpack.c.l.b16 %v536
    %v1250 = vunpack.c.h.b16 %v536
    %v1251 = vunpack.c.l.b16 %v537
    %v1252 = vunpack.c.h.b16 %v537
    %v1253 = vunpack.c.l.b16 %v538
    %v1254 = vunpack.c.h.b16 %v538
    %v1255 = vunpack.c.l.b16 %v539
    %v1256 = vunpack.c.h.b16 %v539
    %v1257 = vunpack.c.l.b16 %v540
    %v1258 = vunpack.c.h.b16 %v540
    %v1259 = vunpack.c.l.b16 %v541
    %v1260 = vunpack.c.h.b16 %v541
    %v1261 = vunpack.c.l.b16 %v542
    %v1262 = vunpack.c.h.b16 %v542
    %v1263 = vunpack.c.l.b16 %v543
    %v1264 = vunpack.c.h.b16 %v543
    %v1265 = vunpack.c.l.b16 %v544
    %v1266 = vunpack.c.h.b16 %v544
    %v1267 = vunpack.c.l.b16 %v545
    %v1268 = vunpack.c.h.b16 %v545
    %v1269 = vunpack.c.l.b16 %v546
    %v1270 = vunpack.c.h.b16 %v546
    %v1271 = vunpack.c.l.b16 %v547
    %v1272 = vunpack.c.h.b16 %v547
    %v1273 = vunpack.c.l.b16 %v548
    %v1274 = vunpack.c.h.b16 %v548
    %v1275 = vunpack.c.l.b16 %v549
    %v1276 = vunpack.c.h.b16 %v549
    %v1277 = vunpack.c.l.b16 %v550
    %v1278 = vunpack.c.h.b16 %v550
    %v1279 = vunpack.c.l.b16 %v551
    %v1280 = vunpack.c.h.b16 %v551
    %v1281 = vunpack.c.l.b16 %v552
    %v1282 = vunpack.c.h.b16 %v552
    %v1283 = vunpack.c.l.b16 %v553
    %v1284 = vunpack.c.h.b16 %v553
    %v1285 = vunpack.c.l.b16 %v554
    %v1286 = vunpack.c.h.b16 %v554
    %v1287 = vunpack.c.l.b16 %v555
    %v1288 = vunpack.c.h.b16 %v555
    %v1289 = vunpack.c.l.b16 %v556
    %v1290 = vunpack.c.h.b16 %v556
    %v1291 = vunpack.c.l.b16 %v557
    %v1292 = vunpack.c.h.b16 %v557
    %v1293 = vunpack.c.l.b16 %v558
    %v1294 = vunpack.c.h.b16 %v558
    %v1295 = vunpack.c.l.b16 %v559
    %v1296 = vunpack.c.h.b16 %v559
    %v1297 = vunpack.c.l.b16 %v560
    %v1298 = vunpack.c.h.b16 %v560
    %v1299 = vunpack.c.l.b16 %v561
    %v1300 = vunpack.c.h.b16 %v561
    %v1301 = vunpack.c.l.b16 %v562
    %v1302 = vunpack.c.h.b16 %v562
    %v1303 = vunpack.c.l.b16 %v563
    %v1304 = vunpack.c.h.b16 %v563
    %v1305 = vunpack.c.l.b16 %v564
    %v1306 = vunpack.c.h.b16 %v564
    %v1307 = vunpack.c.l.b16 %v565
    %v1308 = vunpack.c.h.b16 %v565
    %v1309 = vunpack.c.l.b16 %v566
    %v1310 = vunpack.c.h.b16 %v566
    %v1311 = vunpack.c.l.b16 %v567
    %v1312 = vunpack.c.h.b16 %v567
    %v1313 = vunpack.c.l.b16 %v568
    %v1314 = vunpack.c.h.b16 %v568
    %v1315 = vunpack.c.l.b16 %v569
    %v1316 = vunpack.c.h.b16 %v569
    %v1317 = vunpack.c.l.b16 %v570
    %v1318 = vunpack.c.h.b16 %v570
    %v1319 = vunpack.c.l.b16 %v571
    %v1320 = vunpack.c.h.b16 %v571
    %v1321 = vunpack.c.l.b16 %v572
    %v1322 = vunpack.c.h.b16 %v572
    %v1323 = vunpack.c.l.b16 %v573
    %v1324 = vunpack.c.h.b16 %v573
    %v1325 = vunpack.c.l.b16 %v574
    %v1326 = vunpack.c.h.b16 %v574
    %v1327 = vunpack.c.l.b16 %v575
    %v1328 = vunpack.c.h.b16 %v575
    %v1329 = vunpack.c.l.b16 %v576
    %v1330 = vunpack.c.h.b16 %v576
    %v1331 = vunpack.c.l.b16 %v577
    %v1332 = vunpack.c.h.b16 %v577
    %v1333 = vunpack.c.l.b16 %v578
    %v1334 = vunpack.c.h.b16 %v578
    %v1335 = vunpack.c.l.b16 %v579
    %v1336 = vunpack.c.h.b16 %v579
    %v1337 = vunpack.c.l.b16 %v580
    %v1338 = vunpack.c.h.b16 %v580
    %v1339 = vunpack.c.l.b16 %v581
    %v1340 = vunpack.c.h.b16 %v581
    %v1341 = vunpack.c.l.b16 %v582
    %v1342 = vunpack.c.h.b16 %v582
    %v1343 = vunpack.c.l.b16 %v583
    %v1344 = vunpack.c.h.b16 %v583
    %v1345 = vunpack.c.l.b16 %v584
    %v1346 = vunpack.c.h.b16 %v584
    %v1347 = vunpack.c.l.b16 %v585
    %v1348 = vunpack.c.h.b16 %v585
    %v1349 = vunpack.c.l.b16 %v586
    %v1350 = vunpack.c.h.b16 %v586
    %v1351 = vunpack.c.l.b16 %v587
    %v1352 = vunpack.c.h.b16 %v587
    %v1353 = vunpack.c.l.b16 %v588
    %v1354 = vunpack.c.h.b16 %v588
    %v1355 = vunpack.c.l.b16 %v589
    %v1356 = vunpack.c.h.b16 %v589
    %v1357 = vunpack.c.l.b16 %v590
    %v1358 = vunpack.c.h.b16 %v590
    %v1359 = vunpack.c.l.b16 %v591
    %v1360 = vunpack.c.h.b16 %v591
    %v1361 = vunpack.c.l.b16 %v592
    %v1362 = vunpack.c.h.b16 %v592
    %v1363 = vunpack.c.l.b16 %v593
    %v1364 = vunpack.c.h.b16 %v593
    %v1365 = vunpack.c.l.b16 %v594
    %v1366 = vunpack.c.h.b16 %v594
    %v1367 = vunpack.c.l.b16 %v595
    %v1368 = vunpack.c.h.b16 %v595
    %v1369 = vunpack.c.l.b16 %v596
    %v1370 = vunpack.c.h.b16 %v596
    %v1371 = vunpack.c.l.b16 %v597
    %v1372 = vunpack.c.h.b16 %v597
    %v1373 = vunpack.c.l.b16 %v598
    %v1374 = vunpack.c.h.b16 %v598
    %v1375 = vunpack.c.l.b16 %v599
    %v1376 = vunpack.c.h.b16 %v599
    %v1377 = vunpack.c.l.b16 %v600
    %v1378 = vunpack.c.h.b16 %v600
    %v1379 = vunpack.c.l.b16 %v601
    %v1380 = vunpack.c.h.b16 %v601
    %v1381 = vunpack.c.l.b16 %v602
    %v1382 = vunpack.c.h.b16 %v602
    %v1383 = vunpack.c.l.b16 %v603
    %v1384 = vunpack.c.h.b16 %v603
    %v1385 = vunpack.c.l.b16 %v604
    %v1386 = vunpack.c.h.b16 %v604
    %v1387 = vunpack.c.l.b16 %v605
    %v1388 = vunpack.c.h.b16 %v605
    %v1389 = vunpack.c.l.b16 %v606
    %v1390 = vunpack.c.h.b16 %v606
    %v1391 = vunpack.c.l.b16 %v607
    %v1392 = vunpack.c.h.b16 %v607
    %v1393 = vunpack.c.l.b16 %v608
    %v1394 = vunpack.c.h.b16 %v608
    %v1395 = vunpack.c.l.b16 %v609
    %v1396 = vunpack.c.h.b16 %v609
    %v1397 = vunpack.c.l.b16 %v610
    %v1398 = vunpack.c.h.b16 %v610
    %v1399 = vunpack.c.l.b16 %v611
    %v1400 = vunpack.c.h.b16 %v611
    %v1401 = vunpack.c.l.b16 %v612
    %v1402 = vunpack.c.h.b16 %v612
    %v1403 = vunpack.c.l.b16 %v613
    %v1404 = vunpack.c.h.b16 %v613
    %v1405 = vunpack.c.l.b16 %v614
    %v1406 = vunpack.c.h.b16 %v614
    %v1407 = vunpack.c.l.b16 %v615
    %v1408 = vunpack.c.h.b16 %v615
    %v1409 = vunpack.c.l.b16 %v616
    %v1410 = vunpack.c.h.b16 %v616
    %v1411 = vunpack.c.l.b16 %v617
    %v1412 = vunpack.c.h.b16 %v617
    %v1413 = vunpack.c.l.b16 %v618
    %v1414 = vunpack.c.h.b16 %v618
    %v1415 = vpack.c.b16 %v907, %v903
    %v1416 = vpack.c.b16 %v908, %v904
    %v1417 = vpack.c.b16 %v909, %v905
    %v1418 = vpack.c.b16 %v910, %v906
    %v1419 = vpack.c.b16 %v915, %v911
    %v1420 = vpack.c.b16 %v916, %v912
    %v1421 = vpack.c.b16 %v917, %v913
    %v1422 = vpack.c.b16 %v918, %v914
    %v1423 = vpack.c.b16 %v923, %v919
    %v1424 = vpack.c.b16 %v924, %v920
    %v1425 = vpack.c.b16 %v925, %v921
    %v1426 = vpack.c.b16 %v926, %v922
    %v1427 = vpack.c.b16 %v931, %v927
    %v1428 = vpack.c.b16 %v932, %v928
    %v1429 = vpack.c.b16 %v933, %v929
    %v1430 = vpack.c.b16 %v934, %v930
    %v1431 = vpack.c.b16 %v939, %v935
    %v1432 = vpack.c.b16 %v940, %v936
    %v1433 = vpack.c.b16 %v941, %v937
    %v1434 = vpack.c.b16 %v942, %v938
    %v1435 = vpack.c.b16 %v947, %v943
    %v1436 = vpack.c.b16 %v948, %v944
    %v1437 = vpack.c.b16 %v949, %v945
    %v1438 = vpack.c.b16 %v950, %v946
    %v1439 = vpack.c.b16 %v955, %v951
    %v1440 = vpack.c.b16 %v956, %v952
    %v1441 = vpack.c.b16 %v957, %v953
    %v1442 = vpack.c.b16 %v958, %v954
    %v1443 = vpack.c.b16 %v963, %v959
    %v1444 = vpack.c.b16 %v964, %v960
    %v1445 = vpack.c.b16 %v965, %v961
    %v1446 = vpack.c.b16 %v966, %v962
    %v1447 = vpack.c.b16 %v971, %v967
    %v1448 = vpack.c.b16 %v972, %v968
    %v1449 = vpack.c.b16 %v973, %v969
    %v1450 = vpack.c.b16 %v974, %v970
    %v1451 = vpack.c.b16 %v979, %v975
    %v1452 = vpack.c.b16 %v980, %v976
    %v1453 = vpack.c.b16 %v981, %v977
    %v1454 = vpack.c.b16 %v982, %v978
    %v1455 = vpack.c.b16 %v987, %v983
    %v1456 = vpack.c.b16 %v988, %v984
    %v1457 = vpack.c.b16 %v989, %v985
    %v1458 = vpack.c.b16 %v990, %v986
    %v1459 = vpack.c.b16 %v995, %v991
    %v1460 = vpack.c.b16 %v996, %v992
    %v1461 = vpack.c.b16 %v997, %v993
    %v1462 = vpack.c.b16 %v998, %v994
    %v1463 = vpack.c.b16 %v1003, %v999
    %v1464 = vpack.c.b16 %v1004, %v1000
    %v1465 = vpack.c.b16 %v1005, %v1001
    %v1466 = vpack.c.b16 %v1006, %v1002
    %v1467 = vpack.c.b16 %v1011, %v1007
    %v1468 = vpack.c.b16 %v1012, %v1008
    %v1469 = vpack.c.b16 %v1013, %v1009
    %v1470 = vpack.c.b16 %v1014, %v1010
    %v1471 = vpack.c.b16 %v1019, %v1015
    %v1472 = vpack.c.b16 %v1020, %v1016
    %v1473 = vpack.c.b16 %v1021, %v1017
    %v1474 = vpack.c.b16 %v1022, %v1018
    %v1475 = vpack.c.b16 %v1027, %v1023
    %v1476 = vpack.c.b16 %v1028, %v1024
    %v1477 = vpack.c.b16 %v1029, %v1025
    %v1478 = vpack.c.b16 %v1030, %v1026
    %v1479 = vpack.c.b16 %v1035, %v1031
    %v1480 = vpack.c.b16 %v1036, %v1032
    %v1481 = vpack.c.b16 %v1037, %v1033
    %v1482 = vpack.c.b16 %v1038, %v1034
    %v1483 = vpack.c.b16 %v1043, %v1039
    %v1484 = vpack.c.b16 %v1044, %v1040
    %v1485 = vpack.c.b16 %v1045, %v1041
    %v1486 = vpack.c.b16 %v1046, %v1042
    %v1487 = vpack.c.b16 %v1051, %v1047
    %v1488 = vpack.c.b16 %v1052, %v1048
    %v1489 = vpack.c.b16 %v1053, %v1049
    %v1490 = vpack.c.b16 %v1054, %v1050
    %v1491 = vpack.c.b16 %v1059, %v1055
    %v1492 = vpack.c.b16 %v1060, %v1056
    %v1493 = vpack.c.b16 %v1061, %v1057
    %v1494 = vpack.c.b16 %v1062, %v1058
    %v1495 = vpack.c.b16 %v1067, %v1063
    %v1496 = vpack.c.b16 %v1068, %v1064
    %v1497 = vpack.c.b16 %v1069, %v1065
    %v1498 = vpack.c.b16 %v1070, %v1066
    %v1499 = vpack.c.b16 %v1075, %v1071
    %v1500 = vpack.c.b16 %v1076, %v1072
    %v1501 = vpack.c.b16 %v1077, %v1073
    %v1502 = vpack.c.b16 %v1078, %v1074
    %v1503 = vpack.c.b16 %v1083, %v1079
    %v1504 = vpack.c.b16 %v1084, %v1080
    %v1505 = vpack.c.b16 %v1085, %v1081
    %v1506 = vpack.c.b16 %v1086, %v1082
    %v1507 = vpack.c.b16 %v1091, %v1087
    %v1508 = vpack.c.b16 %v1092, %v1088
    %v1509 = vpack.c.b16 %v1093, %v1089
    %v1510 = vpack.c.b16 %v1094, %v1090
    %v1511 = vpack.c.b16 %v1099, %v1095
    %v1512 = vpack.c.b16 %v1100, %v1096
    %v1513 = vpack.c.b16 %v1101, %v1097
    %v1514 = vpack.c.b16 %v1102, %v1098
    %v1515 = vpack.c.b16 %v1107, %v1103
    %v1516 = vpack.c.b16 %v1108, %v1104
    %v1517 = vpack.c.b16 %v1109, %v1105
    %v1518 = vpack.c.b16 %v1110, %v1106
    %v1519 = vpack.c.b16 %v1115, %v1111
    %v1520 = vpack.c.b16 %v1116, %v1112
    %v1521 = vpack.c.b16 %v1117, %v1113
    %v1522 = vpack.c.b16 %v1118, %v1114
    %v1523 = vpack.c.b16 %v1123, %v1119
    %v1524 = vpack.c.b16 %v1124, %v1120
    %v1525 = vpack.c.b16 %v1125, %v1121
    %v1526 = vpack.c.b16 %v1126, %v1122
    %v1527 = vpack.c.b16 %v1131, %v1127
    %v1528 = vpack.c.b16 %v1132, %v1128
    %v1529 = vpack.c.b16 %v1133, %v1129
    %v1530 = vpack.c.b16 %v1134, %v1130
    %v1531 = vpack.c.b16 %v1139, %v1135
    %v1532 = vpack.c.b16 %v1140, %v1136
    %v1533 = vpack.c.b16 %v1141, %v1137
    %v1534 = vpack.c.b16 %v1142, %v1138
    %v1535 = vpack.c.b16 %v1147, %v1143
    %v1536 = vpack.c.b16 %v1148, %v1144
    %v1537 = vpack.c.b16 %v1149, %v1145
    %v1538 = vpack.c.b16 %v1150, %v1146
    %v1539 = vpack.c.b16 %v1155, %v1151
    %v1540 = vpack.c.b16 %v1156, %v1152
    %v1541 = vpack.c.b16 %v1157, %v1153
    %v1542 = vpack.c.b16 %v1158, %v1154
    %v1543 = vpack.c.b16 %v1163, %v1159
    %v1544 = vpack.c.b16 %v1164, %v1160
    %v1545 = vpack.c.b16 %v1165, %v1161
    %v1546 = vpack.c.b16 %v1166, %v1162
    %v1547 = vpack.c.b16 %v1171, %v1167
    %v1548 = vpack.c.b16 %v1172, %v1168
    %v1549 = vpack.c.b16 %v1173, %v1169
    %v1550 = vpack.c.b16 %v1174, %v1170
    %v1551 = vpack.c.b16 %v1179, %v1175
    %v1552 = vpack.c.b16 %v1180, %v1176
    %v1553 = vpack.c.b16 %v1181, %v1177
    %v1554 = vpack.c.b16 %v1182, %v1178
    %v1555 = vpack.c.b16 %v1187, %v1183
    %v1556 = vpack.c.b16 %v1188, %v1184
    %v1557 = vpack.c.b16 %v1189, %v1185
    %v1558 = vpack.c.b16 %v1190, %v1186
    %v1559 = vpack.c.b16 %v1195, %v1191
    %v1560 = vpack.c.b16 %v1196, %v1192
    %v1561 = vpack.c.b16 %v1197, %v1193
    %v1562 = vpack.c.b16 %v1198, %v1194
    %v1563 = vpack.c.b16 %v1203, %v1199
    %v1564 = vpack.c.b16 %v1204, %v1200
    %v1565 = vpack.c.b16 %v1205, %v1201
    %v1566 = vpack.c.b16 %v1206, %v1202
    %v1567 = vpack.c.b16 %v1211, %v1207
    %v1568 = vpack.c.b16 %v1212, %v1208
    %v1569 = vpack.c.b16 %v1213, %v1209
    %v1570 = vpack.c.b16 %v1214, %v1210
    %v1571 = vpack.c.b16 %v1219, %v1215
    %v1572 = vpack.c.b16 %v1220, %v1216
    %v1573 = vpack.c.b16 %v1221, %v1217
    %v1574 = vpack.c.b16 %v1222, %v1218
    %v1575 = vpack.c.b16 %v1227, %v1223
    %v1576 = vpack.c.b16 %v1228, %v1224
    %v1577 = vpack.c.b16 %v1229, %v1225
    %v1578 = vpack.c.b16 %v1230, %v1226
    %v1579 = vpack.c.b16 %v1235, %v1231
    %v1580 = vpack.c.b16 %v1236, %v1232
    %v1581 = vpack.c.b16 %v1237, %v1233
    %v1582 = vpack.c.b16 %v1238, %v1234
    %v1583 = vpack.c.b16 %v1243, %v1239
    %v1584 = vpack.c.b16 %v1244, %v1240
    %v1585 = vpack.c.b16 %v1245, %v1241
    %v1586 = vpack.c.b16 %v1246, %v1242
    %v1587 = vpack.c.b16 %v1251, %v1247
    %v1588 = vpack.c.b16 %v1252, %v1248
    %v1589 = vpack.c.b16 %v1253, %v1249
    %v1590 = vpack.c.b16 %v1254, %v1250
    %v1591 = vpack.c.b16 %v1259, %v1255
    %v1592 = vpack.c.b16 %v1260, %v1256
    %v1593 = vpack.c.b16 %v1261, %v1257
    %v1594 = vpack.c.b16 %v1262, %v1258
    %v1595 = vpack.c.b16 %v1267, %v1263
    %v1596 = vpack.c.b16 %v1268, %v1264
    %v1597 = vpack.c.b16 %v1269, %v1265
    %v1598 = vpack.c.b16 %v1270, %v1266
    %v1599 = vpack.c.b16 %v1275, %v1271
    %v1600 = vpack.c.b16 %v1276, %v1272
    %v1601 = vpack.c.b16 %v1277, %v1273
    %v1602 = vpack.c.b16 %v1278, %v1274
    %v1603 = vpack.c.b16 %v1283, %v1279
    %v1604 = vpack.c.b16 %v1284, %v1280
    %v1605 = vpack.c.b16 %v1285, %v1281
    %v1606 = vpack.c.b16 %v1286, %v1282
    %v1607 = vpack.c.b16 %v1291, %v1287
    %v1608 = vpack.c.b16 %v1292, %v1288
    %v1609 = vpack.c.b16 %v1293, %v1289
    %v1610 = vpack.c.b16 %v1294, %v1290
    %v1611 = vpack.c.b16 %v1299, %v1295
    %v1612 = vpack.c.b16 %v1300, %v1296
    %v1613 = vpack.c.b16 %v1301, %v1297
    %v1614 = vpack.c.b16 %v1302, %v1298
    %v1615 = vpack.c.b16 %v1307, %v1303
    %v1616 = vpack.c.b16 %v1308, %v1304
    %v1617 = vpack.c.b16 %v1309, %v1305
    %v1618 = vpack.c.b16 %v1310, %v1306
    %v1619 = vpack.c.b16 %v1315, %v1311
    %v1620 = vpack.c.b16 %v1316, %v1312
    %v1621 = vpack.c.b16 %v1317, %v1313
    %v1622 = vpack.c.b16 %v1318, %v1314
    %v1623 = vpack.c.b16 %v1323, %v1319
    %v1624 = vpack.c.b16 %v1324, %v1320
    %v1625 = vpack.c.b16 %v1325, %v1321
    %v1626 = vpack.c.b16 %v1326, %v1322
    %v1627 = vpack.c.b16 %v1331, %v1327
    %v1628 = vpack.c.b16 %v1332, %v1328
    %v1629 = vpack.c.b16 %v1333, %v1329
    %v1630 = vpack.c.b16 %v1334, %v1330
    %v1631 = vpack.c.b16 %v1339, %v1335
    %v1632 = vpack.c.b16 %v1340, %v1336
    %v1633 = vpack.c.b16 %v1341, %v1337
    %v1634 = vpack.c.b16 %v1342, %v1338
    %v1635 = vpack.c.b16 %v1347, %v1343
    %v1636 = vpack.c.b16 %v1348, %v1344
    %v1637 = vpack.c.b16 %v1349, %v1345
    %v1638 = vpack.c.b16 %v1350, %v1346
    %v1639 = vpack.c.b16 %v1355, %v1351
    %v1640 = vpack.c.b16 %v1356, %v1352
    %v1641 = vpack.c.b16 %v1357, %v1353
    %v1642 = vpack.c.b16 %v1358, %v1354
    %v1643 = vpack.c.b16 %v1363, %v1359
    %v1644 = vpack.c.b16 %v1364, %v1360
    %v1645 = vpack.c.b16 %v1365, %v1361
    %v1646 = vpack.c.b16 %v1366, %v1362
    %v1647 = vpack.c.b16 %v1371, %v1367
    %v1648 = vpack.c.b16 %v1372, %v1368
    %v1649 = vpack.c.b16 %v1373, %v1369
    %v1650 = vpack.c.b16 %v1374, %v1370
    %v1651 = vpack.c.b16 %v1379, %v1375
    %v1652 = vpack.c.b16 %v1380, %v1376
    %v1653 = vpack.c.b16 %v1381, %v1377
    %v1654 = vpack.c.b16 %v1382, %v1378
    %v1655 = vpack.c.b16 %v1387, %v1383
    %v1656 = vpack.c.b16 %v1388, %v1384
    %v1657 = vpack.c.b16 %v1389, %v1385
    %v1658 = vpack.c.b16 %v1390, %v1386
    %v1659 = vpack.c.b16 %v1395, %v1391
    %v1660 = vpack.c.b16 %v1396, %v1392
    %v1661 = vpack.c.b16 %v1397, %v1393
    %v1662 = vpack.c.b16 %v1398, %v1394
    %v1663 = vpack.c.b16 %v1403, %v1399
    %v1664 = vpack.c.b16 %v1404, %v1400
    %v1665 = vpack.c.b16 %v1405, %v1401
    %v1666 = vpack.c.b16 %v1406, %v1402
    %v1667 = vpack.c.b16 %v1411, %v1407
    %v1668 = vpack.c.b16 %v1412, %v1408
    %v1669 = vpack.c.b16 %v1413, %v1409
    %v1670 = vpack.c.b16 %v1414, %v1410
    %1927 = vmatprep.subr.bf16.mxu0 %v1416
    %1928 = vmatpush1.bf16.msra.mxu0 %v1415
    %1929 = vmatprep.subr.bf16.mxu0 %v1420
    %1930 = vmatpush1.bf16.msra.mxu0 %v1419
    %1931 = vmatprep.subr.bf16.mxu0 %v1424
    %1932 = vmatpush1.bf16.msra.mxu0 %v1423
    %1933 = vmatprep.subr.bf16.mxu0 %v1428
    %1934 = vmatpush1.bf16.msra.mxu0 %v1427
    %1935 = vmatprep.subr.bf16.mxu0 %v1432
    %1936 = vmatpush1.bf16.msra.mxu0 %v1431
    %1937 = vmatprep.subr.bf16.mxu0 %v1436
    %1938 = vmatpush1.bf16.msra.mxu0 %v1435
    %1939 = vmatprep.subr.bf16.mxu0 %v1440
    %1940 = vmatpush1.bf16.msra.mxu0 %v1439
    %1941 = vmatprep.subr.bf16.mxu0 %v1444
    %1942 = vmatpush1.bf16.msra.mxu0 %v1443
    %1943 = vmatprep.subr.bf16.mxu0 %v1448
    %1944 = vmatpush1.bf16.msra.mxu0 %v1447
    %1945 = vmatprep.subr.bf16.mxu0 %v1452
    %1946 = vmatpush1.bf16.msra.mxu0 %v1451
    %1947 = vmatprep.subr.bf16.mxu0 %v1456
    %1948 = vmatpush1.bf16.msra.mxu0 %v1455
    %1949 = vmatprep.subr.bf16.mxu0 %v1460
    %1950 = vmatpush1.bf16.msra.mxu0 %v1459
    %1951 = vmatprep.subr.bf16.mxu0 %v1464
    %1952 = vmatpush1.bf16.msra.mxu0 %v1463
    %1953 = vmatprep.subr.bf16.mxu0 %v1468
    %1954 = vmatpush1.bf16.msra.mxu0 %v1467
    %1955 = vmatprep.subr.bf16.mxu0 %v1472
    %1956 = vmatpush1.bf16.msra.mxu0 %v1471
    %1957 = vmatprep.subr.bf16.mxu0 %v1476
    %1958 = vmatpush1.bf16.msra.mxu0 %v1475
    %1959 = vmatprep.mubr.bf16.mxu0 %v632
    %1960 = vmatmul.mubr.bf16.gmra.mrb[0].mxu0 %v631
    %v1961 = vpop.f32.mrb[0].mxu0
    %v1962 = vadd.f32 0.0, %v1961
    %v1963 = vpop.f32.mrb[0].mxu0
    %v1964 = vadd.f32 0.0, %v1963
    %v1965 = vpop.f32.mrb[0].mxu0
    %v1966 = vpop.f32.mrb[0].mxu0
    %1967 = vdwg.mxu0
    %1968 = vmatprep.subr.bf16.mxu0 %v1480
    %1969 = vmatpush1.bf16.msra.mxu0 %v1479
    %1970 = vmatprep.subr.bf16.mxu0 %v1484
    %1971 = vmatpush1.bf16.msra.mxu0 %v1483
    %1972 = vmatprep.subr.bf16.mxu0 %v1488
    %1973 = vmatpush1.bf16.msra.mxu0 %v1487
    %1974 = vmatprep.subr.bf16.mxu0 %v1492
    %1975 = vmatpush1.bf16.msra.mxu0 %v1491
    %1976 = vmatprep.subr.bf16.mxu0 %v1496
    %1977 = vmatpush1.bf16.msra.mxu0 %v1495
    %1978 = vmatprep.subr.bf16.mxu0 %v1500
    %1979 = vmatpush1.bf16.msra.mxu0 %v1499
    %1980 = vmatprep.subr.bf16.mxu0 %v1504
    %1981 = vmatpush1.bf16.msra.mxu0 %v1503
    %1982 = vmatprep.subr.bf16.mxu0 %v1508
    %1983 = vmatpush1.bf16.msra.mxu0 %v1507
    %1984 = vmatprep.subr.bf16.mxu0 %v1512
    %1985 = vmatpush1.bf16.msra.mxu0 %v1511
    %1986 = vmatprep.subr.bf16.mxu0 %v1516
    %1987 = vmatpush1.bf16.msra.mxu0 %v1515
    %1988 = vmatprep.subr.bf16.mxu0 %v1520
    %1989 = vmatpush1.bf16.msra.mxu0 %v1519
    %1990 = vmatprep.subr.bf16.mxu0 %v1524
    %1991 = vmatpush1.bf16.msra.mxu0 %v1523
    %1992 = vmatprep.subr.bf16.mxu0 %v1528
    %1993 = vmatpush1.bf16.msra.mxu0 %v1527
    %1994 = vmatprep.subr.bf16.mxu0 %v1532
    %1995 = vmatpush1.bf16.msra.mxu0 %v1531
    %1996 = vmatprep.subr.bf16.mxu0 %v1536
    %1997 = vmatpush1.bf16.msra.mxu0 %v1535
    %1998 = vmatprep.subr.bf16.mxu0 %v1540
    %1999 = vmatpush1.bf16.msra.mxu0 %v1539
    %2000 = vmatprep.mubr.bf16.mxu0 %v634
    %2001 = vmatmul.mubr.bf16.gmra.mrb[0].mxu0 %v633
    %v2002 = vpop.f32.mrb[0].mxu0
    %v2003 = vadd.f32 %v1962, %v2002
    %v2004 = vpop.f32.mrb[0].mxu0
    %v2005 = vadd.f32 %v1964, %v2004
    %v2006 = vpop.f32.mrb[0].mxu0
    %v2007 = vpop.f32.mrb[0].mxu0
    %2008 = vdwg.mxu0
    %2009 = vmatprep.subr.bf16.mxu0 %v1544
    %2010 = vmatpush1.bf16.msra.mxu0 %v1543
    %2011 = vmatprep.subr.bf16.mxu0 %v1548
    %2012 = vmatpush1.bf16.msra.mxu0 %v1547
    %2013 = vmatprep.subr.bf16.mxu0 %v1552
    %2014 = vmatpush1.bf16.msra.mxu0 %v1551
    %2015 = vmatprep.subr.bf16.mxu0 %v1556
    %2016 = vmatpush1.bf16.msra.mxu0 %v1555
    %2017 = vmatprep.subr.bf16.mxu0 %v1560
    %2018 = vmatpush1.bf16.msra.mxu0 %v1559
    %2019 = vmatprep.subr.bf16.mxu0 %v1564
    %2020 = vmatpush1.bf16.msra.mxu0 %v1563
    %2021 = vmatprep.subr.bf16.mxu0 %v1568
    %2022 = vmatpush1.bf16.msra.mxu0 %v1567
    %2023 = vmatprep.subr.bf16.mxu0 %v1572
    %2024 = vmatpush1.bf16.msra.mxu0 %v1571
    %2025 = vmatprep.subr.bf16.mxu0 %v1576
    %2026 = vmatpush1.bf16.msra.mxu0 %v1575
    %2027 = vmatprep.subr.bf16.mxu0 %v1580
    %2028 = vmatpush1.bf16.msra.mxu0 %v1579
    %2029 = vmatprep.subr.bf16.mxu0 %v1584
    %2030 = vmatpush1.bf16.msra.mxu0 %v1583
    %2031 = vmatprep.subr.bf16.mxu0 %v1588
    %2032 = vmatpush1.bf16.msra.mxu0 %v1587
    %2033 = vmatprep.subr.bf16.mxu0 %v1592
    %2034 = vmatpush1.bf16.msra.mxu0 %v1591
    %2035 = vmatprep.subr.bf16.mxu0 %v1596
    %2036 = vmatpush1.bf16.msra.mxu0 %v1595
    %2037 = vmatprep.subr.bf16.mxu0 %v1600
    %2038 = vmatpush1.bf16.msra.mxu0 %v1599
    %2039 = vmatprep.subr.bf16.mxu0 %v1604
    %2040 = vmatpush1.bf16.msra.mxu0 %v1603
    %2041 = vmatprep.mubr.bf16.mxu0 %v636
    %2042 = vmatmul.mubr.bf16.gmra.mrb[0].mxu0 %v635
    %v2043 = vpop.f32.mrb[0].mxu0
    %v2044 = vadd.f32 %v2003, %v2043
    %v2045 = vpop.f32.mrb[0].mxu0
    %v2046 = vadd.f32 %v2005, %v2045
    %v2047 = vpop.f32.mrb[0].mxu0
    %v2048 = vpop.f32.mrb[0].mxu0
    %2049 = vdwg.mxu0
    %2050 = vmatprep.subr.bf16.mxu0 %v1608
    %2051 = vmatpush1.bf16.msra.mxu0 %v1607
    %2052 = vmatprep.subr.bf16.mxu0 %v1612
    %2053 = vmatpush1.bf16.msra.mxu0 %v1611
    %2054 = vmatprep.subr.bf16.mxu0 %v1616
    %2055 = vmatpush1.bf16.msra.mxu0 %v1615
    %2056 = vmatprep.subr.bf16.mxu0 %v1620
    %2057 = vmatpush1.bf16.msra.mxu0 %v1619
    %2058 = vmatprep.subr.bf16.mxu0 %v1624
    %2059 = vmatpush1.bf16.msra.mxu0 %v1623
    %2060 = vmatprep.subr.bf16.mxu0 %v1628
    %2061 = vmatpush1.bf16.msra.mxu0 %v1627
    %2062 = vmatprep.subr.bf16.mxu0 %v1632
    %2063 = vmatpush1.bf16.msra.mxu0 %v1631
    %2064 = vmatprep.subr.bf16.mxu0 %v1636
    %2065 = vmatpush1.bf16.msra.mxu0 %v1635
    %2066 = vmatprep.subr.bf16.mxu0 %v1640
    %2067 = vmatpush1.bf16.msra.mxu0 %v1639
    %2068 = vmatprep.subr.bf16.mxu0 %v1644
    %2069 = vmatpush1.bf16.msra.mxu0 %v1643
    %2070 = vmatprep.subr.bf16.mxu0 %v1648
    %2071 = vmatpush1.bf16.msra.mxu0 %v1647
    %2072 = vmatprep.subr.bf16.mxu0 %v1652
    %2073 = vmatpush1.bf16.msra.mxu0 %v1651
    %2074 = vmatprep.subr.bf16.mxu0 %v1656
    %2075 = vmatpush1.bf16.msra.mxu0 %v1655
    %2076 = vmatprep.subr.bf16.mxu0 %v1660
    %2077 = vmatpush1.bf16.msra.mxu0 %v1659
    %2078 = vmatprep.subr.bf16.mxu0 %v1664
    %2079 = vmatpush1.bf16.msra.mxu0 %v1663
    %2080 = vmatprep.subr.bf16.mxu0 %v1668
    %2081 = vmatpush1.bf16.msra.mxu0 %v1667
    %2082 = vmatprep.mubr.bf16.mxu0 %v638
    %2083 = vmatmul.mubr.bf16.gmra.mrb[0].mxu0 %v637
    %v2084 = vpop.f32.mrb[0].mxu0
    %v2085 = vadd.f32 %v2044, %v2084
    %v2086 = vpop.f32.mrb[0].mxu0
    %v2087 = vadd.f32 %v2046, %v2086
    %v2088 = vpop.f32.mrb[0].mxu0
    %v2089 = vpop.f32.mrb[0].mxu0
    %2090 = vdwg.mxu0
    %2091 = vmatprep.subr.bf16.mxu0 %v1418
    %2092 = vmatpush1.bf16.msra.mxu0 %v1417
    %2093 = vmatprep.subr.bf16.mxu0 %v1422
    %2094 = vmatpush1.bf16.msra.mxu0 %v1421
    %2095 = vmatprep.subr.bf16.mxu0 %v1426
    %2096 = vmatpush1.bf16.msra.mxu0 %v1425
    %2097 = vmatprep.subr.bf16.mxu0 %v1430
    %2098 = vmatpush1.bf16.msra.mxu0 %v1429
    %2099 = vmatprep.subr.bf16.mxu0 %v1434
    %2100 = vmatpush1.bf16.msra.mxu0 %v1433
    %2101 = vmatprep.subr.bf16.mxu0 %v1438
    %2102 = vmatpush1.bf16.msra.mxu0 %v1437
    %2103 = vmatprep.subr.bf16.mxu0 %v1442
    %2104 = vmatpush1.bf16.msra.mxu0 %v1441
    %2105 = vmatprep.subr.bf16.mxu0 %v1446
    %2106 = vmatpush1.bf16.msra.mxu0 %v1445
    %2107 = vmatprep.subr.bf16.mxu0 %v1450
    %2108 = vmatpush1.bf16.msra.mxu0 %v1449
    %2109 = vmatprep.subr.bf16.mxu0 %v1454
    %2110 = vmatpush1.bf16.msra.mxu0 %v1453
    %2111 = vmatprep.subr.bf16.mxu0 %v1458
    %2112 = vmatpush1.bf16.msra.mxu0 %v1457
    %2113 = vmatprep.subr.bf16.mxu0 %v1462
    %2114 = vmatpush1.bf16.msra.mxu0 %v1461
    %2115 = vmatprep.subr.bf16.mxu0 %v1466
    %2116 = vmatpush1.bf16.msra.mxu0 %v1465
    %2117 = vmatprep.subr.bf16.mxu0 %v1470
    %2118 = vmatpush1.bf16.msra.mxu0 %v1469
    %2119 = vmatprep.subr.bf16.mxu0 %v1474
    %2120 = vmatpush1.bf16.msra.mxu0 %v1473
    %2121 = vmatprep.subr.bf16.mxu0 %v1478
    %2122 = vmatpush1.bf16.msra.mxu0 %v1477
    %2123 = vmatprep.mubr.bf16.mxu0 %v632
    %2124 = vmatmul.mubr.bf16.gmra.mrb[0].mxu0 %v631
    %v2125 = vpop.f32.mrb[0].mxu0
    %v2126 = vadd.f32 0.0, %v2125
    %v2127 = vpop.f32.mrb[0].mxu0
    %v2128 = vadd.f32 0.0, %v2127
    %v2129 = vpop.f32.mrb[0].mxu0
    %v2130 = vpop.f32.mrb[0].mxu0
    %2131 = vdwg.mxu0
    %2132 = vmatprep.subr.bf16.mxu0 %v1482
    %2133 = vmatpush1.bf16.msra.mxu0 %v1481
    %2134 = vmatprep.subr.bf16.mxu0 %v1486
    %2135 = vmatpush1.bf16.msra.mxu0 %v1485
    %2136 = vmatprep.subr.bf16.mxu0 %v1490
    %2137 = vmatpush1.bf16.msra.mxu0 %v1489
    %2138 = vmatprep.subr.bf16.mxu0 %v1494
    %2139 = vmatpush1.bf16.msra.mxu0 %v1493
    %2140 = vmatprep.subr.bf16.mxu0 %v1498
    %2141 = vmatpush1.bf16.msra.mxu0 %v1497
    %2142 = vmatprep.subr.bf16.mxu0 %v1502
    %2143 = vmatpush1.bf16.msra.mxu0 %v1501
    %2144 = vmatprep.subr.bf16.mxu0 %v1506
    %2145 = vmatpush1.bf16.msra.mxu0 %v1505
    %2146 = vmatprep.subr.bf16.mxu0 %v1510
    %2147 = vmatpush1.bf16.msra.mxu0 %v1509
    %2148 = vmatprep.subr.bf16.mxu0 %v1514
    %2149 = vmatpush1.bf16.msra.mxu0 %v1513
    %2150 = vmatprep.subr.bf16.mxu0 %v1518
    %2151 = vmatpush1.bf16.msra.mxu0 %v1517
    %2152 = vmatprep.subr.bf16.mxu0 %v1522
    %2153 = vmatpush1.bf16.msra.mxu0 %v1521
    %2154 = vmatprep.subr.bf16.mxu0 %v1526
    %2155 = vmatpush1.bf16.msra.mxu0 %v1525
    %2156 = vmatprep.subr.bf16.mxu0 %v1530
    %2157 = vmatpush1.bf16.msra.mxu0 %v1529
    %2158 = vmatprep.subr.bf16.mxu0 %v1534
    %2159 = vmatpush1.bf16.msra.mxu0 %v1533
    %2160 = vmatprep.subr.bf16.mxu0 %v1538
    %2161 = vmatpush1.bf16.msra.mxu0 %v1537
    %2162 = vmatprep.subr.bf16.mxu0 %v1542
    %2163 = vmatpush1.bf16.msra.mxu0 %v1541
    %2164 = vmatprep.mubr.bf16.mxu0 %v634
    %2165 = vmatmul.mubr.bf16.gmra.mrb[0].mxu0 %v633
    %v2166 = vpop.f32.mrb[0].mxu0
    %v2167 = vadd.f32 %v2126, %v2166
    %v2168 = vpop.f32.mrb[0].mxu0
    %v2169 = vadd.f32 %v2128, %v2168
    %v2170 = vpop.f32.mrb[0].mxu0
    %v2171 = vpop.f32.mrb[0].mxu0
    %2172 = vdwg.mxu0
    %2173 = vmatprep.subr.bf16.mxu0 %v1546
    %2174 = vmatpush1.bf16.msra.mxu0 %v1545
    %2175 = vmatprep.subr.bf16.mxu0 %v1550
    %2176 = vmatpush1.bf16.msra.mxu0 %v1549
    %2177 = vmatprep.subr.bf16.mxu0 %v1554
    %2178 = vmatpush1.bf16.msra.mxu0 %v1553
    %2179 = vmatprep.subr.bf16.mxu0 %v1558
    %2180 = vmatpush1.bf16.msra.mxu0 %v1557
    %2181 = vmatprep.subr.bf16.mxu0 %v1562
    %2182 = vmatpush1.bf16.msra.mxu0 %v1561
    %2183 = vmatprep.subr.bf16.mxu0 %v1566
    %2184 = vmatpush1.bf16.msra.mxu0 %v1565
    %2185 = vmatprep.subr.bf16.mxu0 %v1570
    %2186 = vmatpush1.bf16.msra.mxu0 %v1569
    %2187 = vmatprep.subr.bf16.mxu0 %v1574
    %2188 = vmatpush1.bf16.msra.mxu0 %v1573
    %2189 = vmatprep.subr.bf16.mxu0 %v1578
    %2190 = vmatpush1.bf16.msra.mxu0 %v1577
    %2191 = vmatprep.subr.bf16.mxu0 %v1582
    %2192 = vmatpush1.bf16.msra.mxu0 %v1581
    %2193 = vmatprep.subr.bf16.mxu0 %v1586
    %2194 = vmatpush1.bf16.msra.mxu0 %v1585
    %2195 = vmatprep.subr.bf16.mxu0 %v1590
    %2196 = vmatpush1.bf16.msra.mxu0 %v1589
    %2197 = vmatprep.subr.bf16.mxu0 %v1594
    %2198 = vmatpush1.bf16.msra.mxu0 %v1593
    %2199 = vmatprep.subr.bf16.mxu0 %v1598
    %2200 = vmatpush1.bf16.msra.mxu0 %v1597
    %2201 = vmatprep.subr.bf16.mxu0 %v1602
    %2202 = vmatpush1.bf16.msra.mxu0 %v1601
    %2203 = vmatprep.subr.bf16.mxu0 %v1606
    %2204 = vmatpush1.bf16.msra.mxu0 %v1605
    %2205 = vmatprep.mubr.bf16.mxu0 %v636
    %2206 = vmatmul.mubr.bf16.gmra.mrb[0].mxu0 %v635
    %v2207 = vpop.f32.mrb[0].mxu0
    %v2208 = vadd.f32 %v2167, %v2207
    %v2209 = vpop.f32.mrb[0].mxu0
    %v2210 = vadd.f32 %v2169, %v2209
    %v2211 = vpop.f32.mrb[0].mxu0
    %v2212 = vpop.f32.mrb[0].mxu0
    %2213 = vdwg.mxu0
    %2214 = vmatprep.subr.bf16.mxu0 %v1610
    %2215 = vmatpush1.bf16.msra.mxu0 %v1609
    %2216 = vmatprep.subr.bf16.mxu0 %v1614
    %2217 = vmatpush1.bf16.msra.mxu0 %v1613
    %2218 = vmatprep.subr.bf16.mxu0 %v1618
    %2219 = vmatpush1.bf16.msra.mxu0 %v1617
    %2220 = vmatprep.subr.bf16.mxu0 %v1622
    %2221 = vmatpush1.bf16.msra.mxu0 %v1621
    %2222 = vmatprep.subr.bf16.mxu0 %v1626
    %2223 = vmatpush1.bf16.msra.mxu0 %v1625
    %2224 = vmatprep.subr.bf16.mxu0 %v1630
    %2225 = vmatpush1.bf16.msra.mxu0 %v1629
    %2226 = vmatprep.subr.bf16.mxu0 %v1634
    %2227 = vmatpush1.bf16.msra.mxu0 %v1633
    %2228 = vmatprep.subr.bf16.mxu0 %v1638
    %2229 = vmatpush1.bf16.msra.mxu0 %v1637
    %2230 = vmatprep.subr.bf16.mxu0 %v1642
    %2231 = vmatpush1.bf16.msra.mxu0 %v1641
    %2232 = vmatprep.subr.bf16.mxu0 %v1646
    %2233 = vmatpush1.bf16.msra.mxu0 %v1645
    %2234 = vmatprep.subr.bf16.mxu0 %v1650
    %2235 = vmatpush1.bf16.msra.mxu0 %v1649
    %2236 = vmatprep.subr.bf16.mxu0 %v1654
    %2237 = vmatpush1.bf16.msra.mxu0 %v1653
    %2238 = vmatprep.subr.bf16.mxu0 %v1658
    %2239 = vmatpush1.bf16.msra.mxu0 %v1657
    %2240 = vmatprep.subr.bf16.mxu0 %v1662
    %2241 = vmatpush1.bf16.msra.mxu0 %v1661
    %2242 = vmatprep.subr.bf16.mxu0 %v1666
    %2243 = vmatpush1.bf16.msra.mxu0 %v1665
    %2244 = vmatprep.subr.bf16.mxu0 %v1670
    %2245 = vmatpush1.bf16.msra.mxu0 %v1669
    %2246 = vmatprep.mubr.bf16.mxu0 %v638
    %2247 = vmatmul.mubr.bf16.gmra.mrb[0].mxu0 %v637
    %v2248 = vpop.f32.mrb[0].mxu0
    %v2249 = vadd.f32 %v2208, %v2248
    %v2250 = vpop.f32.mrb[0].mxu0
    %v2251 = vadd.f32 %v2210, %v2250
    %v2252 = vpop.f32.mrb[0].mxu0
    %v2253 = vpop.f32.mrb[0].mxu0
    %2254 = vdwg.mxu0
    %v2259 = vunpack.c.l.b16 %v99
    %v2260 = vunpack.c.h.b16 %v99
    %v2261 = vunpack.c.l.b16 %v100
    %v2262 = vunpack.c.h.b16 %v100
    %v2263 = vunpack.c.l.b16 %v101
    %v2264 = vunpack.c.h.b16 %v101
    %v2265 = vunpack.c.l.b16 %v102
    %v2266 = vunpack.c.h.b16 %v102
    %v2267 = vpack.c.b16 %v2259, %v2259
    %v2268 = vpack.c.b16 %v2260, %v2260
    %v2269 = vpack.c.b16 %v2261, %v2261
    %v2270 = vpack.c.b16 %v2262, %v2262
    %v2271 = vpack.c.b16 %v2263, %v2263
    %v2272 = vpack.c.b16 %v2264, %v2264
    %v2273 = vpack.c.b16 %v2265, %v2265
    %v2274 = vpack.c.b16 %v2266, %v2266
    %v2539 = vunpack.c.l.b16 %v103
    %v2540 = vunpack.c.h.b16 %v103
    %v2541 = vunpack.c.l.b16 %v104
    %v2542 = vunpack.c.h.b16 %v104
    %v2543 = vunpack.c.l.b16 %v105
    %v2544 = vunpack.c.h.b16 %v105
    %v2545 = vunpack.c.l.b16 %v106
    %v2546 = vunpack.c.h.b16 %v106
    %v2547 = vunpack.c.l.b16 %v107
    %v2548 = vunpack.c.h.b16 %v107
    %v2549 = vunpack.c.l.b16 %v108
    %v2550 = vunpack.c.h.b16 %v108
    %v2551 = vunpack.c.l.b16 %v109
    %v2552 = vunpack.c.h.b16 %v109
    %v2553 = vunpack.c.l.b16 %v110
    %v2554 = vunpack.c.h.b16 %v110
    %v2555 = vunpack.c.l.b16 %v111
    %v2556 = vunpack.c.h.b16 %v111
    %v2557 = vunpack.c.l.b16 %v112
    %v2558 = vunpack.c.h.b16 %v112
    %v2559 = vunpack.c.l.b16 %v113
    %v2560 = vunpack.c.h.b16 %v113
    %v2561 = vunpack.c.l.b16 %v114
    %v2562 = vunpack.c.h.b16 %v114
    %v2563 = vunpack.c.l.b16 %v115
    %v2564 = vunpack.c.h.b16 %v115
    %v2565 = vunpack.c.l.b16 %v116
    %v2566 = vunpack.c.h.b16 %v116
    %v2567 = vunpack.c.l.b16 %v117
    %v2568 = vunpack.c.h.b16 %v117
    %v2569 = vunpack.c.l.b16 %v118
    %v2570 = vunpack.c.h.b16 %v118
    %v2571 = vunpack.c.l.b16 %v119
    %v2572 = vunpack.c.h.b16 %v119
    %v2573 = vunpack.c.l.b16 %v120
    %v2574 = vunpack.c.h.b16 %v120
    %v2575 = vunpack.c.l.b16 %v121
    %v2576 = vunpack.c.h.b16 %v121
    %v2577 = vunpack.c.l.b16 %v122
    %v2578 = vunpack.c.h.b16 %v122
    %v2579 = vunpack.c.l.b16 %v123
    %v2580 = vunpack.c.h.b16 %v123
    %v2581 = vunpack.c.l.b16 %v124
    %v2582 = vunpack.c.h.b16 %v124
    %v2583 = vunpack.c.l.b16 %v125
    %v2584 = vunpack.c.h.b16 %v125
    %v2585 = vunpack.c.l.b16 %v126
    %v2586 = vunpack.c.h.b16 %v126
    %v2587 = vunpack.c.l.b16 %v127
    %v2588 = vunpack.c.h.b16 %v127
    %v2589 = vunpack.c.l.b16 %v128
    %v2590 = vunpack.c.h.b16 %v128
    %v2591 = vunpack.c.l.b16 %v129
    %v2592 = vunpack.c.h.b16 %v129
    %v2593 = vunpack.c.l.b16 %v130
    %v2594 = vunpack.c.h.b16 %v130
    %v2595 = vunpack.c.l.b16 %v131
    %v2596 = vunpack.c.h.b16 %v131
    %v2597 = vunpack.c.l.b16 %v132
    %v2598 = vunpack.c.h.b16 %v132
    %v2599 = vunpack.c.l.b16 %v133
    %v2600 = vunpack.c.h.b16 %v133
    %v2601 = vunpack.c.l.b16 %v134
    %v2602 = vunpack.c.h.b16 %v134
    %v2603 = vunpack.c.l.b16 %v135
    %v2604 = vunpack.c.h.b16 %v135
    %v2605 = vunpack.c.l.b16 %v136
    %v2606 = vunpack.c.h.b16 %v136
    %v2607 = vunpack.c.l.b16 %v137
    %v2608 = vunpack.c.h.b16 %v137
    %v2609 = vunpack.c.l.b16 %v138
    %v2610 = vunpack.c.h.b16 %v138
    %v2611 = vunpack.c.l.b16 %v139
    %v2612 = vunpack.c.h.b16 %v139
    %v2613 = vunpack.c.l.b16 %v140
    %v2614 = vunpack.c.h.b16 %v140
    %v2615 = vunpack.c.l.b16 %v141
    %v2616 = vunpack.c.h.b16 %v141
    %v2617 = vunpack.c.l.b16 %v142
    %v2618 = vunpack.c.h.b16 %v142
    %v2619 = vunpack.c.l.b16 %v143
    %v2620 = vunpack.c.h.b16 %v143
    %v2621 = vunpack.c.l.b16 %v144
    %v2622 = vunpack.c.h.b16 %v144
    %v2623 = vunpack.c.l.b16 %v145
    %v2624 = vunpack.c.h.b16 %v145
    %v2625 = vunpack.c.l.b16 %v146
    %v2626 = vunpack.c.h.b16 %v146
    %v2627 = vunpack.c.l.b16 %v147
    %v2628 = vunpack.c.h.b16 %v147
    %v2629 = vunpack.c.l.b16 %v148
    %v2630 = vunpack.c.h.b16 %v148
    %v2631 = vunpack.c.l.b16 %v149
    %v2632 = vunpack.c.h.b16 %v149
    %v2633 = vunpack.c.l.b16 %v150
    %v2634 = vunpack.c.h.b16 %v150
    %v2635 = vunpack.c.l.b16 %v151
    %v2636 = vunpack.c.h.b16 %v151
    %v2637 = vunpack.c.l.b16 %v152
    %v2638 = vunpack.c.h.b16 %v152
    %v2639 = vunpack.c.l.b16 %v153
    %v2640 = vunpack.c.h.b16 %v153
    %v2641 = vunpack.c.l.b16 %v154
    %v2642 = vunpack.c.h.b16 %v154
    %v2643 = vunpack.c.l.b16 %v155
    %v2644 = vunpack.c.h.b16 %v155
    %v2645 = vunpack.c.l.b16 %v156
    %v2646 = vunpack.c.h.b16 %v156
    %v2647 = vunpack.c.l.b16 %v157
    %v2648 = vunpack.c.h.b16 %v157
    %v2649 = vunpack.c.l.b16 %v158
    %v2650 = vunpack.c.h.b16 %v158
    %v2651 = vunpack.c.l.b16 %v159
    %v2652 = vunpack.c.h.b16 %v159
    %v2653 = vunpack.c.l.b16 %v160
    %v2654 = vunpack.c.h.b16 %v160
    %v2655 = vunpack.c.l.b16 %v161
    %v2656 = vunpack.c.h.b16 %v161
    %v2657 = vunpack.c.l.b16 %v162
    %v2658 = vunpack.c.h.b16 %v162
    %v2659 = vunpack.c.l.b16 %v163
    %v2660 = vunpack.c.h.b16 %v163
    %v2661 = vunpack.c.l.b16 %v164
    %v2662 = vunpack.c.h.b16 %v164
    %v2663 = vunpack.c.l.b16 %v165
    %v2664 = vunpack.c.h.b16 %v165
    %v2665 = vunpack.c.l.b16 %v166
    %v2666 = vunpack.c.h.b16 %v166
    %v2667 = vunpack.c.l.b16 %v167
    %v2668 = vunpack.c.h.b16 %v167
    %v2669 = vunpack.c.l.b16 %v168
    %v2670 = vunpack.c.h.b16 %v168
    %v2671 = vunpack.c.l.b16 %v169
    %v2672 = vunpack.c.h.b16 %v169
    %v2673 = vunpack.c.l.b16 %v170
    %v2674 = vunpack.c.h.b16 %v170
    %v2675 = vunpack.c.l.b16 %v171
    %v2676 = vunpack.c.h.b16 %v171
    %v2677 = vunpack.c.l.b16 %v172
    %v2678 = vunpack.c.h.b16 %v172
    %v2679 = vunpack.c.l.b16 %v173
    %v2680 = vunpack.c.h.b16 %v173
    %v2681 = vunpack.c.l.b16 %v174
    %v2682 = vunpack.c.h.b16 %v174
    %v2683 = vunpack.c.l.b16 %v175
    %v2684 = vunpack.c.h.b16 %v175
    %v2685 = vunpack.c.l.b16 %v176
    %v2686 = vunpack.c.h.b16 %v176
    %v2687 = vunpack.c.l.b16 %v177
    %v2688 = vunpack.c.h.b16 %v177
    %v2689 = vunpack.c.l.b16 %v178
    %v2690 = vunpack.c.h.b16 %v178
    %v2691 = vunpack.c.l.b16 %v179
    %v2692 = vunpack.c.h.b16 %v179
    %v2693 = vunpack.c.l.b16 %v180
    %v2694 = vunpack.c.h.b16 %v180
    %v2695 = vunpack.c.l.b16 %v181
    %v2696 = vunpack.c.h.b16 %v181
    %v2697 = vunpack.c.l.b16 %v182
    %v2698 = vunpack.c.h.b16 %v182
    %v2699 = vunpack.c.l.b16 %v183
    %v2700 = vunpack.c.h.b16 %v183
    %v2701 = vunpack.c.l.b16 %v184
    %v2702 = vunpack.c.h.b16 %v184
    %v2703 = vunpack.c.l.b16 %v185
    %v2704 = vunpack.c.h.b16 %v185
    %v2705 = vunpack.c.l.b16 %v186
    %v2706 = vunpack.c.h.b16 %v186
    %v2707 = vunpack.c.l.b16 %v187
    %v2708 = vunpack.c.h.b16 %v187
    %v2709 = vunpack.c.l.b16 %v188
    %v2710 = vunpack.c.h.b16 %v188
    %v2711 = vunpack.c.l.b16 %v189
    %v2712 = vunpack.c.h.b16 %v189
    %v2713 = vunpack.c.l.b16 %v190
    %v2714 = vunpack.c.h.b16 %v190
    %v2715 = vunpack.c.l.b16 %v191
    %v2716 = vunpack.c.h.b16 %v191
    %v2717 = vunpack.c.l.b16 %v192
    %v2718 = vunpack.c.h.b16 %v192
    %v2719 = vunpack.c.l.b16 %v193
    %v2720 = vunpack.c.h.b16 %v193
    %v2721 = vunpack.c.l.b16 %v194
    %v2722 = vunpack.c.h.b16 %v194
    %v2723 = vunpack.c.l.b16 %v195
    %v2724 = vunpack.c.h.b16 %v195
    %v2725 = vunpack.c.l.b16 %v196
    %v2726 = vunpack.c.h.b16 %v196
    %v2727 = vunpack.c.l.b16 %v197
    %v2728 = vunpack.c.h.b16 %v197
    %v2729 = vunpack.c.l.b16 %v198
    %v2730 = vunpack.c.h.b16 %v198
    %v2731 = vunpack.c.l.b16 %v199
    %v2732 = vunpack.c.h.b16 %v199
    %v2733 = vunpack.c.l.b16 %v200
    %v2734 = vunpack.c.h.b16 %v200
    %v2735 = vunpack.c.l.b16 %v201
    %v2736 = vunpack.c.h.b16 %v201
    %v2737 = vunpack.c.l.b16 %v202
    %v2738 = vunpack.c.h.b16 %v202
    %v2739 = vunpack.c.l.b16 %v203
    %v2740 = vunpack.c.h.b16 %v203
    %v2741 = vunpack.c.l.b16 %v204
    %v2742 = vunpack.c.h.b16 %v204
    %v2743 = vunpack.c.l.b16 %v205
    %v2744 = vunpack.c.h.b16 %v205
    %v2745 = vunpack.c.l.b16 %v206
    %v2746 = vunpack.c.h.b16 %v206
    %v2747 = vunpack.c.l.b16 %v207
    %v2748 = vunpack.c.h.b16 %v207
    %v2749 = vunpack.c.l.b16 %v208
    %v2750 = vunpack.c.h.b16 %v208
    %v2751 = vunpack.c.l.b16 %v209
    %v2752 = vunpack.c.h.b16 %v209
    %v2753 = vunpack.c.l.b16 %v210
    %v2754 = vunpack.c.h.b16 %v210
    %v2755 = vunpack.c.l.b16 %v211
    %v2756 = vunpack.c.h.b16 %v211
    %v2757 = vunpack.c.l.b16 %v212
    %v2758 = vunpack.c.h.b16 %v212
    %v2759 = vunpack.c.l.b16 %v213
    %v2760 = vunpack.c.h.b16 %v213
    %v2761 = vunpack.c.l.b16 %v214
    %v2762 = vunpack.c.h.b16 %v214
    %v2763 = vunpack.c.l.b16 %v215
    %v2764 = vunpack.c.h.b16 %v215
    %v2765 = vunpack.c.l.b16 %v216
    %v2766 = vunpack.c.h.b16 %v216
    %v2767 = vunpack.c.l.b16 %v217
    %v2768 = vunpack.c.h.b16 %v217
    %v2769 = vunpack.c.l.b16 %v218
    %v2770 = vunpack.c.h.b16 %v218
    %v2771 = vunpack.c.l.b16 %v219
    %v2772 = vunpack.c.h.b16 %v219
    %v2773 = vunpack.c.l.b16 %v220
    %v2774 = vunpack.c.h.b16 %v220
    %v2775 = vunpack.c.l.b16 %v221
    %v2776 = vunpack.c.h.b16 %v221
    %v2777 = vunpack.c.l.b16 %v222
    %v2778 = vunpack.c.h.b16 %v222
    %v2779 = vunpack.c.l.b16 %v223
    %v2780 = vunpack.c.h.b16 %v223
    %v2781 = vunpack.c.l.b16 %v224
    %v2782 = vunpack.c.h.b16 %v224
    %v2783 = vunpack.c.l.b16 %v225
    %v2784 = vunpack.c.h.b16 %v225
    %v2785 = vunpack.c.l.b16 %v226
    %v2786 = vunpack.c.h.b16 %v226
    %v2787 = vunpack.c.l.b16 %v227
    %v2788 = vunpack.c.h.b16 %v227
    %v2789 = vunpack.c.l.b16 %v228
    %v2790 = vunpack.c.h.b16 %v228
    %v2791 = vunpack.c.l.b16 %v229
    %v2792 = vunpack.c.h.b16 %v229
    %v2793 = vunpack.c.l.b16 %v230
    %v2794 = vunpack.c.h.b16 %v230
    %v2795 = vunpack.c.l.b16 %v231
    %v2796 = vunpack.c.h.b16 %v231
    %v2797 = vunpack.c.l.b16 %v232
    %v2798 = vunpack.c.h.b16 %v232
    %v2799 = vunpack.c.l.b16 %v233
    %v2800 = vunpack.c.h.b16 %v233
    %v2801 = vunpack.c.l.b16 %v234
    %v2802 = vunpack.c.h.b16 %v234
    %v2803 = vunpack.c.l.b16 %v235
    %v2804 = vunpack.c.h.b16 %v235
    %v2805 = vunpack.c.l.b16 %v236
    %v2806 = vunpack.c.h.b16 %v236
    %v2807 = vunpack.c.l.b16 %v237
    %v2808 = vunpack.c.h.b16 %v237
    %v2809 = vunpack.c.l.b16 %v238
    %v2810 = vunpack.c.h.b16 %v238
    %v2811 = vunpack.c.l.b16 %v239
    %v2812 = vunpack.c.h.b16 %v239
    %v2813 = vunpack.c.l.b16 %v240
    %v2814 = vunpack.c.h.b16 %v240
    %v2815 = vunpack.c.l.b16 %v241
    %v2816 = vunpack.c.h.b16 %v241
    %v2817 = vunpack.c.l.b16 %v242
    %v2818 = vunpack.c.h.b16 %v242
    %v2819 = vunpack.c.l.b16 %v243
    %v2820 = vunpack.c.h.b16 %v243
    %v2821 = vunpack.c.l.b16 %v244
    %v2822 = vunpack.c.h.b16 %v244
    %v2823 = vunpack.c.l.b16 %v245
    %v2824 = vunpack.c.h.b16 %v245
    %v2825 = vunpack.c.l.b16 %v246
    %v2826 = vunpack.c.h.b16 %v246
    %v2827 = vunpack.c.l.b16 %v247
    %v2828 = vunpack.c.h.b16 %v247
    %v2829 = vunpack.c.l.b16 %v248
    %v2830 = vunpack.c.h.b16 %v248
    %v2831 = vunpack.c.l.b16 %v249
    %v2832 = vunpack.c.h.b16 %v249
    %v2833 = vunpack.c.l.b16 %v250
    %v2834 = vunpack.c.h.b16 %v250
    %v2835 = vunpack.c.l.b16 %v251
    %v2836 = vunpack.c.h.b16 %v251
    %v2837 = vunpack.c.l.b16 %v252
    %v2838 = vunpack.c.h.b16 %v252
    %v2839 = vunpack.c.l.b16 %v253
    %v2840 = vunpack.c.h.b16 %v253
    %v2841 = vunpack.c.l.b16 %v254
    %v2842 = vunpack.c.h.b16 %v254
    %v2843 = vunpack.c.l.b16 %v255
    %v2844 = vunpack.c.h.b16 %v255
    %v2845 = vunpack.c.l.b16 %v256
    %v2846 = vunpack.c.h.b16 %v256
    %v2847 = vunpack.c.l.b16 %v257
    %v2848 = vunpack.c.h.b16 %v257
    %v2849 = vunpack.c.l.b16 %v258
    %v2850 = vunpack.c.h.b16 %v258
    %v2851 = vunpack.c.l.b16 %v259
    %v2852 = vunpack.c.h.b16 %v259
    %v2853 = vunpack.c.l.b16 %v260
    %v2854 = vunpack.c.h.b16 %v260
    %v2855 = vunpack.c.l.b16 %v261
    %v2856 = vunpack.c.h.b16 %v261
    %v2857 = vunpack.c.l.b16 %v262
    %v2858 = vunpack.c.h.b16 %v262
    %v2859 = vunpack.c.l.b16 %v263
    %v2860 = vunpack.c.h.b16 %v263
    %v2861 = vunpack.c.l.b16 %v264
    %v2862 = vunpack.c.h.b16 %v264
    %v2863 = vunpack.c.l.b16 %v265
    %v2864 = vunpack.c.h.b16 %v265
    %v2865 = vunpack.c.l.b16 %v266
    %v2866 = vunpack.c.h.b16 %v266
    %v2867 = vunpack.c.l.b16 %v267
    %v2868 = vunpack.c.h.b16 %v267
    %v2869 = vunpack.c.l.b16 %v268
    %v2870 = vunpack.c.h.b16 %v268
    %v2871 = vunpack.c.l.b16 %v269
    %v2872 = vunpack.c.h.b16 %v269
    %v2873 = vunpack.c.l.b16 %v270
    %v2874 = vunpack.c.h.b16 %v270
    %v2875 = vunpack.c.l.b16 %v271
    %v2876 = vunpack.c.h.b16 %v271
    %v2877 = vunpack.c.l.b16 %v272
    %v2878 = vunpack.c.h.b16 %v272
    %v2879 = vunpack.c.l.b16 %v273
    %v2880 = vunpack.c.h.b16 %v273
    %v2881 = vunpack.c.l.b16 %v274
    %v2882 = vunpack.c.h.b16 %v274
    %v2883 = vunpack.c.l.b16 %v275
    %v2884 = vunpack.c.h.b16 %v275
    %v2885 = vunpack.c.l.b16 %v276
    %v2886 = vunpack.c.h.b16 %v276
    %v2887 = vunpack.c.l.b16 %v277
    %v2888 = vunpack.c.h.b16 %v277
    %v2889 = vunpack.c.l.b16 %v278
    %v2890 = vunpack.c.h.b16 %v278
    %v2891 = vunpack.c.l.b16 %v279
    %v2892 = vunpack.c.h.b16 %v279
    %v2893 = vunpack.c.l.b16 %v280
    %v2894 = vunpack.c.h.b16 %v280
    %v2895 = vunpack.c.l.b16 %v281
    %v2896 = vunpack.c.h.b16 %v281
    %v2897 = vunpack.c.l.b16 %v282
    %v2898 = vunpack.c.h.b16 %v282
    %v2899 = vunpack.c.l.b16 %v283
    %v2900 = vunpack.c.h.b16 %v283
    %v2901 = vunpack.c.l.b16 %v284
    %v2902 = vunpack.c.h.b16 %v284
    %v2903 = vunpack.c.l.b16 %v285
    %v2904 = vunpack.c.h.b16 %v285
    %v2905 = vunpack.c.l.b16 %v286
    %v2906 = vunpack.c.h.b16 %v286
    %v2907 = vunpack.c.l.b16 %v287
    %v2908 = vunpack.c.h.b16 %v287
    %v2909 = vunpack.c.l.b16 %v288
    %v2910 = vunpack.c.h.b16 %v288
    %v2911 = vunpack.c.l.b16 %v289
    %v2912 = vunpack.c.h.b16 %v289
    %v2913 = vunpack.c.l.b16 %v290
    %v2914 = vunpack.c.h.b16 %v290
    %v2915 = vunpack.c.l.b16 %v291
    %v2916 = vunpack.c.h.b16 %v291
    %v2917 = vunpack.c.l.b16 %v292
    %v2918 = vunpack.c.h.b16 %v292
    %v2919 = vunpack.c.l.b16 %v293
    %v2920 = vunpack.c.h.b16 %v293
    %v2921 = vunpack.c.l.b16 %v294
    %v2922 = vunpack.c.h.b16 %v294
    %v2923 = vunpack.c.l.b16 %v295
    %v2924 = vunpack.c.h.b16 %v295
    %v2925 = vunpack.c.l.b16 %v296
    %v2926 = vunpack.c.h.b16 %v296
    %v2927 = vunpack.c.l.b16 %v297
    %v2928 = vunpack.c.h.b16 %v297
    %v2929 = vunpack.c.l.b16 %v298
    %v2930 = vunpack.c.h.b16 %v298
    %v2931 = vunpack.c.l.b16 %v299
    %v2932 = vunpack.c.h.b16 %v299
    %v2933 = vunpack.c.l.b16 %v300
    %v2934 = vunpack.c.h.b16 %v300
    %v2935 = vunpack.c.l.b16 %v301
    %v2936 = vunpack.c.h.b16 %v301
    %v2937 = vunpack.c.l.b16 %v302
    %v2938 = vunpack.c.h.b16 %v302
    %v2939 = vunpack.c.l.b16 %v303
    %v2940 = vunpack.c.h.b16 %v303
    %v2941 = vunpack.c.l.b16 %v304
    %v2942 = vunpack.c.h.b16 %v304
    %v2943 = vunpack.c.l.b16 %v305
    %v2944 = vunpack.c.h.b16 %v305
    %v2945 = vunpack.c.l.b16 %v306
    %v2946 = vunpack.c.h.b16 %v306
    %v2947 = vunpack.c.l.b16 %v307
    %v2948 = vunpack.c.h.b16 %v307
    %v2949 = vunpack.c.l.b16 %v308
    %v2950 = vunpack.c.h.b16 %v308
    %v2951 = vunpack.c.l.b16 %v309
    %v2952 = vunpack.c.h.b16 %v309
    %v2953 = vunpack.c.l.b16 %v310
    %v2954 = vunpack.c.h.b16 %v310
    %v2955 = vunpack.c.l.b16 %v311
    %v2956 = vunpack.c.h.b16 %v311
    %v2957 = vunpack.c.l.b16 %v312
    %v2958 = vunpack.c.h.b16 %v312
    %v2959 = vunpack.c.l.b16 %v313
    %v2960 = vunpack.c.h.b16 %v313
    %v2961 = vunpack.c.l.b16 %v314
    %v2962 = vunpack.c.h.b16 %v314
    %v2963 = vunpack.c.l.b16 %v315
    %v2964 = vunpack.c.h.b16 %v315
    %v2965 = vunpack.c.l.b16 %v316
    %v2966 = vunpack.c.h.b16 %v316
    %v2967 = vunpack.c.l.b16 %v317
    %v2968 = vunpack.c.h.b16 %v317
    %v2969 = vunpack.c.l.b16 %v318
    %v2970 = vunpack.c.h.b16 %v318
    %v2971 = vunpack.c.l.b16 %v319
    %v2972 = vunpack.c.h.b16 %v319
    %v2973 = vunpack.c.l.b16 %v320
    %v2974 = vunpack.c.h.b16 %v320
    %v2975 = vunpack.c.l.b16 %v321
    %v2976 = vunpack.c.h.b16 %v321
    %v2977 = vunpack.c.l.b16 %v322
    %v2978 = vunpack.c.h.b16 %v322
    %v2979 = vunpack.c.l.b16 %v323
    %v2980 = vunpack.c.h.b16 %v323
    %v2981 = vunpack.c.l.b16 %v324
    %v2982 = vunpack.c.h.b16 %v324
    %v2983 = vunpack.c.l.b16 %v325
    %v2984 = vunpack.c.h.b16 %v325
    %v2985 = vunpack.c.l.b16 %v326
    %v2986 = vunpack.c.h.b16 %v326
    %v2987 = vunpack.c.l.b16 %v327
    %v2988 = vunpack.c.h.b16 %v327
    %v2989 = vunpack.c.l.b16 %v328
    %v2990 = vunpack.c.h.b16 %v328
    %v2991 = vunpack.c.l.b16 %v329
    %v2992 = vunpack.c.h.b16 %v329
    %v2993 = vunpack.c.l.b16 %v330
    %v2994 = vunpack.c.h.b16 %v330
    %v2995 = vunpack.c.l.b16 %v331
    %v2996 = vunpack.c.h.b16 %v331
    %v2997 = vunpack.c.l.b16 %v332
    %v2998 = vunpack.c.h.b16 %v332
    %v2999 = vunpack.c.l.b16 %v333
    %v3000 = vunpack.c.h.b16 %v333
    %v3001 = vunpack.c.l.b16 %v334
    %v3002 = vunpack.c.h.b16 %v334
    %v3003 = vunpack.c.l.b16 %v335
    %v3004 = vunpack.c.h.b16 %v335
    %v3005 = vunpack.c.l.b16 %v336
    %v3006 = vunpack.c.h.b16 %v336
    %v3007 = vunpack.c.l.b16 %v337
    %v3008 = vunpack.c.h.b16 %v337
    %v3009 = vunpack.c.l.b16 %v338
    %v3010 = vunpack.c.h.b16 %v338
    %v3011 = vunpack.c.l.b16 %v339
    %v3012 = vunpack.c.h.b16 %v339
    %v3013 = vunpack.c.l.b16 %v340
    %v3014 = vunpack.c.h.b16 %v340
    %v3015 = vunpack.c.l.b16 %v341
    %v3016 = vunpack.c.h.b16 %v341
    %v3017 = vunpack.c.l.b16 %v342
    %v3018 = vunpack.c.h.b16 %v342
    %v3019 = vunpack.c.l.b16 %v343
    %v3020 = vunpack.c.h.b16 %v343
    %v3021 = vunpack.c.l.b16 %v344
    %v3022 = vunpack.c.h.b16 %v344
    %v3023 = vunpack.c.l.b16 %v345
    %v3024 = vunpack.c.h.b16 %v345
    %v3025 = vunpack.c.l.b16 %v346
    %v3026 = vunpack.c.h.b16 %v346
    %v3027 = vunpack.c.l.b16 %v347
    %v3028 = vunpack.c.h.b16 %v347
    %v3029 = vunpack.c.l.b16 %v348
    %v3030 = vunpack.c.h.b16 %v348
    %v3031 = vunpack.c.l.b16 %v349
    %v3032 = vunpack.c.h.b16 %v349
    %v3033 = vunpack.c.l.b16 %v350
    %v3034 = vunpack.c.h.b16 %v350
    %v3035 = vunpack.c.l.b16 %v351
    %v3036 = vunpack.c.h.b16 %v351
    %v3037 = vunpack.c.l.b16 %v352
    %v3038 = vunpack.c.h.b16 %v352
    %v3039 = vunpack.c.l.b16 %v353
    %v3040 = vunpack.c.h.b16 %v353
    %v3041 = vunpack.c.l.b16 %v354
    %v3042 = vunpack.c.h.b16 %v354
    %v3043 = vunpack.c.l.b16 %v355
    %v3044 = vunpack.c.h.b16 %v355
    %v3045 = vunpack.c.l.b16 %v356
    %v3046 = vunpack.c.h.b16 %v356
    %v3047 = vunpack.c.l.b16 %v357
    %v3048 = vunpack.c.h.b16 %v357
    %v3049 = vunpack.c.l.b16 %v358
    %v3050 = vunpack.c.h.b16 %v358
    %v3051 = vpack.c.b16 %v2543, %v2539
    %v3052 = vpack.c.b16 %v2544, %v2540
    %v3053 = vpack.c.b16 %v2545, %v2541
    %v3054 = vpack.c.b16 %v2546, %v2542
    %v3055 = vpack.c.b16 %v2551, %v2547
    %v3056 = vpack.c.b16 %v2552, %v2548
    %v3057 = vpack.c.b16 %v2553, %v2549
    %v3058 = vpack.c.b16 %v2554, %v2550
    %v3059 = vpack.c.b16 %v2559, %v2555
    %v3060 = vpack.c.b16 %v2560, %v2556
    %v3061 = vpack.c.b16 %v2561, %v2557
    %v3062 = vpack.c.b16 %v2562, %v2558
    %v3063 = vpack.c.b16 %v2567, %v2563
    %v3064 = vpack.c.b16 %v2568, %v2564
    %v3065 = vpack.c.b16 %v2569, %v2565
    %v3066 = vpack.c.b16 %v2570, %v2566
    %v3067 = vpack.c.b16 %v2575, %v2571
    %v3068 = vpack.c.b16 %v2576, %v2572
    %v3069 = vpack.c.b16 %v2577, %v2573
    %v3070 = vpack.c.b16 %v2578, %v2574
    %v3071 = vpack.c.b16 %v2583, %v2579
    %v3072 = vpack.c.b16 %v2584, %v2580
    %v3073 = vpack.c.b16 %v2585, %v2581
    %v3074 = vpack.c.b16 %v2586, %v2582
    %v3075 = vpack.c.b16 %v2591, %v2587
    %v3076 = vpack.c.b16 %v2592, %v2588
    %v3077 = vpack.c.b16 %v2593, %v2589
    %v3078 = vpack.c.b16 %v2594, %v2590
    %v3079 = vpack.c.b16 %v2599, %v2595
    %v3080 = vpack.c.b16 %v2600, %v2596
    %v3081 = vpack.c.b16 %v2601, %v2597
    %v3082 = vpack.c.b16 %v2602, %v2598
    %v3083 = vpack.c.b16 %v2607, %v2603
    %v3084 = vpack.c.b16 %v2608, %v2604
    %v3085 = vpack.c.b16 %v2609, %v2605
    %v3086 = vpack.c.b16 %v2610, %v2606
    %v3087 = vpack.c.b16 %v2615, %v2611
    %v3088 = vpack.c.b16 %v2616, %v2612
    %v3089 = vpack.c.b16 %v2617, %v2613
    %v3090 = vpack.c.b16 %v2618, %v2614
    %v3091 = vpack.c.b16 %v2623, %v2619
    %v3092 = vpack.c.b16 %v2624, %v2620
    %v3093 = vpack.c.b16 %v2625, %v2621
    %v3094 = vpack.c.b16 %v2626, %v2622
    %v3095 = vpack.c.b16 %v2631, %v2627
    %v3096 = vpack.c.b16 %v2632, %v2628
    %v3097 = vpack.c.b16 %v2633, %v2629
    %v3098 = vpack.c.b16 %v2634, %v2630
    %v3099 = vpack.c.b16 %v2639, %v2635
    %v3100 = vpack.c.b16 %v2640, %v2636
    %v3101 = vpack.c.b16 %v2641, %v2637
    %v3102 = vpack.c.b16 %v2642, %v2638
    %v3103 = vpack.c.b16 %v2647, %v2643
    %v3104 = vpack.c.b16 %v2648, %v2644
    %v3105 = vpack.c.b16 %v2649, %v2645
    %v3106 = vpack.c.b16 %v2650, %v2646
    %v3107 = vpack.c.b16 %v2655, %v2651
    %v3108 = vpack.c.b16 %v2656, %v2652
    %v3109 = vpack.c.b16 %v2657, %v2653
    %v3110 = vpack.c.b16 %v2658, %v2654
    %v3111 = vpack.c.b16 %v2663, %v2659
    %v3112 = vpack.c.b16 %v2664, %v2660
    %v3113 = vpack.c.b16 %v2665, %v2661
    %v3114 = vpack.c.b16 %v2666, %v2662
    %v3115 = vpack.c.b16 %v2671, %v2667
    %v3116 = vpack.c.b16 %v2672, %v2668
    %v3117 = vpack.c.b16 %v2673, %v2669
    %v3118 = vpack.c.b16 %v2674, %v2670
    %v3119 = vpack.c.b16 %v2679, %v2675
    %v3120 = vpack.c.b16 %v2680, %v2676
    %v3121 = vpack.c.b16 %v2681, %v2677
    %v3122 = vpack.c.b16 %v2682, %v2678
    %v3123 = vpack.c.b16 %v2687, %v2683
    %v3124 = vpack.c.b16 %v2688, %v2684
    %v3125 = vpack.c.b16 %v2689, %v2685
    %v3126 = vpack.c.b16 %v2690, %v2686
    %v3127 = vpack.c.b16 %v2695, %v2691
    %v3128 = vpack.c.b16 %v2696, %v2692
    %v3129 = vpack.c.b16 %v2697, %v2693
    %v3130 = vpack.c.b16 %v2698, %v2694
    %v3131 = vpack.c.b16 %v2703, %v2699
    %v3132 = vpack.c.b16 %v2704, %v2700
    %v3133 = vpack.c.b16 %v2705, %v2701
    %v3134 = vpack.c.b16 %v2706, %v2702
    %v3135 = vpack.c.b16 %v2711, %v2707
    %v3136 = vpack.c.b16 %v2712, %v2708
    %v3137 = vpack.c.b16 %v2713, %v2709
    %v3138 = vpack.c.b16 %v2714, %v2710
    %v3139 = vpack.c.b16 %v2719, %v2715
    %v3140 = vpack.c.b16 %v2720, %v2716
    %v3141 = vpack.c.b16 %v2721, %v2717
    %v3142 = vpack.c.b16 %v2722, %v2718
    %v3143 = vpack.c.b16 %v2727, %v2723
    %v3144 = vpack.c.b16 %v2728, %v2724
    %v3145 = vpack.c.b16 %v2729, %v2725
    %v3146 = vpack.c.b16 %v2730, %v2726
    %v3147 = vpack.c.b16 %v2735, %v2731
    %v3148 = vpack.c.b16 %v2736, %v2732
    %v3149 = vpack.c.b16 %v2737, %v2733
    %v3150 = vpack.c.b16 %v2738, %v2734
    %v3151 = vpack.c.b16 %v2743, %v2739
    %v3152 = vpack.c.b16 %v2744, %v2740
    %v3153 = vpack.c.b16 %v2745, %v2741
    %v3154 = vpack.c.b16 %v2746, %v2742
    %v3155 = vpack.c.b16 %v2751, %v2747
    %v3156 = vpack.c.b16 %v2752, %v2748
    %v3157 = vpack.c.b16 %v2753, %v2749
    %v3158 = vpack.c.b16 %v2754, %v2750
    %v3159 = vpack.c.b16 %v2759, %v2755
    %v3160 = vpack.c.b16 %v2760, %v2756
    %v3161 = vpack.c.b16 %v2761, %v2757
    %v3162 = vpack.c.b16 %v2762, %v2758
    %v3163 = vpack.c.b16 %v2767, %v2763
    %v3164 = vpack.c.b16 %v2768, %v2764
    %v3165 = vpack.c.b16 %v2769, %v2765
    %v3166 = vpack.c.b16 %v2770, %v2766
    %v3167 = vpack.c.b16 %v2775, %v2771
    %v3168 = vpack.c.b16 %v2776, %v2772
    %v3169 = vpack.c.b16 %v2777, %v2773
    %v3170 = vpack.c.b16 %v2778, %v2774
    %v3171 = vpack.c.b16 %v2783, %v2779
    %v3172 = vpack.c.b16 %v2784, %v2780
    %v3173 = vpack.c.b16 %v2785, %v2781
    %v3174 = vpack.c.b16 %v2786, %v2782
    %v3175 = vpack.c.b16 %v2791, %v2787
    %v3176 = vpack.c.b16 %v2792, %v2788
    %v3177 = vpack.c.b16 %v2793, %v2789
    %v3178 = vpack.c.b16 %v2794, %v2790
    %v3179 = vpack.c.b16 %v2799, %v2795
    %v3180 = vpack.c.b16 %v2800, %v2796
    %v3181 = vpack.c.b16 %v2801, %v2797
    %v3182 = vpack.c.b16 %v2802, %v2798
    %v3183 = vpack.c.b16 %v2807, %v2803
    %v3184 = vpack.c.b16 %v2808, %v2804
    %v3185 = vpack.c.b16 %v2809, %v2805
    %v3186 = vpack.c.b16 %v2810, %v2806
    %v3187 = vpack.c.b16 %v2815, %v2811
    %v3188 = vpack.c.b16 %v2816, %v2812
    %v3189 = vpack.c.b16 %v2817, %v2813
    %v3190 = vpack.c.b16 %v2818, %v2814
    %v3191 = vpack.c.b16 %v2823, %v2819
    %v3192 = vpack.c.b16 %v2824, %v2820
    %v3193 = vpack.c.b16 %v2825, %v2821
    %v3194 = vpack.c.b16 %v2826, %v2822
    %v3195 = vpack.c.b16 %v2831, %v2827
    %v3196 = vpack.c.b16 %v2832, %v2828
    %v3197 = vpack.c.b16 %v2833, %v2829
    %v3198 = vpack.c.b16 %v2834, %v2830
    %v3199 = vpack.c.b16 %v2839, %v2835
    %v3200 = vpack.c.b16 %v2840, %v2836
    %v3201 = vpack.c.b16 %v2841, %v2837
    %v3202 = vpack.c.b16 %v2842, %v2838
    %v3203 = vpack.c.b16 %v2847, %v2843
    %v3204 = vpack.c.b16 %v2848, %v2844
    %v3205 = vpack.c.b16 %v2849, %v2845
    %v3206 = vpack.c.b16 %v2850, %v2846
    %v3207 = vpack.c.b16 %v2855, %v2851
    %v3208 = vpack.c.b16 %v2856, %v2852
    %v3209 = vpack.c.b16 %v2857, %v2853
    %v3210 = vpack.c.b16 %v2858, %v2854
    %v3211 = vpack.c.b16 %v2863, %v2859
    %v3212 = vpack.c.b16 %v2864, %v2860
    %v3213 = vpack.c.b16 %v2865, %v2861
    %v3214 = vpack.c.b16 %v2866, %v2862
    %v3215 = vpack.c.b16 %v2871, %v2867
    %v3216 = vpack.c.b16 %v2872, %v2868
    %v3217 = vpack.c.b16 %v2873, %v2869
    %v3218 = vpack.c.b16 %v2874, %v2870
    %v3219 = vpack.c.b16 %v2879, %v2875
    %v3220 = vpack.c.b16 %v2880, %v2876
    %v3221 = vpack.c.b16 %v2881, %v2877
    %v3222 = vpack.c.b16 %v2882, %v2878
    %v3223 = vpack.c.b16 %v2887, %v2883
    %v3224 = vpack.c.b16 %v2888, %v2884
    %v3225 = vpack.c.b16 %v2889, %v2885
    %v3226 = vpack.c.b16 %v2890, %v2886
    %v3227 = vpack.c.b16 %v2895, %v2891
    %v3228 = vpack.c.b16 %v2896, %v2892
    %v3229 = vpack.c.b16 %v2897, %v2893
    %v3230 = vpack.c.b16 %v2898, %v2894
    %v3231 = vpack.c.b16 %v2903, %v2899
    %v3232 = vpack.c.b16 %v2904, %v2900
    %v3233 = vpack.c.b16 %v2905, %v2901
    %v3234 = vpack.c.b16 %v2906, %v2902
    %v3235 = vpack.c.b16 %v2911, %v2907
    %v3236 = vpack.c.b16 %v2912, %v2908
    %v3237 = vpack.c.b16 %v2913, %v2909
    %v3238 = vpack.c.b16 %v2914, %v2910
    %v3239 = vpack.c.b16 %v2919, %v2915
    %v3240 = vpack.c.b16 %v2920, %v2916
    %v3241 = vpack.c.b16 %v2921, %v2917
    %v3242 = vpack.c.b16 %v2922, %v2918
    %v3243 = vpack.c.b16 %v2927, %v2923
    %v3244 = vpack.c.b16 %v2928, %v2924
    %v3245 = vpack.c.b16 %v2929, %v2925
    %v3246 = vpack.c.b16 %v2930, %v2926
    %v3247 = vpack.c.b16 %v2935, %v2931
    %v3248 = vpack.c.b16 %v2936, %v2932
    %v3249 = vpack.c.b16 %v2937, %v2933
    %v3250 = vpack.c.b16 %v2938, %v2934
    %v3251 = vpack.c.b16 %v2943, %v2939
    %v3252 = vpack.c.b16 %v2944, %v2940
    %v3253 = vpack.c.b16 %v2945, %v2941
    %v3254 = vpack.c.b16 %v2946, %v2942
    %v3255 = vpack.c.b16 %v2951, %v2947
    %v3256 = vpack.c.b16 %v2952, %v2948
    %v3257 = vpack.c.b16 %v2953, %v2949
    %v3258 = vpack.c.b16 %v2954, %v2950
    %v3259 = vpack.c.b16 %v2959, %v2955
    %v3260 = vpack.c.b16 %v2960, %v2956
    %v3261 = vpack.c.b16 %v2961, %v2957
    %v3262 = vpack.c.b16 %v2962, %v2958
    %v3263 = vpack.c.b16 %v2967, %v2963
    %v3264 = vpack.c.b16 %v2968, %v2964
    %v3265 = vpack.c.b16 %v2969, %v2965
    %v3266 = vpack.c.b16 %v2970, %v2966
    %v3267 = vpack.c.b16 %v2975, %v2971
    %v3268 = vpack.c.b16 %v2976, %v2972
    %v3269 = vpack.c.b16 %v2977, %v2973
    %v3270 = vpack.c.b16 %v2978, %v2974
    %v3271 = vpack.c.b16 %v2983, %v2979
    %v3272 = vpack.c.b16 %v2984, %v2980
    %v3273 = vpack.c.b16 %v2985, %v2981
    %v3274 = vpack.c.b16 %v2986, %v2982
    %v3275 = vpack.c.b16 %v2991, %v2987
    %v3276 = vpack.c.b16 %v2992, %v2988
    %v3277 = vpack.c.b16 %v2993, %v2989
    %v3278 = vpack.c.b16 %v2994, %v2990
    %v3279 = vpack.c.b16 %v2999, %v2995
    %v3280 = vpack.c.b16 %v3000, %v2996
    %v3281 = vpack.c.b16 %v3001, %v2997
    %v3282 = vpack.c.b16 %v3002, %v2998
    %v3283 = vpack.c.b16 %v3007, %v3003
    %v3284 = vpack.c.b16 %v3008, %v3004
    %v3285 = vpack.c.b16 %v3009, %v3005
    %v3286 = vpack.c.b16 %v3010, %v3006
    %v3287 = vpack.c.b16 %v3015, %v3011
    %v3288 = vpack.c.b16 %v3016, %v3012
    %v3289 = vpack.c.b16 %v3017, %v3013
    %v3290 = vpack.c.b16 %v3018, %v3014
    %v3291 = vpack.c.b16 %v3023, %v3019
    %v3292 = vpack.c.b16 %v3024, %v3020
    %v3293 = vpack.c.b16 %v3025, %v3021
    %v3294 = vpack.c.b16 %v3026, %v3022
    %v3295 = vpack.c.b16 %v3031, %v3027
    %v3296 = vpack.c.b16 %v3032, %v3028
    %v3297 = vpack.c.b16 %v3033, %v3029
    %v3298 = vpack.c.b16 %v3034, %v3030
    %v3299 = vpack.c.b16 %v3039, %v3035
    %v3300 = vpack.c.b16 %v3040, %v3036
    %v3301 = vpack.c.b16 %v3041, %v3037
    %v3302 = vpack.c.b16 %v3042, %v3038
    %v3303 = vpack.c.b16 %v3047, %v3043
    %v3304 = vpack.c.b16 %v3048, %v3044
    %v3305 = vpack.c.b16 %v3049, %v3045
    %v3306 = vpack.c.b16 %v3050, %v3046
    %3563 = vmatprep.subr.bf16.mxu0 %v3052
    %3564 = vmatpush1.bf16.msra.mxu0 %v3051
    %3565 = vmatprep.subr.bf16.mxu0 %v3056
    %3566 = vmatpush1.bf16.msra.mxu0 %v3055
    %3567 = vmatprep.subr.bf16.mxu0 %v3060
    %3568 = vmatpush1.bf16.msra.mxu0 %v3059
    %3569 = vmatprep.subr.bf16.mxu0 %v3064
    %3570 = vmatpush1.bf16.msra.mxu0 %v3063
    %3571 = vmatprep.subr.bf16.mxu0 %v3068
    %3572 = vmatpush1.bf16.msra.mxu0 %v3067
    %3573 = vmatprep.subr.bf16.mxu0 %v3072
    %3574 = vmatpush1.bf16.msra.mxu0 %v3071
    %3575 = vmatprep.subr.bf16.mxu0 %v3076
    %3576 = vmatpush1.bf16.msra.mxu0 %v3075
    %3577 = vmatprep.subr.bf16.mxu0 %v3080
    %3578 = vmatpush1.bf16.msra.mxu0 %v3079
    %3579 = vmatprep.subr.bf16.mxu0 %v3084
    %3580 = vmatpush1.bf16.msra.mxu0 %v3083
    %3581 = vmatprep.subr.bf16.mxu0 %v3088
    %3582 = vmatpush1.bf16.msra.mxu0 %v3087
    %3583 = vmatprep.subr.bf16.mxu0 %v3092
    %3584 = vmatpush1.bf16.msra.mxu0 %v3091
    %3585 = vmatprep.subr.bf16.mxu0 %v3096
    %3586 = vmatpush1.bf16.msra.mxu0 %v3095
    %3587 = vmatprep.subr.bf16.mxu0 %v3100
    %3588 = vmatpush1.bf16.msra.mxu0 %v3099
    %3589 = vmatprep.subr.bf16.mxu0 %v3104
    %3590 = vmatpush1.bf16.msra.mxu0 %v3103
    %3591 = vmatprep.subr.bf16.mxu0 %v3108
    %3592 = vmatpush1.bf16.msra.mxu0 %v3107
    %3593 = vmatprep.subr.bf16.mxu0 %v3112
    %3594 = vmatpush1.bf16.msra.mxu0 %v3111
    %3595 = vmatprep.mubr.bf16.mxu0 %v2268
    %3596 = vmatmul.mubr.bf16.gmra.mrb[0].mxu0 %v2267
    %v3597 = vpop.f32.mrb[0].mxu0
    %v3598 = vadd.f32 %v2085, %v3597
    %v3599 = vpop.f32.mrb[0].mxu0
    %v3600 = vadd.f32 %v2087, %v3599
    %v3601 = vpop.f32.mrb[0].mxu0
    %v3602 = vpop.f32.mrb[0].mxu0
    %3603 = vdwg.mxu0
    %3604 = vmatprep.subr.bf16.mxu0 %v3116
    %3605 = vmatpush1.bf16.msra.mxu0 %v3115
    %3606 = vmatprep.subr.bf16.mxu0 %v3120
    %3607 = vmatpush1.bf16.msra.mxu0 %v3119
    %3608 = vmatprep.subr.bf16.mxu0 %v3124
    %3609 = vmatpush1.bf16.msra.mxu0 %v3123
    %3610 = vmatprep.subr.bf16.mxu0 %v3128
    %3611 = vmatpush1.bf16.msra.mxu0 %v3127
    %3612 = vmatprep.subr.bf16.mxu0 %v3132
    %3613 = vmatpush1.bf16.msra.mxu0 %v3131
    %3614 = vmatprep.subr.bf16.mxu0 %v3136
    %3615 = vmatpush1.bf16.msra.mxu0 %v3135
    %3616 = vmatprep.subr.bf16.mxu0 %v3140
    %3617 = vmatpush1.bf16.msra.mxu0 %v3139
    %3618 = vmatprep.subr.bf16.mxu0 %v3144
    %3619 = vmatpush1.bf16.msra.mxu0 %v3143
    %3620 = vmatprep.subr.bf16.mxu0 %v3148
    %3621 = vmatpush1.bf16.msra.mxu0 %v3147
    %3622 = vmatprep.subr.bf16.mxu0 %v3152
    %3623 = vmatpush1.bf16.msra.mxu0 %v3151
    %3624 = vmatprep.subr.bf16.mxu0 %v3156
    %3625 = vmatpush1.bf16.msra.mxu0 %v3155
    %3626 = vmatprep.subr.bf16.mxu0 %v3160
    %3627 = vmatpush1.bf16.msra.mxu0 %v3159
    %3628 = vmatprep.subr.bf16.mxu0 %v3164
    %3629 = vmatpush1.bf16.msra.mxu0 %v3163
    %3630 = vmatprep.subr.bf16.mxu0 %v3168
    %3631 = vmatpush1.bf16.msra.mxu0 %v3167
    %3632 = vmatprep.subr.bf16.mxu0 %v3172
    %3633 = vmatpush1.bf16.msra.mxu0 %v3171
    %3634 = vmatprep.subr.bf16.mxu0 %v3176
    %3635 = vmatpush1.bf16.msra.mxu0 %v3175
    %3636 = vmatprep.mubr.bf16.mxu0 %v2270
    %3637 = vmatmul.mubr.bf16.gmra.mrb[0].mxu0 %v2269
    %v3638 = vpop.f32.mrb[0].mxu0
    %v3639 = vadd.f32 %v3598, %v3638
    %v3640 = vpop.f32.mrb[0].mxu0
    %v3641 = vadd.f32 %v3600, %v3640
    %v3642 = vpop.f32.mrb[0].mxu0
    %v3643 = vpop.f32.mrb[0].mxu0
    %3644 = vdwg.mxu0
    %3645 = vmatprep.subr.bf16.mxu0 %v3180
    %3646 = vmatpush1.bf16.msra.mxu0 %v3179
    %3647 = vmatprep.subr.bf16.mxu0 %v3184
    %3648 = vmatpush1.bf16.msra.mxu0 %v3183
    %3649 = vmatprep.subr.bf16.mxu0 %v3188
    %3650 = vmatpush1.bf16.msra.mxu0 %v3187
    %3651 = vmatprep.subr.bf16.mxu0 %v3192
    %3652 = vmatpush1.bf16.msra.mxu0 %v3191
    %3653 = vmatprep.subr.bf16.mxu0 %v3196
    %3654 = vmatpush1.bf16.msra.mxu0 %v3195
    %3655 = vmatprep.subr.bf16.mxu0 %v3200
    %3656 = vmatpush1.bf16.msra.mxu0 %v3199
    %3657 = vmatprep.subr.bf16.mxu0 %v3204
    %3658 = vmatpush1.bf16.msra.mxu0 %v3203
    %3659 = vmatprep.subr.bf16.mxu0 %v3208
    %3660 = vmatpush1.bf16.msra.mxu0 %v3207
    %3661 = vmatprep.subr.bf16.mxu0 %v3212
    %3662 = vmatpush1.bf16.msra.mxu0 %v3211
    %3663 = vmatprep.subr.bf16.mxu0 %v3216
    %3664 = vmatpush1.bf16.msra.mxu0 %v3215
    %3665 = vmatprep.subr.bf16.mxu0 %v3220
    %3666 = vmatpush1.bf16.msra.mxu0 %v3219
    %3667 = vmatprep.subr.bf16.mxu0 %v3224
    %3668 = vmatpush1.bf16.msra.mxu0 %v3223
    %3669 = vmatprep.subr.bf16.mxu0 %v3228
    %3670 = vmatpush1.bf16.msra.mxu0 %v3227
    %3671 = vmatprep.subr.bf16.mxu0 %v3232
    %3672 = vmatpush1.bf16.msra.mxu0 %v3231
    %3673 = vmatprep.subr.bf16.mxu0 %v3236
    %3674 = vmatpush1.bf16.msra.mxu0 %v3235
    %3675 = vmatprep.subr.bf16.mxu0 %v3240
    %3676 = vmatpush1.bf16.msra.mxu0 %v3239
    %3677 = vmatprep.mubr.bf16.mxu0 %v2272
    %3678 = vmatmul.mubr.bf16.gmra.mrb[0].mxu0 %v2271
    %v3679 = vpop.f32.mrb[0].mxu0
    %v3680 = vadd.f32 %v3639, %v3679
    %v3681 = vpop.f32.mrb[0].mxu0
    %v3682 = vadd.f32 %v3641, %v3681
    %v3683 = vpop.f32.mrb[0].mxu0
    %v3684 = vpop.f32.mrb[0].mxu0
    %3685 = vdwg.mxu0
    %3686 = vmatprep.subr.bf16.mxu0 %v3244
    %3687 = vmatpush1.bf16.msra.mxu0 %v3243
    %3688 = vmatprep.subr.bf16.mxu0 %v3248
    %3689 = vmatpush1.bf16.msra.mxu0 %v3247
    %3690 = vmatprep.subr.bf16.mxu0 %v3252
    %3691 = vmatpush1.bf16.msra.mxu0 %v3251
    %3692 = vmatprep.subr.bf16.mxu0 %v3256
    %3693 = vmatpush1.bf16.msra.mxu0 %v3255
    %3694 = vmatprep.subr.bf16.mxu0 %v3260
    %3695 = vmatpush1.bf16.msra.mxu0 %v3259
    %3696 = vmatprep.subr.bf16.mxu0 %v3264
    %3697 = vmatpush1.bf16.msra.mxu0 %v3263
    %3698 = vmatprep.subr.bf16.mxu0 %v3268
    %3699 = vmatpush1.bf16.msra.mxu0 %v3267
    %3700 = vmatprep.subr.bf16.mxu0 %v3272
    %3701 = vmatpush1.bf16.msra.mxu0 %v3271
    %3702 = vmatprep.subr.bf16.mxu0 %v3276
    %3703 = vmatpush1.bf16.msra.mxu0 %v3275
    %3704 = vmatprep.subr.bf16.mxu0 %v3280
    %3705 = vmatpush1.bf16.msra.mxu0 %v3279
    %3706 = vmatprep.subr.bf16.mxu0 %v3284
    %3707 = vmatpush1.bf16.msra.mxu0 %v3283
    %3708 = vmatprep.subr.bf16.mxu0 %v3288
    %3709 = vmatpush1.bf16.msra.mxu0 %v3287
    %3710 = vmatprep.subr.bf16.mxu0 %v3292
    %3711 = vmatpush1.bf16.msra.mxu0 %v3291
    %3712 = vmatprep.subr.bf16.mxu0 %v3296
    %3713 = vmatpush1.bf16.msra.mxu0 %v3295
    %3714 = vmatprep.subr.bf16.mxu0 %v3300
    %3715 = vmatpush1.bf16.msra.mxu0 %v3299
    %3716 = vmatprep.subr.bf16.mxu0 %v3304
    %3717 = vmatpush1.bf16.msra.mxu0 %v3303
    %3718 = vmatprep.mubr.bf16.mxu0 %v2274
    %3719 = vmatmul.mubr.bf16.gmra.mrb[0].mxu0 %v2273
    %v3720 = vpop.f32.mrb[0].mxu0
    %v3721 = vadd.f32 %v3680, %v3720
    %v3722 = vpop.f32.mrb[0].mxu0
    %v3723 = vadd.f32 %v3682, %v3722
    %v3724 = vpop.f32.mrb[0].mxu0
    %v3725 = vpop.f32.mrb[0].mxu0
    %3726 = vdwg.mxu0
    %3727 = vmatprep.subr.bf16.mxu0 %v3054
    %3728 = vmatpush1.bf16.msra.mxu0 %v3053
    %3729 = vmatprep.subr.bf16.mxu0 %v3058
    %3730 = vmatpush1.bf16.msra.mxu0 %v3057
    %3731 = vmatprep.subr.bf16.mxu0 %v3062
    %3732 = vmatpush1.bf16.msra.mxu0 %v3061
    %3733 = vmatprep.subr.bf16.mxu0 %v3066
    %3734 = vmatpush1.bf16.msra.mxu0 %v3065
    %3735 = vmatprep.subr.bf16.mxu0 %v3070
    %3736 = vmatpush1.bf16.msra.mxu0 %v3069
    %3737 = vmatprep.subr.bf16.mxu0 %v3074
    %3738 = vmatpush1.bf16.msra.mxu0 %v3073
    %3739 = vmatprep.subr.bf16.mxu0 %v3078
    %3740 = vmatpush1.bf16.msra.mxu0 %v3077
    %3741 = vmatprep.subr.bf16.mxu0 %v3082
    %3742 = vmatpush1.bf16.msra.mxu0 %v3081
    %3743 = vmatprep.subr.bf16.mxu0 %v3086
    %3744 = vmatpush1.bf16.msra.mxu0 %v3085
    %3745 = vmatprep.subr.bf16.mxu0 %v3090
    %3746 = vmatpush1.bf16.msra.mxu0 %v3089
    %3747 = vmatprep.subr.bf16.mxu0 %v3094
    %3748 = vmatpush1.bf16.msra.mxu0 %v3093
    %3749 = vmatprep.subr.bf16.mxu0 %v3098
    %3750 = vmatpush1.bf16.msra.mxu0 %v3097
    %3751 = vmatprep.subr.bf16.mxu0 %v3102
    %3752 = vmatpush1.bf16.msra.mxu0 %v3101
    %3753 = vmatprep.subr.bf16.mxu0 %v3106
    %3754 = vmatpush1.bf16.msra.mxu0 %v3105
    %3755 = vmatprep.subr.bf16.mxu0 %v3110
    %3756 = vmatpush1.bf16.msra.mxu0 %v3109
    %3757 = vmatprep.subr.bf16.mxu0 %v3114
    %3758 = vmatpush1.bf16.msra.mxu0 %v3113
    %3759 = vmatprep.mubr.bf16.mxu0 %v2268
    %3760 = vmatmul.mubr.bf16.gmra.mrb[0].mxu0 %v2267
    %v3761 = vpop.f32.mrb[0].mxu0
    %v3762 = vadd.f32 %v2249, %v3761
    %v3763 = vpop.f32.mrb[0].mxu0
    %v3764 = vadd.f32 %v2251, %v3763
    %v3765 = vpop.f32.mrb[0].mxu0
    %v3766 = vpop.f32.mrb[0].mxu0
    %3767 = vdwg.mxu0
    %3768 = vmatprep.subr.bf16.mxu0 %v3118
    %3769 = vmatpush1.bf16.msra.mxu0 %v3117
    %3770 = vmatprep.subr.bf16.mxu0 %v3122
    %3771 = vmatpush1.bf16.msra.mxu0 %v3121
    %3772 = vmatprep.subr.bf16.mxu0 %v3126
    %3773 = vmatpush1.bf16.msra.mxu0 %v3125
    %3774 = vmatprep.subr.bf16.mxu0 %v3130
    %3775 = vmatpush1.bf16.msra.mxu0 %v3129
    %3776 = vmatprep.subr.bf16.mxu0 %v3134
    %3777 = vmatpush1.bf16.msra.mxu0 %v3133
    %3778 = vmatprep.subr.bf16.mxu0 %v3138
    %3779 = vmatpush1.bf16.msra.mxu0 %v3137
    %3780 = vmatprep.subr.bf16.mxu0 %v3142
    %3781 = vmatpush1.bf16.msra.mxu0 %v3141
    %3782 = vmatprep.subr.bf16.mxu0 %v3146
    %3783 = vmatpush1.bf16.msra.mxu0 %v3145
    %3784 = vmatprep.subr.bf16.mxu0 %v3150
    %3785 = vmatpush1.bf16.msra.mxu0 %v3149
    %3786 = vmatprep.subr.bf16.mxu0 %v3154
    %3787 = vmatpush1.bf16.msra.mxu0 %v3153
    %3788 = vmatprep.subr.bf16.mxu0 %v3158
    %3789 = vmatpush1.bf16.msra.mxu0 %v3157
    %3790 = vmatprep.subr.bf16.mxu0 %v3162
    %3791 = vmatpush1.bf16.msra.mxu0 %v3161
    %3792 = vmatprep.subr.bf16.mxu0 %v3166
    %3793 = vmatpush1.bf16.msra.mxu0 %v3165
    %3794 = vmatprep.subr.bf16.mxu0 %v3170
    %3795 = vmatpush1.bf16.msra.mxu0 %v3169
    %3796 = vmatprep.subr.bf16.mxu0 %v3174
    %3797 = vmatpush1.bf16.msra.mxu0 %v3173
    %3798 = vmatprep.subr.bf16.mxu0 %v3178
    %3799 = vmatpush1.bf16.msra.mxu0 %v3177
    %3800 = vmatprep.mubr.bf16.mxu0 %v2270
    %3801 = vmatmul.mubr.bf16.gmra.mrb[0].mxu0 %v2269
    %v3802 = vpop.f32.mrb[0].mxu0
    %v3803 = vadd.f32 %v3762, %v3802
    %v3804 = vpop.f32.mrb[0].mxu0
    %v3805 = vadd.f32 %v3764, %v3804
    %v3806 = vpop.f32.mrb[0].mxu0
    %v3807 = vpop.f32.mrb[0].mxu0
    %3808 = vdwg.mxu0
    %3809 = vmatprep.subr.bf16.mxu0 %v3182
    %3810 = vmatpush1.bf16.msra.mxu0 %v3181
    %3811 = vmatprep.subr.bf16.mxu0 %v3186
    %3812 = vmatpush1.bf16.msra.mxu0 %v3185
    %3813 = vmatprep.subr.bf16.mxu0 %v3190
    %3814 = vmatpush1.bf16.msra.mxu0 %v3189
    %3815 = vmatprep.subr.bf16.mxu0 %v3194
    %3816 = vmatpush1.bf16.msra.mxu0 %v3193
    %3817 = vmatprep.subr.bf16.mxu0 %v3198
    %3818 = vmatpush1.bf16.msra.mxu0 %v3197
    %3819 = vmatprep.subr.bf16.mxu0 %v3202
    %3820 = vmatpush1.bf16.msra.mxu0 %v3201
    %3821 = vmatprep.subr.bf16.mxu0 %v3206
    %3822 = vmatpush1.bf16.msra.mxu0 %v3205
    %3823 = vmatprep.subr.bf16.mxu0 %v3210
    %3824 = vmatpush1.bf16.msra.mxu0 %v3209
    %3825 = vmatprep.subr.bf16.mxu0 %v3214
    %3826 = vmatpush1.bf16.msra.mxu0 %v3213
    %3827 = vmatprep.subr.bf16.mxu0 %v3218
    %3828 = vmatpush1.bf16.msra.mxu0 %v3217
    %3829 = vmatprep.subr.bf16.mxu0 %v3222
    %3830 = vmatpush1.bf16.msra.mxu0 %v3221
    %3831 = vmatprep.subr.bf16.mxu0 %v3226
    %3832 = vmatpush1.bf16.msra.mxu0 %v3225
    %3833 = vmatprep.subr.bf16.mxu0 %v3230
    %3834 = vmatpush1.bf16.msra.mxu0 %v3229
    %3835 = vmatprep.subr.bf16.mxu0 %v3234
    %3836 = vmatpush1.bf16.msra.mxu0 %v3233
    %3837 = vmatprep.subr.bf16.mxu0 %v3238
    %3838 = vmatpush1.bf16.msra.mxu0 %v3237
    %3839 = vmatprep.subr.bf16.mxu0 %v3242
    %3840 = vmatpush1.bf16.msra.mxu0 %v3241
    %3841 = vmatprep.mubr.bf16.mxu0 %v2272
    %3842 = vmatmul.mubr.bf16.gmra.mrb[0].mxu0 %v2271
    %v3843 = vpop.f32.mrb[0].mxu0
    %v3844 = vadd.f32 %v3803, %v3843
    %v3845 = vpop.f32.mrb[0].mxu0
    %v3846 = vadd.f32 %v3805, %v3845
    %v3847 = vpop.f32.mrb[0].mxu0
    %v3848 = vpop.f32.mrb[0].mxu0
    %3849 = vdwg.mxu0
    %3850 = vmatprep.subr.bf16.mxu0 %v3246
    %3851 = vmatpush1.bf16.msra.mxu0 %v3245
    %3852 = vmatprep.subr.bf16.mxu0 %v3250
    %3853 = vmatpush1.bf16.msra.mxu0 %v3249
    %3854 = vmatprep.subr.bf16.mxu0 %v3254
    %3855 = vmatpush1.bf16.msra.mxu0 %v3253
    %3856 = vmatprep.subr.bf16.mxu0 %v3258
    %3857 = vmatpush1.bf16.msra.mxu0 %v3257
    %3858 = vmatprep.subr.bf16.mxu0 %v3262
    %3859 = vmatpush1.bf16.msra.mxu0 %v3261
    %3860 = vmatprep.subr.bf16.mxu0 %v3266
    %3861 = vmatpush1.bf16.msra.mxu0 %v3265
    %3862 = vmatprep.subr.bf16.mxu0 %v3270
    %3863 = vmatpush1.bf16.msra.mxu0 %v3269
    %3864 = vmatprep.subr.bf16.mxu0 %v3274
    %3865 = vmatpush1.bf16.msra.mxu0 %v3273
    %3866 = vmatprep.subr.bf16.mxu0 %v3278
    %3867 = vmatpush1.bf16.msra.mxu0 %v3277
    %3868 = vmatprep.subr.bf16.mxu0 %v3282
    %3869 = vmatpush1.bf16.msra.mxu0 %v3281
    %3870 = vmatprep.subr.bf16.mxu0 %v3286
    %3871 = vmatpush1.bf16.msra.mxu0 %v3285
    %3872 = vmatprep.subr.bf16.mxu0 %v3290
    %3873 = vmatpush1.bf16.msra.mxu0 %v3289
    %3874 = vmatprep.subr.bf16.mxu0 %v3294
    %3875 = vmatpush1.bf16.msra.mxu0 %v3293
    %3876 = vmatprep.subr.bf16.mxu0 %v3298
    %3877 = vmatpush1.bf16.msra.mxu0 %v3297
    %3878 = vmatprep.subr.bf16.mxu0 %v3302
    %3879 = vmatpush1.bf16.msra.mxu0 %v3301
    %3880 = vmatprep.subr.bf16.mxu0 %v3306
    %3881 = vmatpush1.bf16.msra.mxu0 %v3305
    %3882 = vmatprep.mubr.bf16.mxu0 %v2274
    %3883 = vmatmul.mubr.bf16.gmra.mrb[0].mxu0 %v2273
    %v3884 = vpop.f32.mrb[0].mxu0
    %v3885 = vadd.f32 %v3844, %v3884
    %v3886 = vpop.f32.mrb[0].mxu0
    %v3887 = vadd.f32 %v3846, %v3886
    %v3888 = vpop.f32.mrb[0].mxu0
    %v3889 = vpop.f32.mrb[0].mxu0
    %3890 = vdwg.mxu0
    %v3891 = vld [vmem:[%s4] sm:$0xf]
    %v3893 = vlaneseq
    %v3894 = vshrl.u32 %v3893, 7
    %v3895 = vsub.s32 0, %v3894
    %v3896 = vrot.slane %v3891, %v3895
    %v3897 = vlaneseq
    %v3898 = vshrl.u32 %v3897, 7
    %v3899 = vsub.s32 1, %v3898
    %v3900 = vrot.slane %v3891, %v3899
    %v3901 = vlaneseq
    %v3902 = vshrl.u32 %v3901, 7
    %v3903 = vsub.s32 2, %v3902
    %v3904 = vrot.slane %v3891, %v3903
    %v3905 = vlaneseq
    %v3906 = vshrl.u32 %v3905, 7
    %v3907 = vsub.s32 3, %v3906
    %v3908 = vrot.slane %v3891, %v3907
    %v3913 = vadd.f32 %v3721, %v3896
    %v3914 = vadd.f32 %v3723, %v3900
    %v3915 = vadd.f32 %v3885, %v3904
    %v3916 = vadd.f32 %v3887, %v3908
    %v3917 = vmax.f32 %v3913, 0.0
    %v3918 = vmax.f32 %v3914, 0.0
    %v3919 = vmax.f32 %v3915, 0.0
    %v3920 = vmax.f32 %v3916, 0.0
    %v3921 = vpack.c.bf16 %v3917, %v3917
    %v3922 = vpack.c.bf16 %v3918, %v3918
    %v3923 = vpack.c.bf16 %v3919, %v3919
    %v3924 = vpack.c.bf16 %v3920, %v3920
    %v3925 = vld [vmem:[#allocation10] sm:$0xf]
    %v3926 = vld [vmem:[#allocation10 + $0x4] sm:$0xf]
    %v3927 = vld [vmem:[#allocation10 + $0x8] sm:$0xf]
    %v3928 = vld [vmem:[#allocation10 + $0xc] sm:$0xf]
    %v3929 = vld [vmem:[#allocation10 + $0x10] sm:$0xf]
    %v3930 = vld [vmem:[#allocation10 + $0x14] sm:$0xf]
    %v3931 = vld [vmem:[#allocation10 + $0x18] sm:$0xf]
    %v3932 = vld [vmem:[#allocation10 + $0x1c] sm:$0xf]
    %v3933 = vld [vmem:[#allocation10 + $0x20] sm:$0xf]
    %v3934 = vld [vmem:[#allocation10 + $0x24] sm:$0xf]
    %v3935 = vld [vmem:[#allocation10 + $0x28] sm:$0xf]
    %v3936 = vld [vmem:[#allocation10 + $0x2c] sm:$0xf]
    %v3937 = vld [vmem:[#allocation10 + $0x30] sm:$0xf]
    %v3938 = vld [vmem:[#allocation10 + $0x34] sm:$0xf]
    %v3939 = vld [vmem:[#allocation10 + $0x38] sm:$0xf]
    %v3940 = vld [vmem:[#allocation10 + $0x3c] sm:$0xf]
    %v3941 = vld [vmem:[#allocation10 + $0x40] sm:$0xf]
    %v3942 = vld [vmem:[#allocation10 + $0x44] sm:$0xf]
    %v3943 = vld [vmem:[#allocation10 + $0x48] sm:$0xf]
    %v3944 = vld [vmem:[#allocation10 + $0x4c] sm:$0xf]
    %v3945 = vld [vmem:[#allocation10 + $0x50] sm:$0xf]
    %v3946 = vld [vmem:[#allocation10 + $0x54] sm:$0xf]
    %v3947 = vld [vmem:[#allocation10 + $0x58] sm:$0xf]
    %v3948 = vld [vmem:[#allocation10 + $0x5c] sm:$0xf]
    %v3949 = vld [vmem:[#allocation10 + $0x60] sm:$0xf]
    %v3950 = vld [vmem:[#allocation10 + $0x64] sm:$0xf]
    %v3951 = vld [vmem:[#allocation10 + $0x68] sm:$0xf]
    %v3952 = vld [vmem:[#allocation10 + $0x6c] sm:$0xf]
    %v3953 = vld [vmem:[#allocation10 + $0x70] sm:$0xf]
    %v3954 = vld [vmem:[#allocation10 + $0x74] sm:$0xf]
    %v3955 = vld [vmem:[#allocation10 + $0x78] sm:$0xf]
    %v3956 = vld [vmem:[#allocation10 + $0x7c] sm:$0xf]
    %v3957 = vld [vmem:[#allocation10 + $0x80] sm:$0xf]
    %v3958 = vld [vmem:[#allocation10 + $0x84] sm:$0xf]
    %v3959 = vld [vmem:[#allocation10 + $0x88] sm:$0xf]
    %v3960 = vld [vmem:[#allocation10 + $0x8c] sm:$0xf]
    %v3961 = vld [vmem:[#allocation10 + $0x90] sm:$0xf]
    %v3962 = vld [vmem:[#allocation10 + $0x94] sm:$0xf]
    %v3963 = vld [vmem:[#allocation10 + $0x98] sm:$0xf]
    %v3964 = vld [vmem:[#allocation10 + $0x9c] sm:$0xf]
    %v3965 = vld [vmem:[#allocation10 + $0xa0] sm:$0xf]
    %v3966 = vld [vmem:[#allocation10 + $0xa4] sm:$0xf]
    %v3967 = vld [vmem:[#allocation10 + $0xa8] sm:$0xf]
    %v3968 = vld [vmem:[#allocation10 + $0xac] sm:$0xf]
    %v3969 = vld [vmem:[#allocation10 + $0xb0] sm:$0xf]
    %v3970 = vld [vmem:[#allocation10 + $0xb4] sm:$0xf]
    %v3971 = vld [vmem:[#allocation10 + $0xb8] sm:$0xf]
    %v3972 = vld [vmem:[#allocation10 + $0xbc] sm:$0xf]
    %v3973 = vld [vmem:[#allocation10 + $0xc0] sm:$0xf]
    %v3974 = vld [vmem:[#allocation10 + $0xc4] sm:$0xf]
    %v3975 = vld [vmem:[#allocation10 + $0xc8] sm:$0xf]
    %v3976 = vld [vmem:[#allocation10 + $0xcc] sm:$0xf]
    %v3977 = vld [vmem:[#allocation10 + $0xd0] sm:$0xf]
    %v3978 = vld [vmem:[#allocation10 + $0xd4] sm:$0xf]
    %v3979 = vld [vmem:[#allocation10 + $0xd8] sm:$0xf]
    %v3980 = vld [vmem:[#allocation10 + $0xdc] sm:$0xf]
    %v3981 = vld [vmem:[#allocation10 + $0xe0] sm:$0xf]
    %v3982 = vld [vmem:[#allocation10 + $0xe4] sm:$0xf]
    %v3983 = vld [vmem:[#allocation10 + $0xe8] sm:$0xf]
    %v3984 = vld [vmem:[#allocation10 + $0xec] sm:$0xf]
    %v3985 = vld [vmem:[#allocation10 + $0xf0] sm:$0xf]
    %v3986 = vld [vmem:[#allocation10 + $0xf4] sm:$0xf]
    %v3987 = vld [vmem:[#allocation10 + $0xf8] sm:$0xf]
    %v3988 = vld [vmem:[#allocation10 + $0xfc] sm:$0xf]
    %v3989 = vld [vmem:[%s6] sm:$0x1]
    %v3991 = vlaneseq
    %v3992 = vshrl.u32 %v3991, 7
    %v3993 = vsub.s32 0, %v3992
    %v3994 = vrot.slane %v3989, %v3993
    %v4060 = vunpack.c.l.b16 %v3925
    %v4061 = vunpack.c.l.b16 %v3926
    %v4062 = vunpack.c.l.b16 %v3927
    %v4063 = vunpack.c.l.b16 %v3928
    %v4064 = vunpack.c.l.b16 %v3929
    %v4065 = vunpack.c.l.b16 %v3930
    %v4066 = vunpack.c.l.b16 %v3931
    %v4067 = vunpack.c.l.b16 %v3932
    %v4068 = vunpack.c.l.b16 %v3933
    %v4069 = vunpack.c.l.b16 %v3934
    %v4070 = vunpack.c.l.b16 %v3935
    %v4071 = vunpack.c.l.b16 %v3936
    %v4072 = vunpack.c.l.b16 %v3937
    %v4073 = vunpack.c.l.b16 %v3938
    %v4074 = vunpack.c.l.b16 %v3939
    %v4075 = vunpack.c.l.b16 %v3940
    %v4076 = vunpack.c.l.b16 %v3941
    %v4077 = vunpack.c.l.b16 %v3942
    %v4078 = vunpack.c.l.b16 %v3943
    %v4079 = vunpack.c.l.b16 %v3944
    %v4080 = vunpack.c.l.b16 %v3945
    %v4081 = vunpack.c.l.b16 %v3946
    %v4082 = vunpack.c.l.b16 %v3947
    %v4083 = vunpack.c.l.b16 %v3948
    %v4084 = vunpack.c.l.b16 %v3949
    %v4085 = vunpack.c.l.b16 %v3950
    %v4086 = vunpack.c.l.b16 %v3951
    %v4087 = vunpack.c.l.b16 %v3952
    %v4088 = vunpack.c.l.b16 %v3953
    %v4089 = vunpack.c.l.b16 %v3954
    %v4090 = vunpack.c.l.b16 %v3955
    %v4091 = vunpack.c.l.b16 %v3956
    %v4092 = vunpack.c.l.b16 %v3957
    %v4093 = vunpack.c.l.b16 %v3958
    %v4094 = vunpack.c.l.b16 %v3959
    %v4095 = vunpack.c.l.b16 %v3960
    %v4096 = vunpack.c.l.b16 %v3961
    %v4097 = vunpack.c.l.b16 %v3962
    %v4098 = vunpack.c.l.b16 %v3963
    %v4099 = vunpack.c.l.b16 %v3964
    %v4100 = vunpack.c.l.b16 %v3965
    %v4101 = vunpack.c.l.b16 %v3966
    %v4102 = vunpack.c.l.b16 %v3967
    %v4103 = vunpack.c.l.b16 %v3968
    %v4104 = vunpack.c.l.b16 %v3969
    %v4105 = vunpack.c.l.b16 %v3970
    %v4106 = vunpack.c.l.b16 %v3971
    %v4107 = vunpack.c.l.b16 %v3972
    %v4108 = vunpack.c.l.b16 %v3973
    %v4109 = vunpack.c.l.b16 %v3974
    %v4110 = vunpack.c.l.b16 %v3975
    %v4111 = vunpack.c.l.b16 %v3976
    %v4112 = vunpack.c.l.b16 %v3977
    %v4113 = vunpack.c.l.b16 %v3978
    %v4114 = vunpack.c.l.b16 %v3979
    %v4115 = vunpack.c.l.b16 %v3980
    %v4116 = vunpack.c.l.b16 %v3981
    %v4117 = vunpack.c.l.b16 %v3982
    %v4118 = vunpack.c.l.b16 %v3983
    %v4119 = vunpack.c.l.b16 %v3984
    %v4120 = vunpack.c.l.b16 %v3985
    %v4121 = vunpack.c.l.b16 %v3986
    %v4122 = vunpack.c.l.b16 %v3987
    %v4123 = vunpack.c.l.b16 %v3988
    %v4124 = vpack.c.b16 %v4061, %v4060
    %v4125 = vpack.c.b16 %v4063, %v4062
    %v4126 = vpack.c.b16 %v4065, %v4064
    %v4127 = vpack.c.b16 %v4067, %v4066
    %v4128 = vpack.c.b16 %v4069, %v4068
    %v4129 = vpack.c.b16 %v4071, %v4070
    %v4130 = vpack.c.b16 %v4073, %v4072
    %v4131 = vpack.c.b16 %v4075, %v4074
    %v4132 = vpack.c.b16 %v4077, %v4076
    %v4133 = vpack.c.b16 %v4079, %v4078
    %v4134 = vpack.c.b16 %v4081, %v4080
    %v4135 = vpack.c.b16 %v4083, %v4082
    %v4136 = vpack.c.b16 %v4085, %v4084
    %v4137 = vpack.c.b16 %v4087, %v4086
    %v4138 = vpack.c.b16 %v4089, %v4088
    %v4139 = vpack.c.b16 %v4091, %v4090
    %v4140 = vpack.c.b16 %v4093, %v4092
    %v4141 = vpack.c.b16 %v4095, %v4094
    %v4142 = vpack.c.b16 %v4097, %v4096
    %v4143 = vpack.c.b16 %v4099, %v4098
    %v4144 = vpack.c.b16 %v4101, %v4100
    %v4145 = vpack.c.b16 %v4103, %v4102
    %v4146 = vpack.c.b16 %v4105, %v4104
    %v4147 = vpack.c.b16 %v4107, %v4106
    %v4148 = vpack.c.b16 %v4109, %v4108
    %v4149 = vpack.c.b16 %v4111, %v4110
    %v4150 = vpack.c.b16 %v4113, %v4112
    %v4151 = vpack.c.b16 %v4115, %v4114
    %v4152 = vpack.c.b16 %v4117, %v4116
    %v4153 = vpack.c.b16 %v4119, %v4118
    %v4154 = vpack.c.b16 %v4121, %v4120
    %v4155 = vpack.c.b16 %v4123, %v4122
    %4188 = vmatprep.subr.bf16.mxu0 0
    %4189 = vmatpush1.bf16.msra.mxu0 %v4124
    %4190 = vmatprep.subr.bf16.mxu0 0
    %4191 = vmatpush1.bf16.msra.mxu0 %v4125
    %4192 = vmatprep.subr.bf16.mxu0 0
    %4193 = vmatpush1.bf16.msra.mxu0 %v4126
    %4194 = vmatprep.subr.bf16.mxu0 0
    %4195 = vmatpush1.bf16.msra.mxu0 %v4127
    %4196 = vmatprep.subr.bf16.mxu0 0
    %4197 = vmatpush1.bf16.msra.mxu0 %v4128
    %4198 = vmatprep.subr.bf16.mxu0 0
    %4199 = vmatpush1.bf16.msra.mxu0 %v4129
    %4200 = vmatprep.subr.bf16.mxu0 0
    %4201 = vmatpush1.bf16.msra.mxu0 %v4130
    %4202 = vmatprep.subr.bf16.mxu0 0
    %4203 = vmatpush1.bf16.msra.mxu0 %v4131
    %4204 = vmatprep.subr.bf16.mxu0 0
    %4205 = vmatpush1.bf16.msra.mxu0 %v4132
    %4206 = vmatprep.subr.bf16.mxu0 0
    %4207 = vmatpush1.bf16.msra.mxu0 %v4133
    %4208 = vmatprep.subr.bf16.mxu0 0
    %4209 = vmatpush1.bf16.msra.mxu0 %v4134
    %4210 = vmatprep.subr.bf16.mxu0 0
    %4211 = vmatpush1.bf16.msra.mxu0 %v4135
    %4212 = vmatprep.subr.bf16.mxu0 0
    %4213 = vmatpush1.bf16.msra.mxu0 %v4136
    %4214 = vmatprep.subr.bf16.mxu0 0
    %4215 = vmatpush1.bf16.msra.mxu0 %v4137
    %4216 = vmatprep.subr.bf16.mxu0 0
    %4217 = vmatpush1.bf16.msra.mxu0 %v4138
    %4218 = vmatprep.subr.bf16.mxu0 0
    %4219 = vmatpush1.bf16.msra.mxu0 %v4139
    %4220 = vmatprep.mubr.bf16.mxu0 %v3922
    %4221 = vmatmul.mubr.bf16.gmra.mrb[0].mxu0 %v3921
    %v4222 = vpop.f32.mrb[0].mxu0
    %v4223 = vadd.f32 %v3994, %v4222
    %v4224 = vpop.f32.mrb[0].mxu0
    %v4225 = vpop.f32.mrb[0].mxu0
    %v4226 = vpop.f32.mrb[0].mxu0
    %4227 = vdwg.mxu0
    %4228 = vmatprep.subr.bf16.mxu0 0
    %4229 = vmatpush1.bf16.msra.mxu0 %v4140
    %4230 = vmatprep.subr.bf16.mxu0 0
    %4231 = vmatpush1.bf16.msra.mxu0 %v4141
    %4232 = vmatprep.subr.bf16.mxu0 0
    %4233 = vmatpush1.bf16.msra.mxu0 %v4142
    %4234 = vmatprep.subr.bf16.mxu0 0
    %4235 = vmatpush1.bf16.msra.mxu0 %v4143
    %4236 = vmatprep.subr.bf16.mxu0 0
    %4237 = vmatpush1.bf16.msra.mxu0 %v4144
    %4238 = vmatprep.subr.bf16.mxu0 0
    %4239 = vmatpush1.bf16.msra.mxu0 %v4145
    %4240 = vmatprep.subr.bf16.mxu0 0
    %4241 = vmatpush1.bf16.msra.mxu0 %v4146
    %4242 = vmatprep.subr.bf16.mxu0 0
    %4243 = vmatpush1.bf16.msra.mxu0 %v4147
    %4244 = vmatprep.subr.bf16.mxu0 0
    %4245 = vmatpush1.bf16.msra.mxu0 %v4148
    %4246 = vmatprep.subr.bf16.mxu0 0
    %4247 = vmatpush1.bf16.msra.mxu0 %v4149
    %4248 = vmatprep.subr.bf16.mxu0 0
    %4249 = vmatpush1.bf16.msra.mxu0 %v4150
    %4250 = vmatprep.subr.bf16.mxu0 0
    %4251 = vmatpush1.bf16.msra.mxu0 %v4151
    %4252 = vmatprep.subr.bf16.mxu0 0
    %4253 = vmatpush1.bf16.msra.mxu0 %v4152
    %4254 = vmatprep.subr.bf16.mxu0 0
    %4255 = vmatpush1.bf16.msra.mxu0 %v4153
    %4256 = vmatprep.subr.bf16.mxu0 0
    %4257 = vmatpush1.bf16.msra.mxu0 %v4154
    %4258 = vmatprep.subr.bf16.mxu0 0
    %4259 = vmatpush1.bf16.msra.mxu0 %v4155
    %4260 = vmatprep.mubr.bf16.mxu0 %v3924
    %4261 = vmatmul.mubr.bf16.gmra.mrb[0].mxu0 %v3923
    %v4262 = vpop.f32.mrb[0].mxu0
    %v4263 = vadd.f32 %v4223, %v4262
    %v4264 = vpop.f32.mrb[0].mxu0
    %v4265 = vpop.f32.mrb[0].mxu0
    %v4266 = vpop.f32.mrb[0].mxu0
    %4267 = vdwg.mxu0
    %v4268 = vmax.f32 %v4263, 0.0
    %v4269 = vld [vmem:[%s7] sm:$0x1]
    %v4271 = vlaneseq
    %v4272 = vshrl.u32 %v4271, 7
    %v4273 = vsub.s32 0, %v4272
    %v4274 = vrot.slane %v4269, %v4273
    %v4276 = vmul.f32 %v4268, %v4274
    %4277 = vadd.xlane.f32.xlu0 %v4276
    %v4278 = vpop.xlane.xlu0 %4277
    %v4279 = vld [vmem:[#allocation2] sm:$0x1]
    %v4281 = vlaneseq
    %v4282 = vshrl.u32 %v4281, 7
    %v4283 = vsub.s32 0, %v4282
    %v4284 = vrot.slane %v4279, %v4283
    %v4286 = vadd.f32 %v4278, %v4284
    %v4287 = vxor.u32 %v4286, 2147483648
    %v4288 = vmul.f32 %v4287, 1.442695
    %v4289 = vpow.pop %v4288
    %v4290 = vadd.f32 %v4289, 1.0
    %v4291 = vrcp.pop %v4290
    %v4292 = vmul.f32 1.0, %v4291
    %vm4293 = vcmask 7168
    %4294 = vst.msk [vmem:[%s9] sm:$0xff] %vm4293, %v4292
    // Predicated region
    $region58: #{tpu_custom_call.1} parent=1 // pred_check
      _
    $region59: #{tpu_custom_call.1} parent=1 // pred_check_branch
      %4296 = sbr.rel (0) target = $region61
    $region60: #{tpu_custom_call.1} parent=1 // pred_region
      _
    $region61: #{tpu_custom_call.1} parent=1 // pred_fallthru
      _
    // Predicated region
    $region62: #{tpu_custom_call.1} parent=1 // pred_check
      _
    $region63: #{tpu_custom_call.1} parent=1 // pred_check_branch
      %4298 = sbr.rel (0) target = $region65
    $region64: #{tpu_custom_call.1} parent=1 // pred_region
      _
    $region65: #{tpu_custom_call.1} parent=1 // pred_fallthru
      _
    %4299 = vsyncpa [#allocation4], 1
    %4300 = vsyncpa [#allocation6], 1
    %4301 = vsyncpa [#allocation9], 1

</llo_original>
